<compile_context>
chip_gen: v6e
topology: v6e:2x2x1
jax: 0.10.0
libtpu: 0.0.40
codegen_flags: <defaults>
</compile_context>

<pallas_src>
import functools

import jax
import jax.numpy as jnp
from jax import lax
from jax.experimental import pallas as pl
from jax.experimental.pallas import tpu as pltpu

BN_EPS = 1e-5
LANE = 128


def _round_up(x, m):
    return ((x + m - 1) // m) * m


# ----------------------------------------------------------------------------
# Fused forward kernel.  grid = (num_layers, num_row_tiles); layer axis slow,
# row-tile axis fast.  All grid axes are "arbitrary" (cross-tile dependency
# through the resident h ping-pong buffers).
# ----------------------------------------------------------------------------
def _gin_kernel(adj_ref, x_ref, t1w_ref, t1b_ref,
                w1_ref, b1_ref, w2_ref, b2_ref,
                t2w_ref, t2b_ref, pool_ref,
                emb_ref, h_out_ref,
                buf0, buf1, *, num_layers, tile_n):
    l = pl.program_id(0)                      # layer index (slow axis)
    i = pl.program_id(1)                      # node row-tile index (fast axis)
    r0 = pl.multiple_of(i * tile_n, tile_n)   # first node row of this tile

    # First grid point: compute h0 = ReLU(x @ t1_w + t1_b) for the whole graph
    # once (cheap: N x fp x hp) and zero the pooled-embedding accumulator.
    @pl.when((l == 0) & (i == 0))
    def _init():
        h0 = jnp.dot(x_ref[...], t1w_ref[...],
                     preferred_element_type=jnp.float32)
        h0 = jnp.maximum(h0 + t1b_ref[...], 0.0)
        buf0[...] = h0.astype(jnp.bfloat16)
        emb_ref[...] = jnp.zeros_like(emb_ref)

    def conv_step(src_ref, dst_ref):
        # Aggregation: adjacency row-tile (bf16, self-loop folded in) times the
        # full resident h (bf16) -> f32 accumulator.  No f32 adjacency copy.
        agg = jnp.dot(adj_ref[...], src_ref[...],
                      preferred_element_type=jnp.float32)
        # MLP (BatchNorm already folded into w1/b1): ReLU(agg @ W1 + b1) @ W2 + b2
        z = jnp.dot(agg.astype(jnp.bfloat16), w1_ref[0],
                    preferred_element_type=jnp.float32)
        z = jnp.maximum(z + b1_ref[0], 0.0)
        h_new = jnp.dot(z.astype(jnp.bfloat16), w2_ref[0],
                        preferred_element_type=jnp.float32)
        h_new = h_new + b2_ref[0]
        dst_ref[pl.ds(r0, tile_n), :] = h_new.astype(jnp.bfloat16)

        # Last layer: fuse t2 linear, node-embedding write-out and
        # global_add_pool (P @ h) into the same tile pass.
        @pl.when(l == num_layers - 1)
        def _final():
            ho = jnp.dot(h_new.astype(jnp.bfloat16), t2w_ref[...],
                         preferred_element_type=jnp.float32)
            ho = ho + t2b_ref[...]
            h_out_ref[pl.ds(r0, tile_n), :] = ho
            emb_ref[...] += jnp.dot(pool_ref[...], ho,
                                    preferred_element_type=jnp.float32)

    # Ping-pong: layer l reads buf[l % 2], writes buf[(l + 1) % 2] so later
    # tiles of the same layer still see the unmodified previous-layer h.
    @pl.when(l % 2 == 0)
    def _even():
        conv_step(buf0, buf1)

    @pl.when(l % 2 == 1)
    def _odd():
        conv_step(buf1, buf0)


# ----------------------------------------------------------------------------
# Parameter init (matches torch reset_parameters):
#   Linear weights: xavier_uniform, biases: zeros.
#   BatchNorm1d: gamma=1, beta=0, running_mean=0, running_var=1 (default init).
# ----------------------------------------------------------------------------
def xavier_uniform(key, fan_in, fan_out):
    bound = (6.0 / (fan_in + fan_out)) ** 0.5
    # stored as [in, out] so the kernel does x @ W directly
    return jax.random.uniform(key, (fan_in, fan_out), jnp.float32, -bound, bound)


def init_gin_params(key, num_features, hidden, num_conv_layers):
    keys = jax.random.split(key, 2 + 2 * num_conv_layers)
    params = {
        "t1_w": xavier_uniform(keys[0], num_features, hidden),
        "t1_b": jnp.zeros((1, hidden), jnp.float32),
        "t2_w": xavier_uniform(keys[1], hidden, hidden),
        "t2_b": jnp.zeros((1, hidden), jnp.float32),
        "layers": [],
    }
    for i in range(num_conv_layers):
        params["layers"].append({
            "w1": xavier_uniform(keys[2 + 2 * i], hidden, hidden),
            "b1": jnp.zeros((1, hidden), jnp.float32),
            "gamma": jnp.ones((1, hidden), jnp.float32),
            "beta": jnp.zeros((1, hidden), jnp.float32),
            "mean": jnp.zeros((1, hidden), jnp.float32),
            "var": jnp.ones((1, hidden), jnp.float32),
            "w2": xavier_uniform(keys[3 + 2 * i], hidden, hidden),
            "b2": jnp.zeros((1, hidden), jnp.float32),
        })
    return params


# ----------------------------------------------------------------------------
# Forward pass (eval mode).  `reconstruct` is a *static* Python flag.
# ----------------------------------------------------------------------------
def gin_forward(params, x, edge_index, batch, num_graphs, *, eps=0.0,
                reconstruct=True):
    n, num_features = x.shape
    hidden = params["t1_w"].shape[1]
    num_layers = len(params["layers"])
    assert num_layers >= 1, "kernel path expects at least one GINConv layer"

    fp = _round_up(num_features, LANE)            # lane-dense padded feature dim
    hp = _round_up(hidden, LANE)                  # lane-dense padded hidden dim
    tile_n = min(512, _round_up(n, LANE))         # adjacency row-tile (mult of 128)
    np_ = _round_up(n, tile_n)                    # padded node count
    num_tiles = np_ // tile_n

    # Dense adjacency with the (1+eps) self-loop folded in: agg = A @ h.
    # Entries are small integers (exact in bf16 for eps=0 / degree counts).
    # TODO(synk): cache this build or switch to the CSR path for large graphs.
    src, dst = edge_index[0], edge_index[1]
    adj = jnp.zeros((n, n), jnp.float32).at[dst, src].add(1.0)
    adj = adj + (1.0 + eps) * jnp.eye(n, dtype=jnp.float32)
    adj = jnp.pad(adj, ((0, np_ - n), (0, np_ - n))).astype(jnp.bfloat16)

    # Pooling matrix: P[g, n] = 1 iff node n belongs to graph g (0 for pad).
    batch_p = jnp.pad(batch, (0, np_ - n), constant_values=-1)
    pool_mat = (batch_p[None, :] == jnp.arange(num_graphs)[:, None]
                ).astype(jnp.float32)

    # Zero-pad + pre-cast matmul operands to bf16 (biases stay f32; precision
    # lives in the f32 MXU accumulator).
    x_p = jnp.pad(x, ((0, np_ - n), (0, fp - num_features))).astype(jnp.bfloat16)
    t1w = jnp.pad(params["t1_w"],
                  ((0, fp - num_features), (0, hp - hidden))).astype(jnp.bfloat16)
    t1b = jnp.pad(params["t1_b"], ((0, 0), (0, hp - hidden)))
    t2w = jnp.pad(params["t2_w"],
                  ((0, hp - hidden), (0, hp - hidden))).astype(jnp.bfloat16)
    t2b = jnp.pad(params["t2_b"], ((0, 0), (0, hp - hidden)))

    # Fold eval-mode BatchNorm into W1/b1, then pad + stack per-layer weights.
    w1s, b1s, w2s, b2s = [], [], [], []
    for lp in params["layers"]:
        scale = lp["gamma"] * lax.rsqrt(lp["var"] + BN_EPS)          # [1, hidden]
        w1f = lp["w1"] * scale                                       # scale out cols
        b1f = (lp["b1"] - lp["mean"]) * scale + lp["beta"]
        w1s.append(jnp.pad(w1f, ((0, hp - hidden), (0, hp - hidden))))
        b1s.append(jnp.pad(b1f, ((0, 0), (0, hp - hidden))))
        w2s.append(jnp.pad(lp["w2"], ((0, hp - hidden), (0, hp - hidden))))
        b2s.append(jnp.pad(lp["b2"], ((0, 0), (0, hp - hidden))))
    w1_all = jnp.stack(w1s).astype(jnp.bfloat16)     # (L, hp, hp)
    b1_all = jnp.stack(b1s)                          # (L, 1, hp) f32
    w2_all = jnp.stack(w2s).astype(jnp.bfloat16)
    b2_all = jnp.stack(b2s)

    # ----- VMEM budget (double-buffered streamed blocks + resident state) ----
    est = (2 * tile_n * np_ * 2                      # adjacency row tiles (bf16)
           + np_ * fp * 2                            # x (resident)
           + fp * hp * 2 + hp * 4                    # t1
           + 2 * 2 * (hp * hp * 2 + hp * 4)          # w1/b1, w2/b2 (streamed)
           + hp * hp * 2 + hp * 4                    # t2
           + 2 * num_graphs * tile_n * 4             # pool tiles
           + np_ * hp * 4 + num_graphs * hp * 4      # outputs (resident)
           + 2 * np_ * hp * 2)                       # h ping-pong scratch
    # TODO(synk): on v7x (64 MiB VMEM) reduce tile_n if 2*est approaches ~56 MiB.
    vmem_limit = int(min(max(2 * est, 32 * 1024 * 1024), 96 * 1024 * 1024))

    flops = (2 * np_ * fp * hp
             + num_layers * (2 * np_ * np_ * hp + 4 * np_ * hp * hp)
             + 2 * np_ * hp * hp
             + 2 * num_graphs * np_ * hp)
    bytes_accessed = (num_layers * np_ * np_ * 2            # adjacency per layer
                      + np_ * fp * 2
                      + (fp * hp + hp * hp) * 2
                      + num_layers * 2 * hp * hp * 2
                      + num_graphs * np_ * 4
                      + np_ * hp * 4 + num_graphs * hp * 4)

    grid = (num_layers, num_tiles)

    # TODO(synk): dropout omitted (module evaluated in eval mode -> identity).
    emb_p, h_p = pl.pallas_call(
        functools.partial(_gin_kernel, num_layers=num_layers, tile_n=tile_n),
        grid=grid,
        out_shape=(jax.ShapeDtypeStruct((num_graphs, hp), jnp.float32),
                   jax.ShapeDtypeStruct((np_, hp), jnp.float32)),
        in_specs=[
            pl.BlockSpec((tile_n, np_), lambda l, i: (i, 0)),          # adj (streamed)
            pl.BlockSpec((np_, fp), lambda l, i: (0, 0)),              # x (resident)
            pl.BlockSpec((fp, hp), lambda l, i: (0, 0)),               # t1_w
            pl.BlockSpec((1, hp), lambda l, i: (0, 0)),                # t1_b
            pl.BlockSpec((1, hp, hp), lambda l, i: (l, 0, 0)),         # w1 (per layer)
            pl.BlockSpec((1, 1, hp), lambda l, i: (l, 0, 0)),          # b1 (per layer)
            pl.BlockSpec((1, hp, hp), lambda l, i: (l, 0, 0)),         # w2 (per layer)
            pl.BlockSpec((1, 1, hp), lambda l, i: (l, 0, 0)),          # b2 (per layer)
            pl.BlockSpec((hp, hp), lambda l, i: (0, 0)),               # t2_w
            pl.BlockSpec((1, hp), lambda l, i: (0, 0)),                # t2_b
            pl.BlockSpec((num_graphs, tile_n), lambda l, i: (0, i)),   # pool (streamed)
        ],
        out_specs=(pl.BlockSpec((num_graphs, hp), lambda l, i: (0, 0)),  # graph emb
                   pl.BlockSpec((np_, hp), lambda l, i: (0, 0))),        # node emb
        scratch_shapes=[pltpu.VMEM((np_, hp), jnp.bfloat16),   # h ping-pong A
                        pltpu.VMEM((np_, hp), jnp.bfloat16)],  # h ping-pong B
        compiler_params=pltpu.CompilerParams(
            # row-tile axis has a cross-tile dependency via the VMEM h buffers
            # -> must stay "arbitrary"; layer axis is a carried recurrence.
            dimension_semantics=("arbitrary", "arbitrary"),
            vmem_limit_bytes=vmem_limit),
        cost_estimate=pl.CostEstimate(flops=flops, transcendentals=0,
                                      bytes_accessed=bytes_accessed),
    )(adj, x_p, t1w, t1b, w1_all, b1_all, w2_all, b2_all, t2w, t2b, pool_mat)

    graph_emb = emb_p[:, :hidden]
    h = h_p[:n, :hidden]
    if not reconstruct:
        return graph_emb
    return graph_emb, h


# ----------------------------------------------------------------------------
# Pure-JAX f32 reference (same eval-mode math) for validation.
# ----------------------------------------------------------------------------
def gin_reference(params, x, edge_index, batch, num_graphs, *, eps=0.0):
    n = x.shape[0]
    src, dst = edge_index[0], edge_index[1]
    adj = jnp.zeros((n, n), jnp.float32).at[dst, src].add(1.0)
    h = jax.nn.relu(x @ params["t1_w"] + params["t1_b"])
    for lp in params["layers"]:
        agg = adj @ h + (1.0 + eps) * h
        z = agg @ lp["w1"] + lp["b1"]
        z = (z - lp["mean"]) * lax.rsqrt(lp["var"] + BN_EPS) * lp["gamma"] + lp["beta"]
        z = jax.nn.relu(z)
        h = z @ lp["w2"] + lp["b2"]
    h = h @ params["t2_w"] + params["t2_b"]
    pool = (batch[None, :] == jnp.arange(num_graphs)[:, None]).astype(jnp.float32)
    return pool @ h, h


# ----------------------------------------------------------------------------
# Demo
# ----------------------------------------------------------------------------
if __name__ == "__main__":
    NUM_FEATURES = 8
    HIDDEN = 32
    NUM_CONV_LAYERS = 2
    DROPOUT = 0.5  # unused in eval mode
    N_PER_GRAPH = 8
    NUM_GRAPHS = 2
    N = N_PER_GRAPH * NUM_GRAPHS

    key = jax.random.PRNGKey(0)
    k_param, k_x = jax.random.split(key)

    params = init_gin_params(k_param, NUM_FEATURES, HIDDEN, NUM_CONV_LAYERS)

    # node features
    x = jax.random.normal(k_x, (N, NUM_FEATURES), jnp.float32)

    # two ring graphs of 8 nodes each, bidirectional edges
    src_list, dst_list = [], []
    for g in range(NUM_GRAPHS):
        base = g * N_PER_GRAPH
        for i in range(N_PER_GRAPH):
            a = base + i
            b = base + (i + 1) % N_PER_GRAPH
            src_list += [a, b]
            dst_list += [b, a]
    edge_index = jnp.array([src_list, dst_list], dtype=jnp.int32)
    batch = jnp.repeat(jnp.arange(NUM_GRAPHS, dtype=jnp.int32), N_PER_GRAPH)

    graph_emb, h = gin_forward(params, x, edge_index, batch, NUM_GRAPHS,
                               reconstruct=True)
    jax.block_until_ready((graph_emb, h))

    assert graph_emb.shape == (NUM_GRAPHS, HIDDEN)
    assert h.shape == (N, HIDDEN)
    assert jnp.all(jnp.isfinite(graph_emb)) and jnp.all(jnp.isfinite(h))

    # internal consistency: graph embedding == per-graph sum of node embeddings
    ref_pool = jnp.stack([h[batch == g].sum(axis=0) for g in range(NUM_GRAPHS)])
    assert jnp.allclose(graph_emb, ref_pool, atol=1e-2, rtol=1e-3)

    # compare against pure-JAX f32 reference (kernel uses bf16 matmul inputs
    # with f32 accumulation -> loose tolerance)
    ref_emb, ref_h = gin_reference(params, x, edge_index, batch, NUM_GRAPHS)

    def rel_max_err(a, b):
        return float(jnp.max(jnp.abs(a - b)) /
                     jnp.maximum(jnp.max(jnp.abs(b)), 1.0))

    assert rel_max_err(h, ref_h) < 5e-2, rel_max_err(h, ref_h)
    assert rel_max_err(graph_emb, ref_emb) < 5e-2, rel_max_err(graph_emb, ref_emb)

    print("KERNEL_OK")
</pallas_src>

<mosaic_0001>
module attributes {stable_mosaic.version = 11 : i64} {
  func.func @_gin_kernel(%arg0: i32, %arg1: i32, %arg2: memref<128x128xbf16, #tpu.memory_space<vmem>>, %arg3: memref<128x128xbf16, #tpu.memory_space<vmem>>, %arg4: memref<128x128xbf16, #tpu.memory_space<vmem>>, %arg5: memref<1x128xf32, #tpu.memory_space<vmem>>, %arg6: memref<1x128x128xbf16, #tpu.memory_space<vmem>>, %arg7: memref<1x1x128xf32, #tpu.memory_space<vmem>>, %arg8: memref<1x128x128xbf16, #tpu.memory_space<vmem>>, %arg9: memref<1x1x128xf32, #tpu.memory_space<vmem>>, %arg10: memref<128x128xbf16, #tpu.memory_space<vmem>>, %arg11: memref<1x128xf32, #tpu.memory_space<vmem>>, %arg12: memref<2x128xf32, #tpu.memory_space<vmem>>, %arg13: memref<2x128xf32, #tpu.memory_space<vmem>>, %arg14: memref<128x128xf32, #tpu.memory_space<vmem>>, %arg15: memref<128x128xbf16, #tpu.memory_space<vmem>>, %arg16: memref<128x128xbf16, #tpu.memory_space<vmem>>) attributes {dimension_semantics = [#tpu.dimension_semantics<arbitrary>, #tpu.dimension_semantics<arbitrary>], iteration_bounds = array<i64: 2, 1>, scalar_prefetch = 0 : i64, scratch_operands = 2 : i64, tpu.core_type = #tpu.core_type<tc>, window_params = [{transform_indices = @transform_0, window_bounds = array<i64: 128, 128>}, {pipeline_mode = #tpu.pipeline_mode<synchronous>, transform_indices = @transform_1, window_bounds = array<i64: 128, 128>}, {pipeline_mode = #tpu.pipeline_mode<synchronous>, transform_indices = @transform_2, window_bounds = array<i64: 128, 128>}, {pipeline_mode = #tpu.pipeline_mode<synchronous>, transform_indices = @transform_3, window_bounds = array<i64: 1, 128>}, {transform_indices = @transform_4, window_bounds = array<i64: 1, 128, 128>}, {transform_indices = @transform_5, window_bounds = array<i64: 1, 1, 128>}, {transform_indices = @transform_6, window_bounds = array<i64: 1, 128, 128>}, {transform_indices = @transform_7, window_bounds = array<i64: 1, 1, 128>}, {pipeline_mode = #tpu.pipeline_mode<synchronous>, transform_indices = @transform_8, window_bounds = array<i64: 128, 128>}, {pipeline_mode = #tpu.pipeline_mode<synchronous>, transform_indices = @transform_9, window_bounds = array<i64: 1, 128>}, {transform_indices = @transform_10, window_bounds = array<i64: 2, 128>}, {pipeline_mode = #tpu.pipeline_mode<synchronous>, transform_indices = @transform_11, window_bounds = array<i64: 2, 128>}, {pipeline_mode = #tpu.pipeline_mode<synchronous>, transform_indices = @transform_12, window_bounds = array<i64: 128, 128>}]} {
    %c128_i32 = arith.constant 128 : i32
    %0 = arith.muli %arg1, %c128_i32 : i32
    %1 = tpu.assume_multiple %0, 128 : i32
    %c0_i32 = arith.constant 0 : i32
    %2 = arith.cmpi eq, %arg0, %c0_i32 : i32
    %c0_i32_0 = arith.constant 0 : i32
    %3 = arith.cmpi eq, %arg1, %c0_i32_0 : i32
    %4 = arith.andi %2, %3 : i1
    %5 = arith.extui %4 : i1 to i32
    %c0_i32_1 = arith.constant 0 : i32
    %6 = arith.cmpi ne, %5, %c0_i32_1 : i32
    scf.if %6 {
      %c0 = arith.constant 0 : index
      %c0_16 = arith.constant 0 : index
      %33 = vector.load %arg3[%c0, %c0_16] : memref<128x128xbf16, #tpu.memory_space<vmem>>, vector<128x128xbf16>
      %c0_17 = arith.constant 0 : index
      %c0_18 = arith.constant 0 : index
      %34 = vector.load %arg4[%c0_17, %c0_18] : memref<128x128xbf16, #tpu.memory_space<vmem>>, vector<128x128xbf16>
      %cst = arith.constant dense<0.000000e+00> : vector<128x128xf32>
      %35 = tpu.matmul %33, %34, %cst {dimension_numbers = #tpu.dot_dimension_numbers<[1], [0], [0], [1], [0, 0, 1, 1], [], []>} : vector<128x128xbf16>, vector<128x128xbf16>, vector<128x128xf32> -> vector<128x128xf32>
      %c0_19 = arith.constant 0 : index
      %c0_20 = arith.constant 0 : index
      %36 = vector.load %arg5[%c0_19, %c0_20] : memref<1x128xf32, #tpu.memory_space<vmem>>, vector<1x128xf32>
      %37 = vector.broadcast %36 : vector<1x128xf32> to vector<128x128xf32>
      %38 = arith.addf %35, %37 : vector<128x128xf32>
      %cst_21 = arith.constant 0.000000e+00 : f32
      %39 = vector.broadcast %cst_21 : f32 to vector<128x128xf32>
      %40 = arith.maximumf %38, %39 : vector<128x128xf32>
      %41 = arith.truncf %40 : vector<128x128xf32> to vector<128x128xbf16>
      %c0_22 = arith.constant 0 : index
      %c0_23 = arith.constant 0 : index
      %42 = vector.load %arg15[%c0_22, %c0_23] : memref<128x128xbf16, #tpu.memory_space<vmem>>, vector<128x128xbf16>
      tpu.vector_store %arg15[%c0_22, %c0_23], %41 {strides = array<i32>} : memref<128x128xbf16, #tpu.memory_space<vmem>>, vector<128x128xbf16>,
      %cst_24 = arith.constant 0.000000e+00 : f32
      %43 = vector.broadcast %cst_24 : f32 to vector<2x128xf32>
      %c0_25 = arith.constant 0 : index
      %c0_26 = arith.constant 0 : index
      %44 = vector.load %arg13[%c0_25, %c0_26] : memref<2x128xf32, #tpu.memory_space<vmem>>, vector<2x128xf32>
      tpu.vector_store %arg13[%c0_25, %c0_26], %43 {strides = array<i32>} : memref<2x128xf32, #tpu.memory_space<vmem>>, vector<2x128xf32>,
    } else {
    }
    %c2_i32 = arith.constant 2 : i32
    %c0_i32_2 = arith.constant 0 : i32
    %7 = arith.cmpi eq, %c2_i32, %c0_i32_2 : i32
    %c1_i32 = arith.constant 1 : i32
    %8 = arith.select %7, %c1_i32, %c2_i32 : i32
    %9 = arith.remsi %arg0, %8 : i32
    %c0_i32_3 = arith.constant 0 : i32
    %10 = arith.cmpi ne, %9, %c0_i32_3 : i32
    %c0_i32_4 = arith.constant 0 : i32
    %11 = arith.cmpi slt, %9, %c0_i32_4 : i32
    %c0_i32_5 = arith.constant 0 : i32
    %12 = arith.cmpi slt, %8, %c0_i32_5 : i32
    %13 = arith.xori %11, %12 : i1
    %14 = arith.andi %13, %10 : i1
    %15 = arith.addi %9, %8 : i32
    %16 = arith.select %14, %15, %9 : i32
    %c0_i32_6 = arith.constant 0 : i32
    %17 = arith.cmpi eq, %16, %c0_i32_6 : i32
    %18 = arith.extui %17 : i1 to i32
    %c0_i32_7 = arith.constant 0 : i32
    %19 = arith.cmpi ne, %18, %c0_i32_7 : i32
    scf.if %19 {
      %c0 = arith.constant 0 : index
      %c0_16 = arith.constant 0 : index
      %33 = vector.load %arg2[%c0, %c0_16] : memref<128x128xbf16, #tpu.memory_space<vmem>>, vector<128x128xbf16>
      %c0_17 = arith.constant 0 : index
      %c0_18 = arith.constant 0 : index
      %34 = vector.load %arg15[%c0_17, %c0_18] : memref<128x128xbf16, #tpu.memory_space<vmem>>, vector<128x128xbf16>
      %cst = arith.constant dense<0.000000e+00> : vector<128x128xf32>
      %35 = tpu.matmul %33, %34, %cst {dimension_numbers = #tpu.dot_dimension_numbers<[1], [0], [0], [1], [0, 0, 1, 1], [], []>} : vector<128x128xbf16>, vector<128x128xbf16>, vector<128x128xf32> -> vector<128x128xf32>
      %36 = arith.truncf %35 : vector<128x128xf32> to vector<128x128xbf16>
      %c0_19 = arith.constant 0 : index
      %c0_20 = arith.constant 0 : index
      %c0_21 = arith.constant 0 : index
      %37 = vector.load %arg6[%c0_19, %c0_20, %c0_21] : memref<1x128x128xbf16, #tpu.memory_space<vmem>>, vector<1x128x128xbf16>
      %38 = vector.shape_cast %37 : vector<1x128x128xbf16> to vector<128x128xbf16>
      %cst_22 = arith.constant dense<0.000000e+00> : vector<128x128xf32>
      %39 = tpu.matmul %36, %38, %cst_22 {dimension_numbers = #tpu.dot_dimension_numbers<[1], [0], [0], [1], [0, 0, 1, 1], [], []>} : vector<128x128xbf16>, vector<128x128xbf16>, vector<128x128xf32> -> vector<128x128xf32>
      %c0_23 = arith.constant 0 : index
      %c0_24 = arith.constant 0 : index
      %c0_25 = arith.constant 0 : index
      %40 = vector.load %arg7[%c0_23, %c0_24, %c0_25] : memref<1x1x128xf32, #tpu.memory_space<vmem>>, vector<1x1x128xf32>
      %41 = vector.shape_cast %40 : vector<1x1x128xf32> to vector<1x128xf32>
      %42 = vector.broadcast %41 : vector<1x128xf32> to vector<128x128xf32>
      %43 = arith.addf %39, %42 : vector<128x128xf32>
      %cst_26 = arith.constant 0.000000e+00 : f32
      %44 = vector.broadcast %cst_26 : f32 to vector<128x128xf32>
      %45 = arith.maximumf %43, %44 : vector<128x128xf32>
      %46 = arith.truncf %45 : vector<128x128xf32> to vector<128x128xbf16>
      %c0_27 = arith.constant 0 : index
      %c0_28 = arith.constant 0 : index
      %c0_29 = arith.constant 0 : index
      %47 = vector.load %arg8[%c0_27, %c0_28, %c0_29] : memref<1x128x128xbf16, #tpu.memory_space<vmem>>, vector<1x128x128xbf16>
      %48 = vector.shape_cast %47 : vector<1x128x128xbf16> to vector<128x128xbf16>
      %cst_30 = arith.constant dense<0.000000e+00> : vector<128x128xf32>
      %49 = tpu.matmul %46, %48, %cst_30 {dimension_numbers = #tpu.dot_dimension_numbers<[1], [0], [0], [1], [0, 0, 1, 1], [], []>} : vector<128x128xbf16>, vector<128x128xbf16>, vector<128x128xf32> -> vector<128x128xf32>
      %c0_31 = arith.constant 0 : index
      %c0_32 = arith.constant 0 : index
      %c0_33 = arith.constant 0 : index
      %50 = vector.load %arg9[%c0_31, %c0_32, %c0_33] : memref<1x1x128xf32, #tpu.memory_space<vmem>>, vector<1x1x128xf32>
      %51 = vector.shape_cast %50 : vector<1x1x128xf32> to vector<1x128xf32>
      %52 = vector.broadcast %51 : vector<1x128xf32> to vector<128x128xf32>
      %53 = arith.addf %49, %52 : vector<128x128xf32>
      %54 = arith.truncf %53 : vector<128x128xf32> to vector<128x128xbf16>
      %55 = arith.index_cast %1 : i32 to index
      %c0_34 = arith.constant 0 : index
      %56 = vector.load %arg16[%55, %c0_34] : memref<128x128xbf16, #tpu.memory_space<vmem>>, vector<128x128xbf16>
      tpu.vector_store %arg16[%55, %c0_34], %54 {strides = array<i32>} : memref<128x128xbf16, #tpu.memory_space<vmem>>, vector<128x128xbf16>,
      %c1_i32_35 = arith.constant 1 : i32
      %57 = arith.cmpi eq, %arg0, %c1_i32_35 : i32
      %58 = arith.extui %57 : i1 to i32
      %c0_i32_36 = arith.constant 0 : i32
      %59 = arith.cmpi ne, %58, %c0_i32_36 : i32
      scf.if %59 {
        %60 = arith.truncf %53 : vector<128x128xf32> to vector<128x128xbf16>
        %c0_37 = arith.constant 0 : index
        %c0_38 = arith.constant 0 : index
        %61 = vector.load %arg10[%c0_37, %c0_38] : memref<128x128xbf16, #tpu.memory_space<vmem>>, vector<128x128xbf16>
        %cst_39 = arith.constant dense<0.000000e+00> : vector<128x128xf32>
        %62 = tpu.matmul %60, %61, %cst_39 {dimension_numbers = #tpu.dot_dimension_numbers<[1], [0], [0], [1], [0, 0, 1, 1], [], []>} : vector<128x128xbf16>, vector<128x128xbf16>, vector<128x128xf32> -> vector<128x128xf32>
        %c0_40 = arith.constant 0 : index
        %c0_41 = arith.constant 0 : index
        %63 = vector.load %arg11[%c0_40, %c0_41] : memref<1x128xf32, #tpu.memory_space<vmem>>, vector<1x128xf32>
        %64 = vector.broadcast %63 : vector<1x128xf32> to vector<128x128xf32>
        %65 = arith.addf %62, %64 : vector<128x128xf32>
        %66 = arith.index_cast %1 : i32 to index
        %c0_42 = arith.constant 0 : index
        %67 = vector.load %arg14[%66, %c0_42] : memref<128x128xf32, #tpu.memory_space<vmem>>, vector<128x128xf32>
        tpu.vector_store %arg14[%66, %c0_42], %65 {strides = array<i32>} : memref<128x128xf32, #tpu.memory_space<vmem>>, vector<128x128xf32>,
        %c0_43 = arith.constant 0 : index
        %c0_44 = arith.constant 0 : index
        %68 = vector.load %arg13[%c0_43, %c0_44] : memref<2x128xf32, #tpu.memory_space<vmem>>, vector<2x128xf32>
        %c0_45 = arith.constant 0 : index
        %c0_46 = arith.constant 0 : index
        %69 = vector.load %arg12[%c0_45, %c0_46] : memref<2x128xf32, #tpu.memory_space<vmem>>, vector<2x128xf32>
        %cst_47 = arith.constant dense<0.000000e+00> : vector<2x128xf32>
        %70 = tpu.matmul %69, %65, %cst_47 {dimension_numbers = #tpu.dot_dimension_numbers<[1], [0], [0], [1], [0, 0, 1, 1], [], []>} : vector<2x128xf32>, vector<128x128xf32>, vector<2x128xf32> -> vector<2x128xf32>
        %71 = arith.addf %68, %70 : vector<2x128xf32>
        %c0_48 = arith.constant 0 : index
        %c0_49 = arith.constant 0 : index
        %72 = vector.load %arg13[%c0_48, %c0_49] : memref<2x128xf32, #tpu.memory_space<vmem>>, vector<2x128xf32>
        tpu.vector_store %arg13[%c0_48, %c0_49], %71 {strides = array<i32>} : memref<2x128xf32, #tpu.memory_space<vmem>>, vector<2x128xf32>,
      } else {
      }
    } else {
    }
    %c2_i32_8 = arith.constant 2 : i32
    %c0_i32_9 = arith.constant 0 : i32
    %20 = arith.cmpi eq, %c2_i32_8, %c0_i32_9 : i32
    %c1_i32_10 = arith.constant 1 : i32
    %21 = arith.select %20, %c1_i32_10, %c2_i32_8 : i32
    %22 = arith.remsi %arg0, %21 : i32
    %c0_i32_11 = arith.constant 0 : i32
    %23 = arith.cmpi ne, %22, %c0_i32_11 : i32
    %c0_i32_12 = arith.constant 0 : i32
    %24 = arith.cmpi slt, %22, %c0_i32_12 : i32
    %c0_i32_13 = arith.constant 0 : i32
    %25 = arith.cmpi slt, %21, %c0_i32_13 : i32
    %26 = arith.xori %24, %25 : i1
    %27 = arith.andi %26, %23 : i1
    %28 = arith.addi %22, %21 : i32
    %29 = arith.select %27, %28, %22 : i32
    %c1_i32_14 = arith.constant 1 : i32
    %30 = arith.cmpi eq, %29, %c1_i32_14 : i32
    %31 = arith.extui %30 : i1 to i32
    %c0_i32_15 = arith.constant 0 : i32
    %32 = arith.cmpi ne, %31, %c0_i32_15 : i32
    scf.if %32 {
      %c0 = arith.constant 0 : index
      %c0_16 = arith.constant 0 : index
      %33 = vector.load %arg2[%c0, %c0_16] : memref<128x128xbf16, #tpu.memory_space<vmem>>, vector<128x128xbf16>
      %c0_17 = arith.constant 0 : index
      %c0_18 = arith.constant 0 : index
      %34 = vector.load %arg16[%c0_17, %c0_18] : memref<128x128xbf16, #tpu.memory_space<vmem>>, vector<128x128xbf16>
      %cst = arith.constant dense<0.000000e+00> : vector<128x128xf32>
      %35 = tpu.matmul %33, %34, %cst {dimension_numbers = #tpu.dot_dimension_numbers<[1], [0], [0], [1], [0, 0, 1, 1], [], []>} : vector<128x128xbf16>, vector<128x128xbf16>, vector<128x128xf32> -> vector<128x128xf32>
      %36 = arith.truncf %35 : vector<128x128xf32> to vector<128x128xbf16>
      %c0_19 = arith.constant 0 : index
      %c0_20 = arith.constant 0 : index
      %c0_21 = arith.constant 0 : index
      %37 = vector.load %arg6[%c0_19, %c0_20, %c0_21] : memref<1x128x128xbf16, #tpu.memory_space<vmem>>, vector<1x128x128xbf16>
      %38 = vector.shape_cast %37 : vector<1x128x128xbf16> to vector<128x128xbf16>
      %cst_22 = arith.constant dense<0.000000e+00> : vector<128x128xf32>
      %39 = tpu.matmul %36, %38, %cst_22 {dimension_numbers = #tpu.dot_dimension_numbers<[1], [0], [0], [1], [0, 0, 1, 1], [], []>} : vector<128x128xbf16>, vector<128x128xbf16>, vector<128x128xf32> -> vector<128x128xf32>
      %c0_23 = arith.constant 0 : index
      %c0_24 = arith.constant 0 : index
      %c0_25 = arith.constant 0 : index
      %40 = vector.load %arg7[%c0_23, %c0_24, %c0_25] : memref<1x1x128xf32, #tpu.memory_space<vmem>>, vector<1x1x128xf32>
      %41 = vector.shape_cast %40 : vector<1x1x128xf32> to vector<1x128xf32>
      %42 = vector.broadcast %41 : vector<1x128xf32> to vector<128x128xf32>
      %43 = arith.addf %39, %42 : vector<128x128xf32>
      %cst_26 = arith.constant 0.000000e+00 : f32
      %44 = vector.broadcast %cst_26 : f32 to vector<128x128xf32>
      %45 = arith.maximumf %43, %44 : vector<128x128xf32>
      %46 = arith.truncf %45 : vector<128x128xf32> to vector<128x128xbf16>
      %c0_27 = arith.constant 0 : index
      %c0_28 = arith.constant 0 : index
      %c0_29 = arith.constant 0 : index
      %47 = vector.load %arg8[%c0_27, %c0_28, %c0_29] : memref<1x128x128xbf16, #tpu.memory_space<vmem>>, vector<1x128x128xbf16>
      %48 = vector.shape_cast %47 : vector<1x128x128xbf16> to vector<128x128xbf16>
      %cst_30 = arith.constant dense<0.000000e+00> : vector<128x128xf32>
      %49 = tpu.matmul %46, %48, %cst_30 {dimension_numbers = #tpu.dot_dimension_numbers<[1], [0], [0], [1], [0, 0, 1, 1], [], []>} : vector<128x128xbf16>, vector<128x128xbf16>, vector<128x128xf32> -> vector<128x128xf32>
      %c0_31 = arith.constant 0 : index
      %c0_32 = arith.constant 0 : index
      %c0_33 = arith.constant 0 : index
      %50 = vector.load %arg9[%c0_31, %c0_32, %c0_33] : memref<1x1x128xf32, #tpu.memory_space<vmem>>, vector<1x1x128xf32>
      %51 = vector.shape_cast %50 : vector<1x1x128xf32> to vector<1x128xf32>
      %52 = vector.broadcast %51 : vector<1x128xf32> to vector<128x128xf32>
      %53 = arith.addf %49, %52 : vector<128x128xf32>
      %54 = arith.truncf %53 : vector<128x128xf32> to vector<128x128xbf16>
      %55 = arith.index_cast %1 : i32 to index
      %c0_34 = arith.constant 0 : index
      %56 = vector.load %arg15[%55, %c0_34] : memref<128x128xbf16, #tpu.memory_space<vmem>>, vector<128x128xbf16>
      tpu.vector_store %arg15[%55, %c0_34], %54 {strides = array<i32>} : memref<128x128xbf16, #tpu.memory_space<vmem>>, vector<128x128xbf16>,
      %c1_i32_35 = arith.constant 1 : i32
      %57 = arith.cmpi eq, %arg0, %c1_i32_35 : i32
      %58 = arith.extui %57 : i1 to i32
      %c0_i32_36 = arith.constant 0 : i32
      %59 = arith.cmpi ne, %58, %c0_i32_36 : i32
      scf.if %59 {
        %60 = arith.truncf %53 : vector<128x128xf32> to vector<128x128xbf16>
        %c0_37 = arith.constant 0 : index
        %c0_38 = arith.constant 0 : index
        %61 = vector.load %arg10[%c0_37, %c0_38] : memref<128x128xbf16, #tpu.memory_space<vmem>>, vector<128x128xbf16>
        %cst_39 = arith.constant dense<0.000000e+00> : vector<128x128xf32>
        %62 = tpu.matmul %60, %61, %cst_39 {dimension_numbers = #tpu.dot_dimension_numbers<[1], [0], [0], [1], [0, 0, 1, 1], [], []>} : vector<128x128xbf16>, vector<128x128xbf16>, vector<128x128xf32> -> vector<128x128xf32>
        %c0_40 = arith.constant 0 : index
        %c0_41 = arith.constant 0 : index
        %63 = vector.load %arg11[%c0_40, %c0_41] : memref<1x128xf32, #tpu.memory_space<vmem>>, vector<1x128xf32>
        %64 = vector.broadcast %63 : vector<1x128xf32> to vector<128x128xf32>
        %65 = arith.addf %62, %64 : vector<128x128xf32>
        %66 = arith.index_cast %1 : i32 to index
        %c0_42 = arith.constant 0 : index
        %67 = vector.load %arg14[%66, %c0_42] : memref<128x128xf32, #tpu.memory_space<vmem>>, vector<128x128xf32>
        tpu.vector_store %arg14[%66, %c0_42], %65 {strides = array<i32>} : memref<128x128xf32, #tpu.memory_space<vmem>>, vector<128x128xf32>,
        %c0_43 = arith.constant 0 : index
        %c0_44 = arith.constant 0 : index
        %68 = vector.load %arg13[%c0_43, %c0_44] : memref<2x128xf32, #tpu.memory_space<vmem>>, vector<2x128xf32>
        %c0_45 = arith.constant 0 : index
        %c0_46 = arith.constant 0 : index
        %69 = vector.load %arg12[%c0_45, %c0_46] : memref<2x128xf32, #tpu.memory_space<vmem>>, vector<2x128xf32>
        %cst_47 = arith.constant dense<0.000000e+00> : vector<2x128xf32>
        %70 = tpu.matmul %69, %65, %cst_47 {dimension_numbers = #tpu.dot_dimension_numbers<[1], [0], [0], [1], [0, 0, 1, 1], [], []>} : vector<2x128xf32>, vector<128x128xf32>, vector<2x128xf32> -> vector<2x128xf32>
        %71 = arith.addf %68, %70 : vector<2x128xf32>
        %c0_48 = arith.constant 0 : index
        %c0_49 = arith.constant 0 : index
        %72 = vector.load %arg13[%c0_48, %c0_49] : memref<2x128xf32, #tpu.memory_space<vmem>>, vector<2x128xf32>
        tpu.vector_store %arg13[%c0_48, %c0_49], %71 {strides = array<i32>} : memref<2x128xf32, #tpu.memory_space<vmem>>, vector<2x128xf32>,
      } else {
      }
    } else {
    }
    return
  }
  func.func @transform_0(%arg0: i32, %arg1: i32) -> (i32, i32) {
    %c0_i32 = arith.constant 0 : i32
    %c0_i32_0 = arith.constant 0 : i32
    return %arg1, %c0_i32 : i32, i32
  }
  func.func @transform_1(%arg0: i32, %arg1: i32) -> (i32, i32) {
    %c0_i32 = arith.constant 0 : i32
    %c0_i32_0 = arith.constant 0 : i32
    %c0_i32_1 = arith.constant 0 : i32
    return %c0_i32, %c0_i32_0 : i32, i32
  }
  func.func @transform_2(%arg0: i32, %arg1: i32) -> (i32, i32) {
    %c0_i32 = arith.constant 0 : i32
    %c0_i32_0 = arith.constant 0 : i32
    %c0_i32_1 = arith.constant 0 : i32
    return %c0_i32, %c0_i32_0 : i32, i32
  }
  func.func @transform_3(%arg0: i32, %arg1: i32) -> (i32, i32) {
    %c0_i32 = arith.constant 0 : i32
    %c0_i32_0 = arith.constant 0 : i32
    %c0_i32_1 = arith.constant 0 : i32
    return %c0_i32, %c0_i32_0 : i32, i32
  }
  func.func @transform_4(%arg0: i32, %arg1: i32) -> (i32, i32, i32) {
    %c0_i32 = arith.constant 0 : i32
    %c0_i32_0 = arith.constant 0 : i32
    %c0_i32_1 = arith.constant 0 : i32
    return %arg0, %c0_i32, %c0_i32_0 : i32, i32, i32
  }
  func.func @transform_5(%arg0: i32, %arg1: i32) -> (i32, i32, i32) {
    %c0_i32 = arith.constant 0 : i32
    %c0_i32_0 = arith.constant 0 : i32
    %c0_i32_1 = arith.constant 0 : i32
    return %arg0, %c0_i32, %c0_i32_0 : i32, i32, i32
  }
  func.func @transform_6(%arg0: i32, %arg1: i32) -> (i32, i32, i32) {
    %c0_i32 = arith.constant 0 : i32
    %c0_i32_0 = arith.constant 0 : i32
    %c0_i32_1 = arith.constant 0 : i32
    return %arg0, %c0_i32, %c0_i32_0 : i32, i32, i32
  }
  func.func @transform_7(%arg0: i32, %arg1: i32) -> (i32, i32, i32) {
    %c0_i32 = arith.constant 0 : i32
    %c0_i32_0 = arith.constant 0 : i32
    %c0_i32_1 = arith.constant 0 : i32
    return %arg0, %c0_i32, %c0_i32_0 : i32, i32, i32
  }
  func.func @transform_8(%arg0: i32, %arg1: i32) -> (i32, i32) {
    %c0_i32 = arith.constant 0 : i32
    %c0_i32_0 = arith.constant 0 : i32
    %c0_i32_1 = arith.constant 0 : i32
    return %c0_i32, %c0_i32_0 : i32, i32
  }
  func.func @transform_9(%arg0: i32, %arg1: i32) -> (i32, i32) {
    %c0_i32 = arith.constant 0 : i32
    %c0_i32_0 = arith.constant 0 : i32
    %c0_i32_1 = arith.constant 0 : i32
    return %c0_i32, %c0_i32_0 : i32, i32
  }
  func.func @transform_10(%arg0: i32, %arg1: i32) -> (i32, i32) {
    %c0_i32 = arith.constant 0 : i32
    %c0_i32_0 = arith.constant 0 : i32
    return %c0_i32, %arg1 : i32, i32
  }
  func.func @transform_11(%arg0: i32, %arg1: i32) -> (i32, i32) {
    %c0_i32 = arith.constant 0 : i32
    %c0_i32_0 = arith.constant 0 : i32
    %c0_i32_1 = arith.constant 0 : i32
    return %c0_i32, %c0_i32_0 : i32, i32
  }
  func.func @transform_12(%arg0: i32, %arg1: i32) -> (i32, i32) {
    %c0_i32 = arith.constant 0 : i32
    %c0_i32_0 = arith.constant 0 : i32
    %c0_i32_1 = arith.constant 0 : i32
    return %c0_i32, %c0_i32_0 : i32, i32
  }
}

</mosaic_0001>

<llo_original>
// kernel: tpu_custom_call.1
$region0: #{tpu_custom_call.1}
  #allocation0 [shape = 'u32[]', space=smem, size = 0x4, offset = 0x4, fixed_abs, tag = 'smem constant byte address 0x4 - core index']
  #allocation1 [shape = 'u32[144,128]{1,0:T(1,128)}', space=vmem, size = 0x12000, scoped, tag = 'internal scratch']
  #allocation2 [shape = 'bf16[128,128]{1,0:T(8,128)(2,1)}', space=vmem, size = 0x8000, scoped, tag = 'scratch operand']
  #allocation3 [shape = 'bf16[128,128]{1,0:T(8,128)(2,1)}', space=vmem, size = 0x8000, scoped, tag = 'scratch operand']
  %s0 = inlined_call_operand.hbm [shape: bf16[128,128], index: 0, kind: input, shape index: {}]
  %s1 = inlined_call_operand.hbm [shape: bf16[128,128], index: 1, kind: input, shape index: {}]
  %s2 = inlined_call_operand.hbm [shape: bf16[128,128], index: 2, kind: input, shape index: {}]
  %s3 = inlined_call_operand.vmem [shape: f32[1,128], index: 3, kind: input, shape index: {}]
  %s4 = inlined_call_operand.hbm [shape: bf16[2,128,128], index: 4, kind: input, shape index: {}]
  %s5 = inlined_call_operand.vmem [shape: f32[2,1,128], index: 5, kind: input, shape index: {}]
  %s6 = inlined_call_operand.hbm [shape: bf16[2,128,128], index: 6, kind: input, shape index: {}]
  %s7 = inlined_call_operand.vmem [shape: f32[2,1,128], index: 7, kind: input, shape index: {}]
  %s8 = inlined_call_operand.hbm [shape: bf16[128,128], index: 8, kind: input, shape index: {}]
  %s9 = inlined_call_operand.vmem [shape: f32[1,128], index: 9, kind: input, shape index: {}]
  %s10 = inlined_call_operand.vmem [shape: f32[2,128], index: 10, kind: input, shape index: {}]
  %s11 = inlined_call_operand.hbm [shape: f32[2,128], index: 11, kind: output, shape index: {0}]
  %s12 = inlined_call_operand.hbm [shape: f32[128,128], index: 12, kind: output, shape index: {1}]
  %13 = xla_tuple %s11, %s12
  %s14 = sld [smem:[#allocation0]]
  $region129: #{tpu_custom_call.1} parent=0
    _
  %s16 = ssub.s32 1, %s14
  %s17 = scalar_select 0, %s16, %s14
  $region1: #{tpu_custom_call.1} parent=0
    #allocation4 [shape = 'u8[32768]{0}', space=vmem, size = 0x8000, scoped, tag = 'input window, operand 0, single buffered']
    #allocation5 [shape = 's32[2]{0}', space=sflag, size = 0x8, scoped, tag = 'scoped memory for tpu_custom_call.1']
    #allocation6 [shape = 's32[2]{0}', space=sflag, size = 0x8, scoped, tag = 'scoped memory for tpu_custom_call.1']
    #allocation7 [shape = 'u8[32768]{0}', space=vmem, size = 0x8000, scoped, tag = 'input window, operand 1, single buffered']
    #allocation8 [shape = 's32[1]{0}', space=sflag, size = 0x4, scoped, tag = 'scoped memory for tpu_custom_call.1']
    #allocation9 [shape = 'u8[32768]{0}', space=vmem, size = 0x8000, scoped, tag = 'input window, operand 2, single buffered']
    #allocation10 [shape = 'u8[65536]{0}', space=vmem, size = 0x10000, scoped, tag = 'input window, operand 4']
    #allocation11 [shape = 's32[2]{0}', space=sflag, size = 0x8, scoped, tag = 'scoped memory for tpu_custom_call.1']
    #allocation12 [shape = 'u8[65536]{0}', space=vmem, size = 0x10000, scoped, tag = 'input window, operand 6']
    #allocation13 [shape = 'u8[32768]{0}', space=vmem, size = 0x8000, scoped, tag = 'input window, operand 8, single buffered']
    #allocation14 [shape = 's32[1]{0}', space=sflag, size = 0x4, scoped, tag = 'scoped memory for tpu_custom_call.1']
    #allocation15 [shape = 'u8[1024]{0}', space=vmem, size = 0x400, scoped, tag = 'output window, operand 0, single buffered']
    #allocation16 [shape = 'u8[65536]{0}', space=vmem, size = 0x10000, scoped, tag = 'output window, operand 1, single buffered']
    #allocation17 [shape = 's32[1]{0}', space=sflag, size = 0x4, scoped, tag = 'scoped memory for tpu_custom_call.1']
    %18 = vsyncpa [#allocation5], 0
    %19 = vsyncpa [#allocation8], 0
    %20 = vsyncpa [#allocation11], 0
    %s21 = scalar_lea.sflag [#allocation11], 1
    %22 = vsyncpa %s21, 0
    %23 = vsyncpa [#allocation14], 0
    %24 = vsyncpa [#allocation6], 0
    %25 = vsyncpa [#allocation17], 0
    loop: start=0, step=1, limit=4
    $region2: #{tpu_custom_call.1} parent=1 // loop_pre_header
      _
    $region3: #{tpu_custom_call.1} parent=1 // loop_header
      %s27 = sphi 0, %s31
      %p28 = scmp.ge.s32.totalorder %s27, 4
      %s34 = sphi 0, %s46
      %s35 = sphi 0, %s42
      %s36 = sphi 0, %s34
      %s37 = sphi 0, %s35
      %s38 = sphi 0, %s36
      %s39 = sphi 0, %s37
      %s49 = sphi 0, %s51
      %s52 = sphi 0, %s49
      %s53 = sphi 0, %s52
      %s69 = sphi 0, %s53
      %s73 = sphi 0, %s73
      %s75 = sphi 0, %s73
      %s76 = sphi 0, %s75
      %s90 = sphi 0, %s76
      %s94 = sphi 0, %s94
      %s96 = sphi 0, %s94
      %s97 = sphi 0, %s96
      %s111 = sphi 0, %s97
      %s115 = sphi 0, %s115
      %s117 = sphi 0, %s115
      %s118 = sphi 0, %s117
      %s132 = sphi 0, %s118
      %s138 = sphi 0, %s140
      %s141 = sphi 0, %s138
      %s142 = sphi 0, %s141
      %s158 = sphi 0, %s142
      %s164 = sphi 0, %s166
      %s167 = sphi 0, %s164
      %s168 = sphi 0, %s167
      %s184 = sphi 0, %s168
      %s190 = sphi 0, %s192
      %s193 = sphi 0, %s190
      %s194 = sphi 0, %s193
      %s210 = sphi 0, %s194
      %s216 = sphi 0, %s218
      %s219 = sphi 0, %s216
      %s220 = sphi 0, %s219
      %s236 = sphi 0, %s220
      %s240 = sphi 0, %s240
      %s242 = sphi 0, %s240
      %s243 = sphi 0, %s242
      %s257 = sphi 0, %s243
      %s261 = sphi 0, %s261
      %s263 = sphi 0, %s261
      %s264 = sphi 0, %s263
      %s278 = sphi 0, %s264
      %s284 = sphi 0, %s286
      %s287 = sphi 0, %s284
      %s288 = sphi 0, %s287
      %s304 = sphi 0, %s288
      %s308 = sphi 0, %s308
      %s310 = sphi 0, %s308
      %s311 = sphi 0, %s310
      %s325 = sphi 0, %s311
      %s329 = sphi 0, %s329
      %s331 = sphi 0, %s329
      %s332 = sphi 0, %s331
      %s346 = sphi 0, %s332
    $region4: #{tpu_custom_call.1} parent=1 // loop_header_branch
      %30 = sbr.rel (%p28) target = $region8
    $region5: #{tpu_custom_call.1} parent=1 // loop_body
      %s32 = ssub.s32 %s27, 1
      %s33 = ssub.s32 %s27, 2
      %s40 = sadd.s32 1, %s35
      %p41 = scmp.ge.s32.totalorder %s40, 1
      %s42 = scalar_select %p41, 0, %s40
      %s43 = sadd.s32 1, %s34
      %s44 = scalar_select %p41, %s43, %s34
      %p45 = scmp.ge.s32.totalorder %s44, 2
      %s46 = scalar_select %p45, 0, %s44
      %s47 = ssub.s32 %s35, %s42
      %p48 = scmp.eq.s32.totalorder %s47, 0
      %s50 = sadd.s32 %s49, 1
      %s51 = scalar_select %p48, %s49, %s50
      %p54 = pneg %p48
      %p55 = scmp.eq.s32.totalorder %s27, 1
      %p56 = por %p54, %p55
      %p57 = scmp.ne.s32.totalorder %s49, %s52
      %p58 = scmp.eq.s32.totalorder %s27, 0
      %p59 = por %p57, %p58
      %p60 = scmp.ne.s32.totalorder %s49, %s52
      %p61 = scmp.eq.s32.totalorder %s32, 1
      %p62 = por %p60, %p61
      %p63 = scmp.ne.s32.totalorder %s52, %s53
      %p64 = scmp.eq.s32.totalorder %s32, 0
      %p65 = por %p63, %p64
      %p66 = scmp.ne.s32.totalorder %s52, %s53
      %p67 = scmp.eq.s32.totalorder %s33, 1
      %p68 = por %p66, %p67
      %p70 = scmp.ne.s32.totalorder %s53, %s69
      %p71 = scmp.eq.s32.totalorder %s33, 0
      %p72 = por %p70, %p71
      %s74 = sadd.s32 %s73, 1
      %p77 = scmp.eq.s32.totalorder %s27, 1
      %p78 = scmp.ne.s32.totalorder %s73, %s75
      %p79 = scmp.eq.s32.totalorder %s27, 0
      %p80 = por %p78, %p79
      %p81 = scmp.ne.s32.totalorder %s73, %s75
      %p82 = scmp.eq.s32.totalorder %s32, 1
      %p83 = por %p81, %p82
      %p84 = scmp.ne.s32.totalorder %s75, %s76
      %p85 = scmp.eq.s32.totalorder %s32, 0
      %p86 = por %p84, %p85
      %p87 = scmp.ne.s32.totalorder %s75, %s76
      %p88 = scmp.eq.s32.totalorder %s33, 1
      %p89 = por %p87, %p88
      %p91 = scmp.ne.s32.totalorder %s76, %s90
      %p92 = scmp.eq.s32.totalorder %s33, 0
      %p93 = por %p91, %p92
      %s95 = sadd.s32 %s94, 1
      %p98 = scmp.eq.s32.totalorder %s27, 1
      %p99 = scmp.ne.s32.totalorder %s94, %s96
      %p100 = scmp.eq.s32.totalorder %s27, 0
      %p101 = por %p99, %p100
      %p102 = scmp.ne.s32.totalorder %s94, %s96
      %p103 = scmp.eq.s32.totalorder %s32, 1
      %p104 = por %p102, %p103
      %p105 = scmp.ne.s32.totalorder %s96, %s97
      %p106 = scmp.eq.s32.totalorder %s32, 0
      %p107 = por %p105, %p106
      %p108 = scmp.ne.s32.totalorder %s96, %s97
      %p109 = scmp.eq.s32.totalorder %s33, 1
      %p110 = por %p108, %p109
      %p112 = scmp.ne.s32.totalorder %s97, %s111
      %p113 = scmp.eq.s32.totalorder %s33, 0
      %p114 = por %p112, %p113
      %s116 = sadd.s32 %s115, 1
      %p119 = scmp.eq.s32.totalorder %s27, 1
      %p120 = scmp.ne.s32.totalorder %s115, %s117
      %p121 = scmp.eq.s32.totalorder %s27, 0
      %p122 = por %p120, %p121
      %p123 = scmp.ne.s32.totalorder %s115, %s117
      %p124 = scmp.eq.s32.totalorder %s32, 1
      %p125 = por %p123, %p124
      %p126 = scmp.ne.s32.totalorder %s117, %s118
      %p127 = scmp.eq.s32.totalorder %s32, 0
      %p128 = por %p126, %p127
      %p129 = scmp.ne.s32.totalorder %s117, %s118
      %p130 = scmp.eq.s32.totalorder %s33, 1
      %p131 = por %p129, %p130
      %p133 = scmp.ne.s32.totalorder %s118, %s132
      %p134 = scmp.eq.s32.totalorder %s33, 0
      %p135 = por %p133, %p134
      %s136 = ssub.s32 %s34, %s46
      %p137 = scmp.eq.s32.totalorder %s136, 0
      %s139 = sadd.s32 %s138, 1
      %s140 = scalar_select %p137, %s138, %s139
      %p143 = pneg %p137
      %p144 = scmp.eq.s32.totalorder %s27, 1
      %p145 = por %p143, %p144
      %p146 = scmp.ne.s32.totalorder %s138, %s141
      %p147 = scmp.eq.s32.totalorder %s27, 0
      %p148 = por %p146, %p147
      %p149 = scmp.ne.s32.totalorder %s138, %s141
      %p150 = scmp.eq.s32.totalorder %s32, 1
      %p151 = por %p149, %p150
      %p152 = scmp.ne.s32.totalorder %s141, %s142
      %p153 = scmp.eq.s32.totalorder %s32, 0
      %p154 = por %p152, %p153
      %p155 = scmp.ne.s32.totalorder %s141, %s142
      %p156 = scmp.eq.s32.totalorder %s33, 1
      %p157 = por %p155, %p156
      %p159 = scmp.ne.s32.totalorder %s142, %s158
      %p160 = scmp.eq.s32.totalorder %s33, 0
      %p161 = por %p159, %p160
      %s162 = ssub.s32 %s34, %s46
      %p163 = scmp.eq.s32.totalorder %s162, 0
      %s165 = sadd.s32 %s164, 1
      %s166 = scalar_select %p163, %s164, %s165
      %p169 = pneg %p163
      %p170 = scmp.eq.s32.totalorder %s27, 1
      %p171 = por %p169, %p170
      %p172 = scmp.ne.s32.totalorder %s164, %s167
      %p173 = scmp.eq.s32.totalorder %s27, 0
      %p174 = por %p172, %p173
      %p175 = scmp.ne.s32.totalorder %s164, %s167
      %p176 = scmp.eq.s32.totalorder %s32, 1
      %p177 = por %p175, %p176
      %p178 = scmp.ne.s32.totalorder %s167, %s168
      %p179 = scmp.eq.s32.totalorder %s32, 0
      %p180 = por %p178, %p179
      %p181 = scmp.ne.s32.totalorder %s167, %s168
      %p182 = scmp.eq.s32.totalorder %s33, 1
      %p183 = por %p181, %p182
      %p185 = scmp.ne.s32.totalorder %s168, %s184
      %p186 = scmp.eq.s32.totalorder %s33, 0
      %p187 = por %p185, %p186
      %s188 = ssub.s32 %s34, %s46
      %p189 = scmp.eq.s32.totalorder %s188, 0
      %s191 = sadd.s32 %s190, 1
      %s192 = scalar_select %p189, %s190, %s191
      %p195 = pneg %p189
      %p196 = scmp.eq.s32.totalorder %s27, 1
      %p197 = por %p195, %p196
      %p198 = scmp.ne.s32.totalorder %s190, %s193
      %p199 = scmp.eq.s32.totalorder %s27, 0
      %p200 = por %p198, %p199
      %p201 = scmp.ne.s32.totalorder %s190, %s193
      %p202 = scmp.eq.s32.totalorder %s32, 1
      %p203 = por %p201, %p202
      %p204 = scmp.ne.s32.totalorder %s193, %s194
      %p205 = scmp.eq.s32.totalorder %s32, 0
      %p206 = por %p204, %p205
      %p207 = scmp.ne.s32.totalorder %s193, %s194
      %p208 = scmp.eq.s32.totalorder %s33, 1
      %p209 = por %p207, %p208
      %p211 = scmp.ne.s32.totalorder %s194, %s210
      %p212 = scmp.eq.s32.totalorder %s33, 0
      %p213 = por %p211, %p212
      %s214 = ssub.s32 %s34, %s46
      %p215 = scmp.eq.s32.totalorder %s214, 0
      %s217 = sadd.s32 %s216, 1
      %s218 = scalar_select %p215, %s216, %s217
      %p221 = pneg %p215
      %p222 = scmp.eq.s32.totalorder %s27, 1
      %p223 = por %p221, %p222
      %p224 = scmp.ne.s32.totalorder %s216, %s219
      %p225 = scmp.eq.s32.totalorder %s27, 0
      %p226 = por %p224, %p225
      %p227 = scmp.ne.s32.totalorder %s216, %s219
      %p228 = scmp.eq.s32.totalorder %s32, 1
      %p229 = por %p227, %p228
      %p230 = scmp.ne.s32.totalorder %s219, %s220
      %p231 = scmp.eq.s32.totalorder %s32, 0
      %p232 = por %p230, %p231
      %p233 = scmp.ne.s32.totalorder %s219, %s220
      %p234 = scmp.eq.s32.totalorder %s33, 1
      %p235 = por %p233, %p234
      %p237 = scmp.ne.s32.totalorder %s220, %s236
      %p238 = scmp.eq.s32.totalorder %s33, 0
      %p239 = por %p237, %p238
      %s241 = sadd.s32 %s240, 1
      %p244 = scmp.eq.s32.totalorder %s27, 1
      %p245 = scmp.ne.s32.totalorder %s240, %s242
      %p246 = scmp.eq.s32.totalorder %s27, 0
      %p247 = por %p245, %p246
      %p248 = scmp.ne.s32.totalorder %s240, %s242
      %p249 = scmp.eq.s32.totalorder %s32, 1
      %p250 = por %p248, %p249
      %p251 = scmp.ne.s32.totalorder %s242, %s243
      %p252 = scmp.eq.s32.totalorder %s32, 0
      %p253 = por %p251, %p252
      %p254 = scmp.ne.s32.totalorder %s242, %s243
      %p255 = scmp.eq.s32.totalorder %s33, 1
      %p256 = por %p254, %p255
      %p258 = scmp.ne.s32.totalorder %s243, %s257
      %p259 = scmp.eq.s32.totalorder %s33, 0
      %p260 = por %p258, %p259
      %s262 = sadd.s32 %s261, 1
      %p265 = scmp.eq.s32.totalorder %s27, 1
      %p266 = scmp.ne.s32.totalorder %s261, %s263
      %p267 = scmp.eq.s32.totalorder %s27, 0
      %p268 = por %p266, %p267
      %p269 = scmp.ne.s32.totalorder %s261, %s263
      %p270 = scmp.eq.s32.totalorder %s32, 1
      %p271 = por %p269, %p270
      %p272 = scmp.ne.s32.totalorder %s263, %s264
      %p273 = scmp.eq.s32.totalorder %s32, 0
      %p274 = por %p272, %p273
      %p275 = scmp.ne.s32.totalorder %s263, %s264
      %p276 = scmp.eq.s32.totalorder %s33, 1
      %p277 = por %p275, %p276
      %p279 = scmp.ne.s32.totalorder %s264, %s278
      %p280 = scmp.eq.s32.totalorder %s33, 0
      %p281 = por %p279, %p280
      %s282 = ssub.s32 %s35, %s42
      %p283 = scmp.eq.s32.totalorder %s282, 0
      %s285 = sadd.s32 %s284, 1
      %s286 = scalar_select %p283, %s284, %s285
      %p289 = pneg %p283
      %p290 = scmp.eq.s32.totalorder %s27, 1
      %p291 = por %p289, %p290
      %p292 = scmp.ne.s32.totalorder %s284, %s287
      %p293 = scmp.eq.s32.totalorder %s27, 0
      %p294 = por %p292, %p293
      %p295 = scmp.ne.s32.totalorder %s284, %s287
      %p296 = scmp.eq.s32.totalorder %s32, 1
      %p297 = por %p295, %p296
      %p298 = scmp.ne.s32.totalorder %s287, %s288
      %p299 = scmp.eq.s32.totalorder %s32, 0
      %p300 = por %p298, %p299
      %p301 = scmp.ne.s32.totalorder %s287, %s288
      %p302 = scmp.eq.s32.totalorder %s33, 1
      %p303 = por %p301, %p302
      %p305 = scmp.ne.s32.totalorder %s288, %s304
      %p306 = scmp.eq.s32.totalorder %s33, 0
      %p307 = por %p305, %p306
      %s309 = sadd.s32 %s308, 1
      %p312 = scmp.eq.s32.totalorder %s27, 1
      %p313 = scmp.ne.s32.totalorder %s308, %s310
      %p314 = scmp.eq.s32.totalorder %s27, 0
      %p315 = por %p313, %p314
      %p316 = scmp.ne.s32.totalorder %s308, %s310
      %p317 = scmp.eq.s32.totalorder %s32, 1
      %p318 = por %p316, %p317
      %p319 = scmp.ne.s32.totalorder %s310, %s311
      %p320 = scmp.eq.s32.totalorder %s32, 0
      %p321 = por %p319, %p320
      %p322 = scmp.ne.s32.totalorder %s310, %s311
      %p323 = scmp.eq.s32.totalorder %s33, 1
      %p324 = por %p322, %p323
      %p326 = scmp.ne.s32.totalorder %s311, %s325
      %p327 = scmp.eq.s32.totalorder %s33, 0
      %p328 = por %p326, %p327
      %s330 = sadd.s32 %s329, 1
      %p333 = scmp.eq.s32.totalorder %s27, 1
      %p334 = scmp.ne.s32.totalorder %s329, %s331
      %p335 = scmp.eq.s32.totalorder %s27, 0
      %p336 = por %p334, %p335
      %p337 = scmp.ne.s32.totalorder %s329, %s331
      %p338 = scmp.eq.s32.totalorder %s32, 1
      %p339 = por %p337, %p338
      %p340 = scmp.ne.s32.totalorder %s331, %s332
      %p341 = scmp.eq.s32.totalorder %s32, 0
      %p342 = por %p340, %p341
      %p343 = scmp.ne.s32.totalorder %s331, %s332
      %p344 = scmp.eq.s32.totalorder %s33, 1
      %p345 = por %p343, %p344
      %p347 = scmp.ne.s32.totalorder %s332, %s346
      %p348 = scmp.eq.s32.totalorder %s33, 0
      %p349 = por %p347, %p348
      %p350 = scmp.le.s32.totalorder 1, %s27
      %p351 = scmp.lt.s32.totalorder %s27, 3
      %p352 = pnand %p350, %p351
      %p353 = pneg %p352
      // Predicated region
      $region9: #{tpu_custom_call.1} parent=5 // pred_check
        _
      $region10: #{tpu_custom_call.1} parent=5 // pred_check_branch
        %355 = sbr.rel (%p352) target = $region12
      $region11: #{tpu_custom_call.1} parent=5 // pred_region
        %s356 = ssub.s32 %s27, 1
        // Predicated region
        $region13: #{tpu_custom_call.1} parent=11 // pred_check
          %p357 = pneg %p65
        $region14: #{tpu_custom_call.1} parent=11 // pred_check_branch
          %359 = sbr.rel (%p357) target = $region16
        $region15: #{tpu_custom_call.1} parent=11 // pred_region
          %s360 = smul.u32 16, %s37
          %s362 = ssub.s32 1024, 1024
          %363 = vsyncadd [#allocation5], %s362
          %s364 = smul.addr %s360, 64
          %s365 = scalar_lea.hbm %s0, %s364
          %s366 = sshll.u32 [#allocation4], 4
          %s367 = int_to_ptr.vmem [resolvable:$true] %s366
          %372 = dma.hbm_to_vmem [thread:$0]  %s365, 1024, %s367, [#allocation5], 64, 64, 4
        $region16: #{tpu_custom_call.1} parent=11 // pred_fallthru
          _
        // Predicated region
        $region17: #{tpu_custom_call.1} parent=11 // pred_check
          %p373 = pneg %p86
        $region18: #{tpu_custom_call.1} parent=11 // pred_check_branch
          %375 = sbr.rel (%p373) target = $region20
        $region19: #{tpu_custom_call.1} parent=11 // pred_region
          %s377 = ssub.s32 1024, 1024
          %378 = vsyncadd [#allocation8], %s377
          %s379 = sshll.u32 [#allocation7], 4
          %s380 = int_to_ptr.vmem [resolvable:$true] %s379
          %385 = dma.hbm_to_vmem [thread:$0]  %s1, 1024, %s380, [#allocation8], 64, 64, 4
        $region20: #{tpu_custom_call.1} parent=11 // pred_fallthru
          _
        // Predicated region
        $region21: #{tpu_custom_call.1} parent=11 // pred_check
          %p386 = pneg %p107
        $region22: #{tpu_custom_call.1} parent=11 // pred_check_branch
          %388 = sbr.rel (%p386) target = $region24
        $region23: #{tpu_custom_call.1} parent=11 // pred_region
          %s390 = ssub.s32 1024, 1024
          %391 = vsyncadd [#allocation8], %s390
          %s392 = sshll.u32 [#allocation9], 4
          %s393 = int_to_ptr.vmem [resolvable:$true] %s392
          %398 = dma.hbm_to_vmem [thread:$0]  %s2, 1024, %s393, [#allocation8], 64, 64, 4
        $region24: #{tpu_custom_call.1} parent=11 // pred_fallthru
          _
        // Predicated region
        $region25: #{tpu_custom_call.1} parent=11 // pred_check
          %p399 = pneg %p128
        $region26: #{tpu_custom_call.1} parent=11 // pred_check_branch
          %401 = sbr.rel (%p399) target = $region28
        $region27: #{tpu_custom_call.1} parent=11 // pred_region
          _
        $region28: #{tpu_custom_call.1} parent=11 // pred_fallthru
          _
        // Predicated region
        $region29: #{tpu_custom_call.1} parent=11 // pred_check
          %p402 = pneg %p253
        $region30: #{tpu_custom_call.1} parent=11 // pred_check_branch
          %404 = sbr.rel (%p402) target = $region32
        $region31: #{tpu_custom_call.1} parent=11 // pred_region
          %s406 = ssub.s32 1024, 1024
          %407 = vsyncadd [#allocation14], %s406
          %s408 = sshll.u32 [#allocation13], 4
          %s409 = int_to_ptr.vmem [resolvable:$true] %s408
          %414 = dma.hbm_to_vmem [thread:$0]  %s8, 1024, %s409, [#allocation14], 64, 64, 4
        $region32: #{tpu_custom_call.1} parent=11 // pred_fallthru
          _
        // Predicated region
        $region33: #{tpu_custom_call.1} parent=11 // pred_check
          %p415 = pneg %p274
        $region34: #{tpu_custom_call.1} parent=11 // pred_check_branch
          %417 = sbr.rel (%p415) target = $region36
        $region35: #{tpu_custom_call.1} parent=11 // pred_region
          _
        $region36: #{tpu_custom_call.1} parent=11 // pred_fallthru
          _
        // Predicated region
        $region37: #{tpu_custom_call.1} parent=11 // pred_check
          %p418 = pneg %p300
        $region38: #{tpu_custom_call.1} parent=11 // pred_check_branch
          %420 = sbr.rel (%p418) target = $region40
        $region39: #{tpu_custom_call.1} parent=11 // pred_region
          %p421 = scmp.lt.s32.totalorder %s37, 0
          %s422 = scalar_select %p421, %s37, 0
          %s423 = smul.addr %s422, 2
          %s424 = scalar_lea.vmem %s10, %s423
        $region40: #{tpu_custom_call.1} parent=11 // pred_fallthru
          _
      $region12: #{tpu_custom_call.1} parent=5 // pred_fallthru
        _
      %p425 = scmp.lt.s32.totalorder %s27, 2
      // Predicated region
      $region41: #{tpu_custom_call.1} parent=5 // pred_check
        %p426 = pneg %p425
      $region42: #{tpu_custom_call.1} parent=5 // pred_check_branch
        %428 = sbr.rel (%p426) target = $region44
      $region43: #{tpu_custom_call.1} parent=5 // pred_region
        // Predicated region
        $region45: #{tpu_custom_call.1} parent=43 // pred_check
          %p429 = pneg %p148
        $region46: #{tpu_custom_call.1} parent=43 // pred_check_branch
          %431 = sbr.rel (%p429) target = $region48
        $region47: #{tpu_custom_call.1} parent=43 // pred_region
          %s432 = sand.u32 %s27, 1
          %s433 = scalar_lea.sflag [#allocation11], %s432
          %s434 = sand.u32 %s138, 1
          %s435 = smul.addr %s434, 64
          %s436 = scalar_lea.vmem [#allocation10], %s435
          %s438 = ssub.s32 1024, 1024
          %439 = vsyncadd %s433, %s438
          %s440 = smul.addr %s34, 16
          %s441 = smul.addr %s440, 64
          %s442 = scalar_lea.hbm %s4, %s441
          %s443 = sshll.u32 %s436, 4
          %s444 = int_to_ptr.vmem [resolvable:$true] %s443
          %449 = dma.hbm_to_vmem [thread:$0]  %s442, 1024, %s444, %s433, 64, 64, 4
        $region48: #{tpu_custom_call.1} parent=43 // pred_fallthru
          _
        // Predicated region
        $region49: #{tpu_custom_call.1} parent=43 // pred_check
          %p450 = pneg %p174
        $region50: #{tpu_custom_call.1} parent=43 // pred_check_branch
          %452 = sbr.rel (%p450) target = $region52
        $region51: #{tpu_custom_call.1} parent=43 // pred_region
          %p453 = scmp.lt.s32.totalorder %s34, 1
          %s454 = scalar_select %p453, %s34, 1
          %s455 = scalar_lea.vmem %s5, %s454
        $region52: #{tpu_custom_call.1} parent=43 // pred_fallthru
          _
        // Predicated region
        $region53: #{tpu_custom_call.1} parent=43 // pred_check
          %p456 = pneg %p200
        $region54: #{tpu_custom_call.1} parent=43 // pred_check_branch
          %458 = sbr.rel (%p456) target = $region56
        $region55: #{tpu_custom_call.1} parent=43 // pred_region
          %s459 = sand.u32 %s27, 1
          %s460 = scalar_lea.sflag [#allocation11], %s459
          %s461 = sand.u32 %s190, 1
          %s462 = smul.addr %s461, 64
          %s463 = scalar_lea.vmem [#allocation12], %s462
          %s465 = ssub.s32 1024, 1024
          %466 = vsyncadd %s460, %s465
          %s467 = smul.addr %s34, 16
          %s468 = smul.addr %s467, 64
          %s469 = scalar_lea.hbm %s6, %s468
          %s470 = sshll.u32 %s463, 4
          %s471 = int_to_ptr.vmem [resolvable:$true] %s470
          %476 = dma.hbm_to_vmem [thread:$0]  %s469, 1024, %s471, %s460, 64, 64, 4
        $region56: #{tpu_custom_call.1} parent=43 // pred_fallthru
          _
        // Predicated region
        $region57: #{tpu_custom_call.1} parent=43 // pred_check
          %p477 = pneg %p226
        $region58: #{tpu_custom_call.1} parent=43 // pred_check_branch
          %479 = sbr.rel (%p477) target = $region60
        $region59: #{tpu_custom_call.1} parent=43 // pred_region
          %p480 = scmp.lt.s32.totalorder %s34, 1
          %s481 = scalar_select %p480, %s34, 1
          %s482 = scalar_lea.vmem %s7, %s481
        $region60: #{tpu_custom_call.1} parent=43 // pred_fallthru
          _
      $region44: #{tpu_custom_call.1} parent=5 // pred_fallthru
        _
      %p483 = scmp.le.s32.totalorder 1, %s27
      %p484 = scmp.lt.s32.totalorder %s27, 3
      %p485 = pnand %p483, %p484
      %p486 = pneg %p485
      // Predicated region
      $region61: #{tpu_custom_call.1} parent=5 // pred_check
        _
      $region62: #{tpu_custom_call.1} parent=5 // pred_check_branch
        %488 = sbr.rel (%p485) target = $region64
      $region63: #{tpu_custom_call.1} parent=5 // pred_region
        %s489 = ssub.s32 %s27, 1
        // Predicated region
        $region65: #{tpu_custom_call.1} parent=63 // pred_check
          %p490 = pneg %p65
        $region66: #{tpu_custom_call.1} parent=63 // pred_check_branch
          %492 = sbr.rel (%p490) target = $region68
        $region67: #{tpu_custom_call.1} parent=63 // pred_region
          %493 = dma.done [#allocation5], 1024
        $region68: #{tpu_custom_call.1} parent=63 // pred_fallthru
          _
        // Predicated region
        $region69: #{tpu_custom_call.1} parent=63 // pred_check
          %p494 = pneg %p86
        $region70: #{tpu_custom_call.1} parent=63 // pred_check_branch
          %496 = sbr.rel (%p494) target = $region72
        $region71: #{tpu_custom_call.1} parent=63 // pred_region
          %497 = dma.done [#allocation8], 1024
        $region72: #{tpu_custom_call.1} parent=63 // pred_fallthru
          _
        // Predicated region
        $region73: #{tpu_custom_call.1} parent=63 // pred_check
          %p498 = pneg %p107
        $region74: #{tpu_custom_call.1} parent=63 // pred_check_branch
          %500 = sbr.rel (%p498) target = $region76
        $region75: #{tpu_custom_call.1} parent=63 // pred_region
          %501 = dma.done [#allocation8], 1024
        $region76: #{tpu_custom_call.1} parent=63 // pred_fallthru
          _
        %s502 = sand.u32 %s32, 1
        %s503 = scalar_lea.sflag [#allocation11], %s502
        %s504 = sand.u32 %s141, 1
        %s505 = smul.addr %s504, 64
        %s506 = scalar_lea.vmem [#allocation10], %s505
        // Predicated region
        $region77: #{tpu_custom_call.1} parent=63 // pred_check
          %p507 = pneg %p154
        $region78: #{tpu_custom_call.1} parent=63 // pred_check_branch
          %509 = sbr.rel (%p507) target = $region80
        $region79: #{tpu_custom_call.1} parent=63 // pred_region
          %510 = dma.done %s503, 1024
        $region80: #{tpu_custom_call.1} parent=63 // pred_fallthru
          _
        %s511 = sand.u32 %s32, 1
        %s512 = scalar_lea.sflag [#allocation11], %s511
        %s513 = sand.u32 %s193, 1
        %s514 = smul.addr %s513, 64
        %s515 = scalar_lea.vmem [#allocation12], %s514
        // Predicated region
        $region81: #{tpu_custom_call.1} parent=63 // pred_check
          %p516 = pneg %p206
        $region82: #{tpu_custom_call.1} parent=63 // pred_check_branch
          %518 = sbr.rel (%p516) target = $region84
        $region83: #{tpu_custom_call.1} parent=63 // pred_region
          %519 = dma.done %s512, 1024
        $region84: #{tpu_custom_call.1} parent=63 // pred_fallthru
          _
        // Predicated region
        $region85: #{tpu_custom_call.1} parent=63 // pred_check
          %p520 = pneg %p253
        $region86: #{tpu_custom_call.1} parent=63 // pred_check_branch
          %522 = sbr.rel (%p520) target = $region88
        $region87: #{tpu_custom_call.1} parent=63 // pred_region
          %523 = dma.done [#allocation14], 1024
        $region88: #{tpu_custom_call.1} parent=63 // pred_fallthru
          _
        %p524 = pneg %p65
        %p525 = pneg %p62
        %p526 = pneg %p86
        %p527 = pneg %p83
        %p528 = pneg %p107
        %p529 = pneg %p104
        %p530 = pneg %p128
        %p531 = pneg %p125
        %s532 = sand.u32 %s32, 1
        %s533 = scalar_lea.sflag [#allocation11], %s532
        %s534 = sand.u32 %s141, 1
        %s535 = smul.addr %s534, 64
        %s536 = scalar_lea.vmem [#allocation10], %s535
        %p537 = pneg %p154
        %p538 = pneg %p151
        %p539 = scmp.lt.s32.totalorder %s36, 1
        %s540 = scalar_select %p539, %s36, 1
        %s541 = scalar_lea.vmem %s5, %s540
        %p542 = pneg %p180
        %p543 = pneg %p177
        %s544 = sand.u32 %s32, 1
        %s545 = scalar_lea.sflag [#allocation11], %s544
        %s546 = sand.u32 %s193, 1
        %s547 = smul.addr %s546, 64
        %s548 = scalar_lea.vmem [#allocation12], %s547
        %p549 = pneg %p206
        %p550 = pneg %p203
        %p551 = scmp.lt.s32.totalorder %s36, 1
        %s552 = scalar_select %p551, %s36, 1
        %s553 = scalar_lea.vmem %s7, %s552
        %p554 = pneg %p232
        %p555 = pneg %p229
        %p556 = pneg %p253
        %p557 = pneg %p250
        %p558 = pneg %p274
        %p559 = pneg %p271
        %p560 = scmp.lt.s32.totalorder %s37, 0
        %s561 = scalar_select %p560, %s37, 0
        %s562 = smul.addr %s561, 2
        %s563 = scalar_lea.vmem %s10, %s562
        %p564 = pneg %p300
        %p565 = pneg %p297
        %p566 = pneg %p321
        %p567 = pneg %p318
        %p568 = pneg %p342
        %p569 = pneg %p339
        %s570 = smul.u32 16, %s37
        %p571 = scmp.lt.s32.totalorder %s36, 1
        %s572 = scalar_select %p571, %s36, 1
        %s573 = scalar_lea.vmem %s5, %s572
        %p574 = scmp.lt.s32.totalorder %s36, 1
        %s575 = scalar_select %p574, %s36, 1
        %s576 = scalar_lea.vmem %s7, %s575
        %p577 = scmp.lt.s32.totalorder %s37, 0
        %s578 = scalar_select %p577, %s37, 0
        %s579 = smul.addr %s578, 2
        %s580 = scalar_lea.vmem %s10, %s579
        %s582 = smul.u32 %s37, 128
        %p583 = scmp.eq.s32.totalorder %s36, 0
        %p584 = scmp.eq.s32.totalorder %s37, 0
        %p585 = pnand %p583, %p584
        %p586 = pneg %p585
        // Predicated region
        $region89: #{tpu_custom_call.1} parent=63 // pred_check
          _
        $region90: #{tpu_custom_call.1} parent=63 // pred_check_branch
          %588 = sbr.rel (%p585) target = $region92
        $region91: #{tpu_custom_call.1} parent=63 // pred_region
          %v589 = vld [vmem:[#allocation7] sm:$0xf]
          %v590 = vld [vmem:[#allocation7 + $0x4] sm:$0xf]
          %v591 = vld [vmem:[#allocation7 + $0x8] sm:$0xf]
          %v592 = vld [vmem:[#allocation7 + $0xc] sm:$0xf]
          %v593 = vld [vmem:[#allocation7 + $0x10] sm:$0xf]
          %v594 = vld [vmem:[#allocation7 + $0x14] sm:$0xf]
          %v595 = vld [vmem:[#allocation7 + $0x18] sm:$0xf]
          %v596 = vld [vmem:[#allocation7 + $0x1c] sm:$0xf]
          %v597 = vld [vmem:[#allocation7 + $0x20] sm:$0xf]
          %v598 = vld [vmem:[#allocation7 + $0x24] sm:$0xf]
          %v599 = vld [vmem:[#allocation7 + $0x28] sm:$0xf]
          %v600 = vld [vmem:[#allocation7 + $0x2c] sm:$0xf]
          %v601 = vld [vmem:[#allocation7 + $0x30] sm:$0xf]
          %v602 = vld [vmem:[#allocation7 + $0x34] sm:$0xf]
          %v603 = vld [vmem:[#allocation7 + $0x38] sm:$0xf]
          %v604 = vld [vmem:[#allocation7 + $0x3c] sm:$0xf]
          %v605 = vld [vmem:[#allocation9] sm:$0xf]
          %v606 = vld [vmem:[#allocation9 + $0x4] sm:$0xf]
          %v607 = vld [vmem:[#allocation9 + $0x8] sm:$0xf]
          %v608 = vld [vmem:[#allocation9 + $0xc] sm:$0xf]
          %v609 = vld [vmem:[#allocation9 + $0x10] sm:$0xf]
          %v610 = vld [vmem:[#allocation9 + $0x14] sm:$0xf]
          %v611 = vld [vmem:[#allocation9 + $0x18] sm:$0xf]
          %v612 = vld [vmem:[#allocation9 + $0x1c] sm:$0xf]
          %v613 = vld [vmem:[#allocation9 + $0x20] sm:$0xf]
          %v614 = vld [vmem:[#allocation9 + $0x24] sm:$0xf]
          %v615 = vld [vmem:[#allocation9 + $0x28] sm:$0xf]
          %v616 = vld [vmem:[#allocation9 + $0x2c] sm:$0xf]
          %v617 = vld [vmem:[#allocation9 + $0x30] sm:$0xf]
          %v618 = vld [vmem:[#allocation9 + $0x34] sm:$0xf]
          %v619 = vld [vmem:[#allocation9 + $0x38] sm:$0xf]
          %v620 = vld [vmem:[#allocation9 + $0x3c] sm:$0xf]
          %v621 = vld [vmem:[%s3] sm:$0x1]
          %v623 = vlaneseq
          %v624 = vshrl.u32 %v623, 7
          %v625 = vsub.s32 0, %v624
          %v626 = vrot.slane %v621, %v625
          %v644 = vunpack.c.l.b16 %v589
          %v645 = vunpack.c.l.b16 %v590
          %v646 = vunpack.c.l.b16 %v591
          %v647 = vunpack.c.l.b16 %v592
          %v648 = vunpack.c.l.b16 %v593
          %v649 = vunpack.c.l.b16 %v594
          %v650 = vunpack.c.l.b16 %v595
          %v651 = vunpack.c.l.b16 %v596
          %v652 = vunpack.c.l.b16 %v597
          %v653 = vunpack.c.l.b16 %v598
          %v654 = vunpack.c.l.b16 %v599
          %v655 = vunpack.c.l.b16 %v600
          %v656 = vunpack.c.l.b16 %v601
          %v657 = vunpack.c.l.b16 %v602
          %v658 = vunpack.c.l.b16 %v603
          %v659 = vunpack.c.l.b16 %v604
          %v660 = vpack.c.b16 %v645, %v644
          %v661 = vpack.c.b16 %v647, %v646
          %v662 = vpack.c.b16 %v649, %v648
          %v663 = vpack.c.b16 %v651, %v650
          %v664 = vpack.c.b16 %v653, %v652
          %v665 = vpack.c.b16 %v655, %v654
          %v666 = vpack.c.b16 %v657, %v656
          %v667 = vpack.c.b16 %v659, %v658
          %v692 = vunpack.c.l.b16 %v605
          %v693 = vunpack.c.l.b16 %v606
          %v694 = vunpack.c.l.b16 %v607
          %v695 = vunpack.c.l.b16 %v608
          %v696 = vunpack.c.l.b16 %v609
          %v697 = vunpack.c.l.b16 %v610
          %v698 = vunpack.c.l.b16 %v611
          %v699 = vunpack.c.l.b16 %v612
          %v700 = vunpack.c.l.b16 %v613
          %v701 = vunpack.c.l.b16 %v614
          %v702 = vunpack.c.l.b16 %v615
          %v703 = vunpack.c.l.b16 %v616
          %v704 = vunpack.c.l.b16 %v617
          %v705 = vunpack.c.l.b16 %v618
          %v706 = vunpack.c.l.b16 %v619
          %v707 = vunpack.c.l.b16 %v620
          %v708 = vpack.c.b16 %v693, %v692
          %v709 = vpack.c.b16 %v695, %v694
          %v710 = vpack.c.b16 %v697, %v696
          %v711 = vpack.c.b16 %v699, %v698
          %v712 = vpack.c.b16 %v701, %v700
          %v713 = vpack.c.b16 %v703, %v702
          %v714 = vpack.c.b16 %v705, %v704
          %v715 = vpack.c.b16 %v707, %v706
          %724 = vmatprep.subr.bf16.mxu0 0
          %725 = vmatpush1.bf16.msra.mxu0 %v715
          %726 = vmatprep.subr.bf16.mxu0 0
          %727 = vmatpush1.bf16.msra.mxu0 %v714
          %728 = vmatprep.subr.bf16.mxu0 0
          %729 = vmatpush1.bf16.msra.mxu0 %v713
          %730 = vmatprep.subr.bf16.mxu0 0
          %731 = vmatpush1.bf16.msra.mxu0 %v712
          %732 = vmatprep.subr.bf16.mxu0 0
          %733 = vmatpush1.bf16.msra.mxu0 %v711
          %734 = vmatprep.subr.bf16.mxu0 0
          %735 = vmatpush1.bf16.msra.mxu0 %v710
          %736 = vmatprep.subr.bf16.mxu0 0
          %737 = vmatpush1.bf16.msra.mxu0 %v709
          %738 = vmatprep.subr.bf16.mxu0 0
          %739 = vmatpush1.bf16.msra.mxu0 %v708
          %740 = vmatprep.subr.bf16.mxu0 0
          %741 = vmatpush2.bf16.msra.mxu0 0
          %742 = vmatprep.subr.bf16.mxu0 0
          %743 = vmatpush2.bf16.msra.mxu0 0
          %744 = vmatprep.subr.bf16.mxu0 0
          %745 = vmatpush2.bf16.msra.mxu0 0
          %746 = vmatprep.subr.bf16.mxu0 0
          %747 = vmatpush2.bf16.msra.mxu0 0
          %748 = vmatprep.subr.bf16.mxu0 0
          %749 = vmatpush2.bf16.msra.mxu0 0
          %750 = vmatprep.subr.bf16.mxu0 0
          %751 = vmatpush2.bf16.msra.mxu0 0
          %752 = vmatprep.subr.bf16.mxu0 0
          %753 = vmatpush2.bf16.msra.mxu0 0
          %754 = vmatprep.subr.bf16.mxu0 0
          %755 = vmatpush2.bf16.msra.mxu0 0
          %756 = vmatprep.mubr.bf16.mxu0 0
          %757 = vmatmul.mubr.bf16.gmra.mxu0 %v660
          %v758 = vpop.f32.mrf.mxu0
          %v759 = vadd.f32 %v626, %v758
          %v760 = vpop.f32.mrf.mxu0
          %v761 = vpop.f32.mrf.mxu0
          %v762 = vadd.f32 %v626, %v761
          %v763 = vpop.f32.mrf.mxu0
          %764 = vmatprep.mubr.bf16.mxu0 0
          %765 = vmatmul.mubr.bf16.gmra.mxu0 %v661
          %v766 = vpop.f32.mrf.mxu0
          %v767 = vadd.f32 %v626, %v766
          %v768 = vpop.f32.mrf.mxu0
          %v769 = vpop.f32.mrf.mxu0
          %v770 = vadd.f32 %v626, %v769
          %v771 = vpop.f32.mrf.mxu0
          %772 = vmatprep.mubr.bf16.mxu0 0
          %773 = vmatmul.mubr.bf16.gmra.mxu0 %v662
          %v774 = vpop.f32.mrf.mxu0
          %v775 = vadd.f32 %v626, %v774
          %v776 = vpop.f32.mrf.mxu0
          %v777 = vpop.f32.mrf.mxu0
          %v778 = vadd.f32 %v626, %v777
          %v779 = vpop.f32.mrf.mxu0
          %780 = vmatprep.mubr.bf16.mxu0 0
          %781 = vmatmul.mubr.bf16.gmra.mxu0 %v663
          %v782 = vpop.f32.mrf.mxu0
          %v783 = vadd.f32 %v626, %v782
          %v784 = vpop.f32.mrf.mxu0
          %v785 = vpop.f32.mrf.mxu0
          %v786 = vadd.f32 %v626, %v785
          %v787 = vpop.f32.mrf.mxu0
          %788 = vmatprep.mubr.bf16.mxu0 0
          %789 = vmatmul.mubr.bf16.gmra.mxu0 %v664
          %v790 = vpop.f32.mrf.mxu0
          %v791 = vadd.f32 %v626, %v790
          %v792 = vpop.f32.mrf.mxu0
          %v793 = vpop.f32.mrf.mxu0
          %v794 = vadd.f32 %v626, %v793
          %v795 = vpop.f32.mrf.mxu0
          %796 = vmatprep.mubr.bf16.mxu0 0
          %797 = vmatmul.mubr.bf16.gmra.mxu0 %v665
          %v798 = vpop.f32.mrf.mxu0
          %v799 = vadd.f32 %v626, %v798
          %v800 = vpop.f32.mrf.mxu0
          %v801 = vpop.f32.mrf.mxu0
          %v802 = vadd.f32 %v626, %v801
          %v803 = vpop.f32.mrf.mxu0
          %804 = vmatprep.mubr.bf16.mxu0 0
          %805 = vmatmul.mubr.bf16.gmra.mxu0 %v666
          %v806 = vpop.f32.mrf.mxu0
          %v807 = vadd.f32 %v626, %v806
          %v808 = vpop.f32.mrf.mxu0
          %v809 = vpop.f32.mrf.mxu0
          %v810 = vadd.f32 %v626, %v809
          %v811 = vpop.f32.mrf.mxu0
          %812 = vmatprep.mubr.bf16.mxu0 0
          %813 = vmatmul.mubr.bf16.gmra.mxu0 %v667
          %v814 = vpop.f32.mrf.mxu0
          %v815 = vadd.f32 %v626, %v814
          %v816 = vpop.f32.mrf.mxu0
          %v817 = vpop.f32.mrf.mxu0
          %v818 = vadd.f32 %v626, %v817
          %v819 = vpop.f32.mrf.mxu0
          %820 = vdwg.mxu0
          %v821 = vmax.f32 %v759, 0.0
          %v822 = vmax.f32 %v762, 0.0
          %v823 = vmax.f32 %v767, 0.0
          %v824 = vmax.f32 %v770, 0.0
          %v825 = vmax.f32 %v775, 0.0
          %v826 = vmax.f32 %v778, 0.0
          %v827 = vmax.f32 %v783, 0.0
          %v828 = vmax.f32 %v786, 0.0
          %v829 = vmax.f32 %v791, 0.0
          %v830 = vmax.f32 %v794, 0.0
          %v831 = vmax.f32 %v799, 0.0
          %v832 = vmax.f32 %v802, 0.0
          %v833 = vmax.f32 %v807, 0.0
          %v834 = vmax.f32 %v810, 0.0
          %v835 = vmax.f32 %v815, 0.0
          %v836 = vmax.f32 %v818, 0.0
          %v837 = vpack.c.bf16 %v822, %v821
          %v838 = vpack.c.bf16 %v824, %v823
          %v839 = vpack.c.bf16 %v826, %v825
          %v840 = vpack.c.bf16 %v828, %v827
          %v841 = vpack.c.bf16 %v830, %v829
          %v842 = vpack.c.bf16 %v832, %v831
          %v843 = vpack.c.bf16 %v834, %v833
          %v844 = vpack.c.bf16 %v836, %v835
          %v853 = vunpack.c.l.b16 %v837
          %v854 = vunpack.c.h.b16 %v837
          %v855 = vunpack.c.l.b16 %v838
          %v856 = vunpack.c.h.b16 %v838
          %v857 = vunpack.c.l.b16 %v839
          %v858 = vunpack.c.h.b16 %v839
          %v859 = vunpack.c.l.b16 %v840
          %v860 = vunpack.c.h.b16 %v840
          %v861 = vunpack.c.l.b16 %v841
          %v862 = vunpack.c.h.b16 %v841
          %v863 = vunpack.c.l.b16 %v842
          %v864 = vunpack.c.h.b16 %v842
          %v865 = vunpack.c.l.b16 %v843
          %v866 = vunpack.c.h.b16 %v843
          %v867 = vunpack.c.l.b16 %v844
          %v868 = vunpack.c.h.b16 %v844
          %v869 = vpack.c.b16 %v853, %v853
          %v870 = vpack.c.b16 %v854, %v854
          %v871 = vpack.c.b16 %v855, %v855
          %v872 = vpack.c.b16 %v856, %v856
          %v873 = vpack.c.b16 %v857, %v857
          %v874 = vpack.c.b16 %v858, %v858
          %v875 = vpack.c.b16 %v859, %v859
          %v876 = vpack.c.b16 %v860, %v860
          %v877 = vpack.c.b16 %v861, %v861
          %v878 = vpack.c.b16 %v862, %v862
          %v879 = vpack.c.b16 %v863, %v863
          %v880 = vpack.c.b16 %v864, %v864
          %v881 = vpack.c.b16 %v865, %v865
          %v882 = vpack.c.b16 %v866, %v866
          %v883 = vpack.c.b16 %v867, %v867
          %v884 = vpack.c.b16 %v868, %v868
          %901 = vst [vmem:[#allocation2] sm:$0xf] %v869
          %902 = vst [vmem:[#allocation2 + $0x4] sm:$0xf] %v870
          %903 = vst [vmem:[#allocation2 + $0x8] sm:$0xf] %v871
          %904 = vst [vmem:[#allocation2 + $0xc] sm:$0xf] %v872
          %905 = vst [vmem:[#allocation2 + $0x10] sm:$0xf] %v873
          %906 = vst [vmem:[#allocation2 + $0x14] sm:$0xf] %v874
          %907 = vst [vmem:[#allocation2 + $0x18] sm:$0xf] %v875
          %908 = vst [vmem:[#allocation2 + $0x1c] sm:$0xf] %v876
          %909 = vst [vmem:[#allocation2 + $0x20] sm:$0xf] %v877
          %910 = vst [vmem:[#allocation2 + $0x24] sm:$0xf] %v878
          %911 = vst [vmem:[#allocation2 + $0x28] sm:$0xf] %v879
          %912 = vst [vmem:[#allocation2 + $0x2c] sm:$0xf] %v880
          %913 = vst [vmem:[#allocation2 + $0x30] sm:$0xf] %v881
          %914 = vst [vmem:[#allocation2 + $0x34] sm:$0xf] %v882
          %915 = vst [vmem:[#allocation2 + $0x38] sm:$0xf] %v883
          %916 = vst [vmem:[#allocation2 + $0x3c] sm:$0xf] %v884
          %917 = vst [vmem:[#allocation15] sm:$0x3] 0.0
        $region92: #{tpu_custom_call.1} parent=63 // pred_fallthru
          _
        %p918 = scmp.lt.s32.totalorder %s36, 0
        %s919 = ssub.s32 0, %s36
        %s920 = scalar_select %p918, %s919, %s36
        %s921 = sand.u32 %s920, 1
        %s922 = ssub.s32 0, %s921
        %s923 = scalar_select %p918, %s922, %s921
        %p924 = scmp.ne.s32.totalorder %s923, 0
        %p925 = scmp.lt.s32.totalorder %s923, 0
        %p926 = pnand %p925, %p924
        %p927 = pneg %p926
        %s928 = sadd.s32 %s923, 2
        %s929 = scalar_select %p927, %s928, %s923
        %p930 = scmp.eq.s32.totalorder %s929, 0
        // Predicated region
        $region93: #{tpu_custom_call.1} parent=63 // pred_check
          %p931 = pneg %p930
        $region94: #{tpu_custom_call.1} parent=63 // pred_check_branch
          %933 = sbr.rel (%p931) target = $region96
        $region95: #{tpu_custom_call.1} parent=63 // pred_region
          %v934 = vld [vmem:[#allocation4] sm:$0xf]
          %v935 = vld [vmem:[#allocation4 + $0x4] sm:$0xf]
          %v936 = vld [vmem:[#allocation4 + $0x8] sm:$0xf]
          %v937 = vld [vmem:[#allocation4 + $0xc] sm:$0xf]
          %v938 = vld [vmem:[#allocation4 + $0x10] sm:$0xf]
          %v939 = vld [vmem:[#allocation4 + $0x14] sm:$0xf]
          %v940 = vld [vmem:[#allocation4 + $0x18] sm:$0xf]
          %v941 = vld [vmem:[#allocation4 + $0x1c] sm:$0xf]
          %v942 = vld [vmem:[#allocation4 + $0x20] sm:$0xf]
          %v943 = vld [vmem:[#allocation4 + $0x24] sm:$0xf]
          %v944 = vld [vmem:[#allocation4 + $0x28] sm:$0xf]
          %v945 = vld [vmem:[#allocation4 + $0x2c] sm:$0xf]
          %v946 = vld [vmem:[#allocation4 + $0x30] sm:$0xf]
          %v947 = vld [vmem:[#allocation4 + $0x34] sm:$0xf]
          %v948 = vld [vmem:[#allocation4 + $0x38] sm:$0xf]
          %v949 = vld [vmem:[#allocation4 + $0x3c] sm:$0xf]
          %v950 = vld [vmem:[#allocation2] sm:$0xf]
          %v951 = vld [vmem:[#allocation2 + $0x4] sm:$0xf]
          %v952 = vld [vmem:[#allocation2 + $0x8] sm:$0xf]
          %v953 = vld [vmem:[#allocation2 + $0xc] sm:$0xf]
          %v954 = vld [vmem:[#allocation2 + $0x10] sm:$0xf]
          %v955 = vld [vmem:[#allocation2 + $0x14] sm:$0xf]
          %v956 = vld [vmem:[#allocation2 + $0x18] sm:$0xf]
          %v957 = vld [vmem:[#allocation2 + $0x1c] sm:$0xf]
          %v958 = vld [vmem:[#allocation2 + $0x20] sm:$0xf]
          %v959 = vld [vmem:[#allocation2 + $0x24] sm:$0xf]
          %v960 = vld [vmem:[#allocation2 + $0x28] sm:$0xf]
          %v961 = vld [vmem:[#allocation2 + $0x2c] sm:$0xf]
          %v962 = vld [vmem:[#allocation2 + $0x30] sm:$0xf]
          %v963 = vld [vmem:[#allocation2 + $0x34] sm:$0xf]
          %v964 = vld [vmem:[#allocation2 + $0x38] sm:$0xf]
          %v965 = vld [vmem:[#allocation2 + $0x3c] sm:$0xf]
          %v982 = vunpack.c.l.b16 %v934
          %v983 = vunpack.c.l.b16 %v935
          %v984 = vunpack.c.l.b16 %v936
          %v985 = vunpack.c.l.b16 %v937
          %v986 = vunpack.c.l.b16 %v938
          %v987 = vunpack.c.l.b16 %v939
          %v988 = vunpack.c.l.b16 %v940
          %v989 = vunpack.c.l.b16 %v941
          %v990 = vunpack.c.l.b16 %v942
          %v991 = vunpack.c.l.b16 %v943
          %v992 = vunpack.c.l.b16 %v944
          %v993 = vunpack.c.l.b16 %v945
          %v994 = vunpack.c.l.b16 %v946
          %v995 = vunpack.c.l.b16 %v947
          %v996 = vunpack.c.l.b16 %v948
          %v997 = vunpack.c.l.b16 %v949
          %v998 = vpack.c.b16 %v983, %v982
          %v999 = vpack.c.b16 %v985, %v984
          %v1000 = vpack.c.b16 %v987, %v986
          %v1001 = vpack.c.b16 %v989, %v988
          %v1002 = vpack.c.b16 %v991, %v990
          %v1003 = vpack.c.b16 %v993, %v992
          %v1004 = vpack.c.b16 %v995, %v994
          %v1005 = vpack.c.b16 %v997, %v996
          %v1030 = vunpack.c.l.b16 %v950
          %v1031 = vunpack.c.l.b16 %v951
          %v1032 = vunpack.c.l.b16 %v952
          %v1033 = vunpack.c.l.b16 %v953
          %v1034 = vunpack.c.l.b16 %v954
          %v1035 = vunpack.c.l.b16 %v955
          %v1036 = vunpack.c.l.b16 %v956
          %v1037 = vunpack.c.l.b16 %v957
          %v1038 = vunpack.c.l.b16 %v958
          %v1039 = vunpack.c.l.b16 %v959
          %v1040 = vunpack.c.l.b16 %v960
          %v1041 = vunpack.c.l.b16 %v961
          %v1042 = vunpack.c.l.b16 %v962
          %v1043 = vunpack.c.l.b16 %v963
          %v1044 = vunpack.c.l.b16 %v964
          %v1045 = vunpack.c.l.b16 %v965
          %v1046 = vpack.c.b16 %v1031, %v1030
          %v1047 = vpack.c.b16 %v1033, %v1032
          %v1048 = vpack.c.b16 %v1035, %v1034
          %v1049 = vpack.c.b16 %v1037, %v1036
          %v1050 = vpack.c.b16 %v1039, %v1038
          %v1051 = vpack.c.b16 %v1041, %v1040
          %v1052 = vpack.c.b16 %v1043, %v1042
          %v1053 = vpack.c.b16 %v1045, %v1044
          %1062 = vmatprep.subr.bf16.mxu0 0
          %1063 = vmatpush1.bf16.msra.mxu0 %v1053
          %1064 = vmatprep.subr.bf16.mxu0 0
          %1065 = vmatpush1.bf16.msra.mxu0 %v1052
          %1066 = vmatprep.subr.bf16.mxu0 0
          %1067 = vmatpush1.bf16.msra.mxu0 %v1051
          %1068 = vmatprep.subr.bf16.mxu0 0
          %1069 = vmatpush1.bf16.msra.mxu0 %v1050
          %1070 = vmatprep.subr.bf16.mxu0 0
          %1071 = vmatpush1.bf16.msra.mxu0 %v1049
          %1072 = vmatprep.subr.bf16.mxu0 0
          %1073 = vmatpush1.bf16.msra.mxu0 %v1048
          %1074 = vmatprep.subr.bf16.mxu0 0
          %1075 = vmatpush1.bf16.msra.mxu0 %v1047
          %1076 = vmatprep.subr.bf16.mxu0 0
          %1077 = vmatpush1.bf16.msra.mxu0 %v1046
          %1078 = vmatprep.subr.bf16.mxu0 0
          %1079 = vmatpush2.bf16.msra.mxu0 0
          %1080 = vmatprep.subr.bf16.mxu0 0
          %1081 = vmatpush2.bf16.msra.mxu0 0
          %1082 = vmatprep.subr.bf16.mxu0 0
          %1083 = vmatpush2.bf16.msra.mxu0 0
          %1084 = vmatprep.subr.bf16.mxu0 0
          %1085 = vmatpush2.bf16.msra.mxu0 0
          %1086 = vmatprep.subr.bf16.mxu0 0
          %1087 = vmatpush2.bf16.msra.mxu0 0
          %1088 = vmatprep.subr.bf16.mxu0 0
          %1089 = vmatpush2.bf16.msra.mxu0 0
          %1090 = vmatprep.subr.bf16.mxu0 0
          %1091 = vmatpush2.bf16.msra.mxu0 0
          %1092 = vmatprep.subr.bf16.mxu0 0
          %1093 = vmatpush2.bf16.msra.mxu0 0
          %1094 = vmatprep.mubr.bf16.mxu0 0
          %1095 = vmatmul.mubr.bf16.gmra.mxu0 %v998
          %v1096 = vpop.f32.mrf.mxu0
          %v1097 = vadd.f32 0.0, %v1096
          %v1098 = vpop.f32.mrf.mxu0
          %v1099 = vpop.f32.mrf.mxu0
          %v1100 = vadd.f32 0.0, %v1099
          %v1101 = vpop.f32.mrf.mxu0
          %1102 = vmatprep.mubr.bf16.mxu0 0
          %1103 = vmatmul.mubr.bf16.gmra.mxu0 %v999
          %v1104 = vpop.f32.mrf.mxu0
          %v1105 = vadd.f32 0.0, %v1104
          %v1106 = vpop.f32.mrf.mxu0
          %v1107 = vpop.f32.mrf.mxu0
          %v1108 = vadd.f32 0.0, %v1107
          %v1109 = vpop.f32.mrf.mxu0
          %1110 = vmatprep.mubr.bf16.mxu0 0
          %1111 = vmatmul.mubr.bf16.gmra.mxu0 %v1000
          %v1112 = vpop.f32.mrf.mxu0
          %v1113 = vadd.f32 0.0, %v1112
          %v1114 = vpop.f32.mrf.mxu0
          %v1115 = vpop.f32.mrf.mxu0
          %v1116 = vadd.f32 0.0, %v1115
          %v1117 = vpop.f32.mrf.mxu0
          %1118 = vmatprep.mubr.bf16.mxu0 0
          %1119 = vmatmul.mubr.bf16.gmra.mxu0 %v1001
          %v1120 = vpop.f32.mrf.mxu0
          %v1121 = vadd.f32 0.0, %v1120
          %v1122 = vpop.f32.mrf.mxu0
          %v1123 = vpop.f32.mrf.mxu0
          %v1124 = vadd.f32 0.0, %v1123
          %v1125 = vpop.f32.mrf.mxu0
          %1126 = vmatprep.mubr.bf16.mxu0 0
          %1127 = vmatmul.mubr.bf16.gmra.mxu0 %v1002
          %v1128 = vpop.f32.mrf.mxu0
          %v1129 = vadd.f32 0.0, %v1128
          %v1130 = vpop.f32.mrf.mxu0
          %v1131 = vpop.f32.mrf.mxu0
          %v1132 = vadd.f32 0.0, %v1131
          %v1133 = vpop.f32.mrf.mxu0
          %1134 = vmatprep.mubr.bf16.mxu0 0
          %1135 = vmatmul.mubr.bf16.gmra.mxu0 %v1003
          %v1136 = vpop.f32.mrf.mxu0
          %v1137 = vadd.f32 0.0, %v1136
          %v1138 = vpop.f32.mrf.mxu0
          %v1139 = vpop.f32.mrf.mxu0
          %v1140 = vadd.f32 0.0, %v1139
          %v1141 = vpop.f32.mrf.mxu0
          %1142 = vmatprep.mubr.bf16.mxu0 0
          %1143 = vmatmul.mubr.bf16.gmra.mxu0 %v1004
          %v1144 = vpop.f32.mrf.mxu0
          %v1145 = vadd.f32 0.0, %v1144
          %v1146 = vpop.f32.mrf.mxu0
          %v1147 = vpop.f32.mrf.mxu0
          %v1148 = vadd.f32 0.0, %v1147
          %v1149 = vpop.f32.mrf.mxu0
          %1150 = vmatprep.mubr.bf16.mxu0 0
          %1151 = vmatmul.mubr.bf16.gmra.mxu0 %v1005
          %v1152 = vpop.f32.mrf.mxu0
          %v1153 = vadd.f32 0.0, %v1152
          %v1154 = vpop.f32.mrf.mxu0
          %v1155 = vpop.f32.mrf.mxu0
          %v1156 = vadd.f32 0.0, %v1155
          %v1157 = vpop.f32.mrf.mxu0
          %1158 = vdwg.mxu0
          %v1159 = vpack.c.bf16 %v1100, %v1097
          %v1160 = vpack.c.bf16 %v1108, %v1105
          %v1161 = vpack.c.bf16 %v1116, %v1113
          %v1162 = vpack.c.bf16 %v1124, %v1121
          %v1163 = vpack.c.bf16 %v1132, %v1129
          %v1164 = vpack.c.bf16 %v1140, %v1137
          %v1165 = vpack.c.bf16 %v1148, %v1145
          %v1166 = vpack.c.bf16 %v1156, %v1153
          %v1167 = vld [vmem:[%s506] sm:$0xf]
          %v1168 = vld [vmem:[%s506 + $0x4] sm:$0xf]
          %v1169 = vld [vmem:[%s506 + $0x8] sm:$0xf]
          %v1170 = vld [vmem:[%s506 + $0xc] sm:$0xf]
          %v1171 = vld [vmem:[%s506 + $0x10] sm:$0xf]
          %v1172 = vld [vmem:[%s506 + $0x14] sm:$0xf]
          %v1173 = vld [vmem:[%s506 + $0x18] sm:$0xf]
          %v1174 = vld [vmem:[%s506 + $0x1c] sm:$0xf]
          %v1175 = vld [vmem:[%s506 + $0x20] sm:$0xf]
          %v1176 = vld [vmem:[%s506 + $0x24] sm:$0xf]
          %v1177 = vld [vmem:[%s506 + $0x28] sm:$0xf]
          %v1178 = vld [vmem:[%s506 + $0x2c] sm:$0xf]
          %v1179 = vld [vmem:[%s506 + $0x30] sm:$0xf]
          %v1180 = vld [vmem:[%s506 + $0x34] sm:$0xf]
          %v1181 = vld [vmem:[%s506 + $0x38] sm:$0xf]
          %v1182 = vld [vmem:[%s506 + $0x3c] sm:$0xf]
          %v1183 = vld [vmem:[%s573] sm:$0x1]
          %v1185 = vlaneseq
          %v1186 = vshrl.u32 %v1185, 7
          %v1187 = vsub.s32 0, %v1186
          %v1188 = vrot.slane %v1183, %v1187
          %v1206 = vunpack.c.l.b16 %v1167
          %v1207 = vunpack.c.l.b16 %v1168
          %v1208 = vunpack.c.l.b16 %v1169
          %v1209 = vunpack.c.l.b16 %v1170
          %v1210 = vunpack.c.l.b16 %v1171
          %v1211 = vunpack.c.l.b16 %v1172
          %v1212 = vunpack.c.l.b16 %v1173
          %v1213 = vunpack.c.l.b16 %v1174
          %v1214 = vunpack.c.l.b16 %v1175
          %v1215 = vunpack.c.l.b16 %v1176
          %v1216 = vunpack.c.l.b16 %v1177
          %v1217 = vunpack.c.l.b16 %v1178
          %v1218 = vunpack.c.l.b16 %v1179
          %v1219 = vunpack.c.l.b16 %v1180
          %v1220 = vunpack.c.l.b16 %v1181
          %v1221 = vunpack.c.l.b16 %v1182
          %v1222 = vpack.c.b16 %v1207, %v1206
          %v1223 = vpack.c.b16 %v1209, %v1208
          %v1224 = vpack.c.b16 %v1211, %v1210
          %v1225 = vpack.c.b16 %v1213, %v1212
          %v1226 = vpack.c.b16 %v1215, %v1214
          %v1227 = vpack.c.b16 %v1217, %v1216
          %v1228 = vpack.c.b16 %v1219, %v1218
          %v1229 = vpack.c.b16 %v1221, %v1220
          %1238 = vmatprep.subr.bf16.mxu0 0
          %1239 = vmatpush1.bf16.msra.mxu0 %v1229
          %1240 = vmatprep.subr.bf16.mxu0 0
          %1241 = vmatpush1.bf16.msra.mxu0 %v1228
          %1242 = vmatprep.subr.bf16.mxu0 0
          %1243 = vmatpush1.bf16.msra.mxu0 %v1227
          %1244 = vmatprep.subr.bf16.mxu0 0
          %1245 = vmatpush1.bf16.msra.mxu0 %v1226
          %1246 = vmatprep.subr.bf16.mxu0 0
          %1247 = vmatpush1.bf16.msra.mxu0 %v1225
          %1248 = vmatprep.subr.bf16.mxu0 0
          %1249 = vmatpush1.bf16.msra.mxu0 %v1224
          %1250 = vmatprep.subr.bf16.mxu0 0
          %1251 = vmatpush1.bf16.msra.mxu0 %v1223
          %1252 = vmatprep.subr.bf16.mxu0 0
          %1253 = vmatpush1.bf16.msra.mxu0 %v1222
          %1254 = vmatprep.subr.bf16.mxu0 0
          %1255 = vmatpush2.bf16.msra.mxu0 0
          %1256 = vmatprep.subr.bf16.mxu0 0
          %1257 = vmatpush2.bf16.msra.mxu0 0
          %1258 = vmatprep.subr.bf16.mxu0 0
          %1259 = vmatpush2.bf16.msra.mxu0 0
          %1260 = vmatprep.subr.bf16.mxu0 0
          %1261 = vmatpush2.bf16.msra.mxu0 0
          %1262 = vmatprep.subr.bf16.mxu0 0
          %1263 = vmatpush2.bf16.msra.mxu0 0
          %1264 = vmatprep.subr.bf16.mxu0 0
          %1265 = vmatpush2.bf16.msra.mxu0 0
          %1266 = vmatprep.subr.bf16.mxu0 0
          %1267 = vmatpush2.bf16.msra.mxu0 0
          %1268 = vmatprep.subr.bf16.mxu0 0
          %1269 = vmatpush2.bf16.msra.mxu0 0
          %1270 = vmatprep.mubr.bf16.mxu0 0
          %1271 = vmatmul.mubr.bf16.gmra.mxu0 %v1159
          %v1272 = vpop.f32.mrf.mxu0
          %v1273 = vadd.f32 %v1188, %v1272
          %v1274 = vpop.f32.mrf.mxu0
          %v1275 = vpop.f32.mrf.mxu0
          %v1276 = vadd.f32 %v1188, %v1275
          %v1277 = vpop.f32.mrf.mxu0
          %1278 = vmatprep.mubr.bf16.mxu0 0
          %1279 = vmatmul.mubr.bf16.gmra.mxu0 %v1160
          %v1280 = vpop.f32.mrf.mxu0
          %v1281 = vadd.f32 %v1188, %v1280
          %v1282 = vpop.f32.mrf.mxu0
          %v1283 = vpop.f32.mrf.mxu0
          %v1284 = vadd.f32 %v1188, %v1283
          %v1285 = vpop.f32.mrf.mxu0
          %1286 = vmatprep.mubr.bf16.mxu0 0
          %1287 = vmatmul.mubr.bf16.gmra.mxu0 %v1161
          %v1288 = vpop.f32.mrf.mxu0
          %v1289 = vadd.f32 %v1188, %v1288
          %v1290 = vpop.f32.mrf.mxu0
          %v1291 = vpop.f32.mrf.mxu0
          %v1292 = vadd.f32 %v1188, %v1291
          %v1293 = vpop.f32.mrf.mxu0
          %1294 = vmatprep.mubr.bf16.mxu0 0
          %1295 = vmatmul.mubr.bf16.gmra.mxu0 %v1162
          %v1296 = vpop.f32.mrf.mxu0
          %v1297 = vadd.f32 %v1188, %v1296
          %v1298 = vpop.f32.mrf.mxu0
          %v1299 = vpop.f32.mrf.mxu0
          %v1300 = vadd.f32 %v1188, %v1299
          %v1301 = vpop.f32.mrf.mxu0
          %1302 = vmatprep.mubr.bf16.mxu0 0
          %1303 = vmatmul.mubr.bf16.gmra.mxu0 %v1163
          %v1304 = vpop.f32.mrf.mxu0
          %v1305 = vadd.f32 %v1188, %v1304
          %v1306 = vpop.f32.mrf.mxu0
          %v1307 = vpop.f32.mrf.mxu0
          %v1308 = vadd.f32 %v1188, %v1307
          %v1309 = vpop.f32.mrf.mxu0
          %1310 = vmatprep.mubr.bf16.mxu0 0
          %1311 = vmatmul.mubr.bf16.gmra.mxu0 %v1164
          %v1312 = vpop.f32.mrf.mxu0
          %v1313 = vadd.f32 %v1188, %v1312
          %v1314 = vpop.f32.mrf.mxu0
          %v1315 = vpop.f32.mrf.mxu0
          %v1316 = vadd.f32 %v1188, %v1315
          %v1317 = vpop.f32.mrf.mxu0
          %1318 = vmatprep.mubr.bf16.mxu0 0
          %1319 = vmatmul.mubr.bf16.gmra.mxu0 %v1165
          %v1320 = vpop.f32.mrf.mxu0
          %v1321 = vadd.f32 %v1188, %v1320
          %v1322 = vpop.f32.mrf.mxu0
          %v1323 = vpop.f32.mrf.mxu0
          %v1324 = vadd.f32 %v1188, %v1323
          %v1325 = vpop.f32.mrf.mxu0
          %1326 = vmatprep.mubr.bf16.mxu0 0
          %1327 = vmatmul.mubr.bf16.gmra.mxu0 %v1166
          %v1328 = vpop.f32.mrf.mxu0
          %v1329 = vadd.f32 %v1188, %v1328
          %v1330 = vpop.f32.mrf.mxu0
          %v1331 = vpop.f32.mrf.mxu0
          %v1332 = vadd.f32 %v1188, %v1331
          %v1333 = vpop.f32.mrf.mxu0
          %1334 = vdwg.mxu0
          %v1335 = vmax.f32 %v1273, 0.0
          %v1336 = vmax.f32 %v1276, 0.0
          %v1337 = vmax.f32 %v1281, 0.0
          %v1338 = vmax.f32 %v1284, 0.0
          %v1339 = vmax.f32 %v1289, 0.0
          %v1340 = vmax.f32 %v1292, 0.0
          %v1341 = vmax.f32 %v1297, 0.0
          %v1342 = vmax.f32 %v1300, 0.0
          %v1343 = vmax.f32 %v1305, 0.0
          %v1344 = vmax.f32 %v1308, 0.0
          %v1345 = vmax.f32 %v1313, 0.0
          %v1346 = vmax.f32 %v1316, 0.0
          %v1347 = vmax.f32 %v1321, 0.0
          %v1348 = vmax.f32 %v1324, 0.0
          %v1349 = vmax.f32 %v1329, 0.0
          %v1350 = vmax.f32 %v1332, 0.0
          %v1351 = vpack.c.bf16 %v1336, %v1335
          %v1352 = vpack.c.bf16 %v1338, %v1337
          %v1353 = vpack.c.bf16 %v1340, %v1339
          %v1354 = vpack.c.bf16 %v1342, %v1341
          %v1355 = vpack.c.bf16 %v1344, %v1343
          %v1356 = vpack.c.bf16 %v1346, %v1345
          %v1357 = vpack.c.bf16 %v1348, %v1347
          %v1358 = vpack.c.bf16 %v1350, %v1349
          %v1359 = vld [vmem:[%s515] sm:$0xf]
          %v1360 = vld [vmem:[%s515 + $0x4] sm:$0xf]
          %v1361 = vld [vmem:[%s515 + $0x8] sm:$0xf]
          %v1362 = vld [vmem:[%s515 + $0xc] sm:$0xf]
          %v1363 = vld [vmem:[%s515 + $0x10] sm:$0xf]
          %v1364 = vld [vmem:[%s515 + $0x14] sm:$0xf]
          %v1365 = vld [vmem:[%s515 + $0x18] sm:$0xf]
          %v1366 = vld [vmem:[%s515 + $0x1c] sm:$0xf]
          %v1367 = vld [vmem:[%s515 + $0x20] sm:$0xf]
          %v1368 = vld [vmem:[%s515 + $0x24] sm:$0xf]
          %v1369 = vld [vmem:[%s515 + $0x28] sm:$0xf]
          %v1370 = vld [vmem:[%s515 + $0x2c] sm:$0xf]
          %v1371 = vld [vmem:[%s515 + $0x30] sm:$0xf]
          %v1372 = vld [vmem:[%s515 + $0x34] sm:$0xf]
          %v1373 = vld [vmem:[%s515 + $0x38] sm:$0xf]
          %v1374 = vld [vmem:[%s515 + $0x3c] sm:$0xf]
          %v1375 = vld [vmem:[%s576] sm:$0x1]
          %v1377 = vlaneseq
          %v1378 = vshrl.u32 %v1377, 7
          %v1379 = vsub.s32 0, %v1378
          %v1380 = vrot.slane %v1375, %v1379
          %v1398 = vunpack.c.l.b16 %v1359
          %v1399 = vunpack.c.l.b16 %v1360
          %v1400 = vunpack.c.l.b16 %v1361
          %v1401 = vunpack.c.l.b16 %v1362
          %v1402 = vunpack.c.l.b16 %v1363
          %v1403 = vunpack.c.l.b16 %v1364
          %v1404 = vunpack.c.l.b16 %v1365
          %v1405 = vunpack.c.l.b16 %v1366
          %v1406 = vunpack.c.l.b16 %v1367
          %v1407 = vunpack.c.l.b16 %v1368
          %v1408 = vunpack.c.l.b16 %v1369
          %v1409 = vunpack.c.l.b16 %v1370
          %v1410 = vunpack.c.l.b16 %v1371
          %v1411 = vunpack.c.l.b16 %v1372
          %v1412 = vunpack.c.l.b16 %v1373
          %v1413 = vunpack.c.l.b16 %v1374
          %v1414 = vpack.c.b16 %v1399, %v1398
          %v1415 = vpack.c.b16 %v1401, %v1400
          %v1416 = vpack.c.b16 %v1403, %v1402
          %v1417 = vpack.c.b16 %v1405, %v1404
          %v1418 = vpack.c.b16 %v1407, %v1406
          %v1419 = vpack.c.b16 %v1409, %v1408
          %v1420 = vpack.c.b16 %v1411, %v1410
          %v1421 = vpack.c.b16 %v1413, %v1412
          %1430 = vmatprep.subr.bf16.mxu0 0
          %1431 = vmatpush1.bf16.msra.mxu0 %v1421
          %1432 = vmatprep.subr.bf16.mxu0 0
          %1433 = vmatpush1.bf16.msra.mxu0 %v1420
          %1434 = vmatprep.subr.bf16.mxu0 0
          %1435 = vmatpush1.bf16.msra.mxu0 %v1419
          %1436 = vmatprep.subr.bf16.mxu0 0
          %1437 = vmatpush1.bf16.msra.mxu0 %v1418
          %1438 = vmatprep.subr.bf16.mxu0 0
          %1439 = vmatpush1.bf16.msra.mxu0 %v1417
          %1440 = vmatprep.subr.bf16.mxu0 0
          %1441 = vmatpush1.bf16.msra.mxu0 %v1416
          %1442 = vmatprep.subr.bf16.mxu0 0
          %1443 = vmatpush1.bf16.msra.mxu0 %v1415
          %1444 = vmatprep.subr.bf16.mxu0 0
          %1445 = vmatpush1.bf16.msra.mxu0 %v1414
          %1446 = vmatprep.subr.bf16.mxu0 0
          %1447 = vmatpush2.bf16.msra.mxu0 0
          %1448 = vmatprep.subr.bf16.mxu0 0
          %1449 = vmatpush2.bf16.msra.mxu0 0
          %1450 = vmatprep.subr.bf16.mxu0 0
          %1451 = vmatpush2.bf16.msra.mxu0 0
          %1452 = vmatprep.subr.bf16.mxu0 0
          %1453 = vmatpush2.bf16.msra.mxu0 0
          %1454 = vmatprep.subr.bf16.mxu0 0
          %1455 = vmatpush2.bf16.msra.mxu0 0
          %1456 = vmatprep.subr.bf16.mxu0 0
          %1457 = vmatpush2.bf16.msra.mxu0 0
          %1458 = vmatprep.subr.bf16.mxu0 0
          %1459 = vmatpush2.bf16.msra.mxu0 0
          %1460 = vmatprep.subr.bf16.mxu0 0
          %1461 = vmatpush2.bf16.msra.mxu0 0
          %1462 = vmatprep.mubr.bf16.mxu0 0
          %1463 = vmatmul.mubr.bf16.gmra.mxu0 %v1351
          %v1464 = vpop.f32.mrf.mxu0
          %v1465 = vadd.f32 %v1380, %v1464
          %v1466 = vpop.f32.mrf.mxu0
          %v1467 = vpop.f32.mrf.mxu0
          %v1468 = vadd.f32 %v1380, %v1467
          %v1469 = vpop.f32.mrf.mxu0
          %1470 = vmatprep.mubr.bf16.mxu0 0
          %1471 = vmatmul.mubr.bf16.gmra.mxu0 %v1352
          %v1472 = vpop.f32.mrf.mxu0
          %v1473 = vadd.f32 %v1380, %v1472
          %v1474 = vpop.f32.mrf.mxu0
          %v1475 = vpop.f32.mrf.mxu0
          %v1476 = vadd.f32 %v1380, %v1475
          %v1477 = vpop.f32.mrf.mxu0
          %1478 = vmatprep.mubr.bf16.mxu0 0
          %1479 = vmatmul.mubr.bf16.gmra.mxu0 %v1353
          %v1480 = vpop.f32.mrf.mxu0
          %v1481 = vadd.f32 %v1380, %v1480
          %v1482 = vpop.f32.mrf.mxu0
          %v1483 = vpop.f32.mrf.mxu0
          %v1484 = vadd.f32 %v1380, %v1483
          %v1485 = vpop.f32.mrf.mxu0
          %1486 = vmatprep.mubr.bf16.mxu0 0
          %1487 = vmatmul.mubr.bf16.gmra.mxu0 %v1354
          %v1488 = vpop.f32.mrf.mxu0
          %v1489 = vadd.f32 %v1380, %v1488
          %v1490 = vpop.f32.mrf.mxu0
          %v1491 = vpop.f32.mrf.mxu0
          %v1492 = vadd.f32 %v1380, %v1491
          %v1493 = vpop.f32.mrf.mxu0
          %1494 = vmatprep.mubr.bf16.mxu0 0
          %1495 = vmatmul.mubr.bf16.gmra.mxu0 %v1355
          %v1496 = vpop.f32.mrf.mxu0
          %v1497 = vadd.f32 %v1380, %v1496
          %v1498 = vpop.f32.mrf.mxu0
          %v1499 = vpop.f32.mrf.mxu0
          %v1500 = vadd.f32 %v1380, %v1499
          %v1501 = vpop.f32.mrf.mxu0
          %1502 = vmatprep.mubr.bf16.mxu0 0
          %1503 = vmatmul.mubr.bf16.gmra.mxu0 %v1356
          %v1504 = vpop.f32.mrf.mxu0
          %v1505 = vadd.f32 %v1380, %v1504
          %v1506 = vpop.f32.mrf.mxu0
          %v1507 = vpop.f32.mrf.mxu0
          %v1508 = vadd.f32 %v1380, %v1507
          %v1509 = vpop.f32.mrf.mxu0
          %1510 = vmatprep.mubr.bf16.mxu0 0
          %1511 = vmatmul.mubr.bf16.gmra.mxu0 %v1357
          %v1512 = vpop.f32.mrf.mxu0
          %v1513 = vadd.f32 %v1380, %v1512
          %v1514 = vpop.f32.mrf.mxu0
          %v1515 = vpop.f32.mrf.mxu0
          %v1516 = vadd.f32 %v1380, %v1515
          %v1517 = vpop.f32.mrf.mxu0
          %1518 = vmatprep.mubr.bf16.mxu0 0
          %1519 = vmatmul.mubr.bf16.gmra.mxu0 %v1358
          %v1520 = vpop.f32.mrf.mxu0
          %v1521 = vadd.f32 %v1380, %v1520
          %v1522 = vpop.f32.mrf.mxu0
          %v1523 = vpop.f32.mrf.mxu0
          %v1524 = vadd.f32 %v1380, %v1523
          %v1525 = vpop.f32.mrf.mxu0
          %1526 = vdwg.mxu0
          %v1527 = vpack.c.bf16 %v1468, %v1465
          %v1528 = vpack.c.bf16 %v1476, %v1473
          %v1529 = vpack.c.bf16 %v1484, %v1481
          %v1530 = vpack.c.bf16 %v1492, %v1489
          %v1531 = vpack.c.bf16 %v1500, %v1497
          %v1532 = vpack.c.bf16 %v1508, %v1505
          %v1533 = vpack.c.bf16 %v1516, %v1513
          %v1534 = vpack.c.bf16 %v1524, %v1521
          %v1543 = vunpack.c.l.b16 %v1527
          %v1544 = vunpack.c.h.b16 %v1527
          %v1545 = vunpack.c.l.b16 %v1528
          %v1546 = vunpack.c.h.b16 %v1528
          %v1547 = vunpack.c.l.b16 %v1529
          %v1548 = vunpack.c.h.b16 %v1529
          %v1549 = vunpack.c.l.b16 %v1530
          %v1550 = vunpack.c.h.b16 %v1530
          %v1551 = vunpack.c.l.b16 %v1531
          %v1552 = vunpack.c.h.b16 %v1531
          %v1553 = vunpack.c.l.b16 %v1532
          %v1554 = vunpack.c.h.b16 %v1532
          %v1555 = vunpack.c.l.b16 %v1533
          %v1556 = vunpack.c.h.b16 %v1533
          %v1557 = vunpack.c.l.b16 %v1534
          %v1558 = vunpack.c.h.b16 %v1534
          %v1559 = vpack.c.b16 %v1543, %v1543
          %v1560 = vpack.c.b16 %v1544, %v1544
          %v1561 = vpack.c.b16 %v1545, %v1545
          %v1562 = vpack.c.b16 %v1546, %v1546
          %v1563 = vpack.c.b16 %v1547, %v1547
          %v1564 = vpack.c.b16 %v1548, %v1548
          %v1565 = vpack.c.b16 %v1549, %v1549
          %v1566 = vpack.c.b16 %v1550, %v1550
          %v1567 = vpack.c.b16 %v1551, %v1551
          %v1568 = vpack.c.b16 %v1552, %v1552
          %v1569 = vpack.c.b16 %v1553, %v1553
          %v1570 = vpack.c.b16 %v1554, %v1554
          %v1571 = vpack.c.b16 %v1555, %v1555
          %v1572 = vpack.c.b16 %v1556, %v1556
          %v1573 = vpack.c.b16 %v1557, %v1557
          %v1574 = vpack.c.b16 %v1558, %v1558
          %s1591 = sshra.s32 %s582, 3
          %s1592 = sand.u32 %s582, 7
          %s1593 = smul.addr %s1591, 4
          %s1594 = scalar_lea.vmem [#allocation3], %s1593
          %1595 = vst [vmem:[%s1594] sm:$0xf] %v1559
          %1596 = vst [vmem:[%s1594 + $0x4] sm:$0xf] %v1560
          %1597 = vst [vmem:[%s1594 + $0x8] sm:$0xf] %v1561
          %1598 = vst [vmem:[%s1594 + $0xc] sm:$0xf] %v1562
          %1599 = vst [vmem:[%s1594 + $0x10] sm:$0xf] %v1563
          %1600 = vst [vmem:[%s1594 + $0x14] sm:$0xf] %v1564
          %1601 = vst [vmem:[%s1594 + $0x18] sm:$0xf] %v1565
          %1602 = vst [vmem:[%s1594 + $0x1c] sm:$0xf] %v1566
          %1603 = vst [vmem:[%s1594 + $0x20] sm:$0xf] %v1567
          %1604 = vst [vmem:[%s1594 + $0x24] sm:$0xf] %v1568
          %1605 = vst [vmem:[%s1594 + $0x28] sm:$0xf] %v1569
          %1606 = vst [vmem:[%s1594 + $0x2c] sm:$0xf] %v1570
          %1607 = vst [vmem:[%s1594 + $0x30] sm:$0xf] %v1571
          %1608 = vst [vmem:[%s1594 + $0x34] sm:$0xf] %v1572
          %1609 = vst [vmem:[%s1594 + $0x38] sm:$0xf] %v1573
          %1610 = vst [vmem:[%s1594 + $0x3c] sm:$0xf] %v1574
          %p1611 = scmp.eq.s32.totalorder %s36, 1
          // Predicated region
          $region97: #{tpu_custom_call.1} parent=95 // pred_check
            %p1612 = pneg %p1611
          $region98: #{tpu_custom_call.1} parent=95 // pred_check_branch
            %1614 = sbr.rel (%p1612) target = $region100
          $region99: #{tpu_custom_call.1} parent=95 // pred_region
            %v1615 = vld [vmem:[#allocation13] sm:$0xf]
            %v1616 = vld [vmem:[#allocation13 + $0x4] sm:$0xf]
            %v1617 = vld [vmem:[#allocation13 + $0x8] sm:$0xf]
            %v1618 = vld [vmem:[#allocation13 + $0xc] sm:$0xf]
            %v1619 = vld [vmem:[#allocation13 + $0x10] sm:$0xf]
            %v1620 = vld [vmem:[#allocation13 + $0x14] sm:$0xf]
            %v1621 = vld [vmem:[#allocation13 + $0x18] sm:$0xf]
            %v1622 = vld [vmem:[#allocation13 + $0x1c] sm:$0xf]
            %v1623 = vld [vmem:[#allocation13 + $0x20] sm:$0xf]
            %v1624 = vld [vmem:[#allocation13 + $0x24] sm:$0xf]
            %v1625 = vld [vmem:[#allocation13 + $0x28] sm:$0xf]
            %v1626 = vld [vmem:[#allocation13 + $0x2c] sm:$0xf]
            %v1627 = vld [vmem:[#allocation13 + $0x30] sm:$0xf]
            %v1628 = vld [vmem:[#allocation13 + $0x34] sm:$0xf]
            %v1629 = vld [vmem:[#allocation13 + $0x38] sm:$0xf]
            %v1630 = vld [vmem:[#allocation13 + $0x3c] sm:$0xf]
            %v1631 = vld [vmem:[%s9] sm:$0x1]
            %v1633 = vlaneseq
            %v1634 = vshrl.u32 %v1633, 7
            %v1635 = vsub.s32 0, %v1634
            %v1636 = vrot.slane %v1631, %v1635
            %v1654 = vunpack.c.l.b16 %v1615
            %v1655 = vunpack.c.l.b16 %v1616
            %v1656 = vunpack.c.l.b16 %v1617
            %v1657 = vunpack.c.l.b16 %v1618
            %v1658 = vunpack.c.l.b16 %v1619
            %v1659 = vunpack.c.l.b16 %v1620
            %v1660 = vunpack.c.l.b16 %v1621
            %v1661 = vunpack.c.l.b16 %v1622
            %v1662 = vunpack.c.l.b16 %v1623
            %v1663 = vunpack.c.l.b16 %v1624
            %v1664 = vunpack.c.l.b16 %v1625
            %v1665 = vunpack.c.l.b16 %v1626
            %v1666 = vunpack.c.l.b16 %v1627
            %v1667 = vunpack.c.l.b16 %v1628
            %v1668 = vunpack.c.l.b16 %v1629
            %v1669 = vunpack.c.l.b16 %v1630
            %v1670 = vpack.c.b16 %v1655, %v1654
            %v1671 = vpack.c.b16 %v1657, %v1656
            %v1672 = vpack.c.b16 %v1659, %v1658
            %v1673 = vpack.c.b16 %v1661, %v1660
            %v1674 = vpack.c.b16 %v1663, %v1662
            %v1675 = vpack.c.b16 %v1665, %v1664
            %v1676 = vpack.c.b16 %v1667, %v1666
            %v1677 = vpack.c.b16 %v1669, %v1668
            %1686 = vmatprep.subr.bf16.mxu0 0
            %1687 = vmatpush1.bf16.msra.mxu0 %v1677
            %1688 = vmatprep.subr.bf16.mxu0 0
            %1689 = vmatpush1.bf16.msra.mxu0 %v1676
            %1690 = vmatprep.subr.bf16.mxu0 0
            %1691 = vmatpush1.bf16.msra.mxu0 %v1675
            %1692 = vmatprep.subr.bf16.mxu0 0
            %1693 = vmatpush1.bf16.msra.mxu0 %v1674
            %1694 = vmatprep.subr.bf16.mxu0 0
            %1695 = vmatpush1.bf16.msra.mxu0 %v1673
            %1696 = vmatprep.subr.bf16.mxu0 0
            %1697 = vmatpush1.bf16.msra.mxu0 %v1672
            %1698 = vmatprep.subr.bf16.mxu0 0
            %1699 = vmatpush1.bf16.msra.mxu0 %v1671
            %1700 = vmatprep.subr.bf16.mxu0 0
            %1701 = vmatpush1.bf16.msra.mxu0 %v1670
            %1702 = vmatprep.subr.bf16.mxu0 0
            %1703 = vmatpush2.bf16.msra.mxu0 0
            %1704 = vmatprep.subr.bf16.mxu0 0
            %1705 = vmatpush2.bf16.msra.mxu0 0
            %1706 = vmatprep.subr.bf16.mxu0 0
            %1707 = vmatpush2.bf16.msra.mxu0 0
            %1708 = vmatprep.subr.bf16.mxu0 0
            %1709 = vmatpush2.bf16.msra.mxu0 0
            %1710 = vmatprep.subr.bf16.mxu0 0
            %1711 = vmatpush2.bf16.msra.mxu0 0
            %1712 = vmatprep.subr.bf16.mxu0 0
            %1713 = vmatpush2.bf16.msra.mxu0 0
            %1714 = vmatprep.subr.bf16.mxu0 0
            %1715 = vmatpush2.bf16.msra.mxu0 0
            %1716 = vmatprep.subr.bf16.mxu0 0
            %1717 = vmatpush2.bf16.msra.mxu0 0
            %1718 = vmatprep.mubr.bf16.mxu0 0
            %1719 = vmatmul.mubr.bf16.gmra.mxu0 %v1527
            %v1720 = vpop.f32.mrf.mxu0
            %v1721 = vadd.f32 %v1636, %v1720
            %v1722 = vpop.f32.mrf.mxu0
            %v1723 = vpop.f32.mrf.mxu0
            %v1724 = vadd.f32 %v1636, %v1723
            %v1725 = vpop.f32.mrf.mxu0
            %1726 = vmatprep.mubr.bf16.mxu0 0
            %1727 = vmatmul.mubr.bf16.gmra.mxu0 %v1528
            %v1728 = vpop.f32.mrf.mxu0
            %v1729 = vadd.f32 %v1636, %v1728
            %v1730 = vpop.f32.mrf.mxu0
            %v1731 = vpop.f32.mrf.mxu0
            %v1732 = vadd.f32 %v1636, %v1731
            %v1733 = vpop.f32.mrf.mxu0
            %1734 = vmatprep.mubr.bf16.mxu0 0
            %1735 = vmatmul.mubr.bf16.gmra.mxu0 %v1529
            %v1736 = vpop.f32.mrf.mxu0
            %v1737 = vadd.f32 %v1636, %v1736
            %v1738 = vpop.f32.mrf.mxu0
            %v1739 = vpop.f32.mrf.mxu0
            %v1740 = vadd.f32 %v1636, %v1739
            %v1741 = vpop.f32.mrf.mxu0
            %1742 = vmatprep.mubr.bf16.mxu0 0
            %1743 = vmatmul.mubr.bf16.gmra.mxu0 %v1530
            %v1744 = vpop.f32.mrf.mxu0
            %v1745 = vadd.f32 %v1636, %v1744
            %v1746 = vpop.f32.mrf.mxu0
            %v1747 = vpop.f32.mrf.mxu0
            %v1748 = vadd.f32 %v1636, %v1747
            %v1749 = vpop.f32.mrf.mxu0
            %1750 = vmatprep.mubr.bf16.mxu0 0
            %1751 = vmatmul.mubr.bf16.gmra.mxu0 %v1531
            %v1752 = vpop.f32.mrf.mxu0
            %v1753 = vadd.f32 %v1636, %v1752
            %v1754 = vpop.f32.mrf.mxu0
            %v1755 = vpop.f32.mrf.mxu0
            %v1756 = vadd.f32 %v1636, %v1755
            %v1757 = vpop.f32.mrf.mxu0
            %1758 = vmatprep.mubr.bf16.mxu0 0
            %1759 = vmatmul.mubr.bf16.gmra.mxu0 %v1532
            %v1760 = vpop.f32.mrf.mxu0
            %v1761 = vadd.f32 %v1636, %v1760
            %v1762 = vpop.f32.mrf.mxu0
            %v1763 = vpop.f32.mrf.mxu0
            %v1764 = vadd.f32 %v1636, %v1763
            %v1765 = vpop.f32.mrf.mxu0
            %1766 = vmatprep.mubr.bf16.mxu0 0
            %1767 = vmatmul.mubr.bf16.gmra.mxu0 %v1533
            %v1768 = vpop.f32.mrf.mxu0
            %v1769 = vadd.f32 %v1636, %v1768
            %v1770 = vpop.f32.mrf.mxu0
            %v1771 = vpop.f32.mrf.mxu0
            %v1772 = vadd.f32 %v1636, %v1771
            %v1773 = vpop.f32.mrf.mxu0
            %1774 = vmatprep.mubr.bf16.mxu0 0
            %1775 = vmatmul.mubr.bf16.gmra.mxu0 %v1534
            %v1776 = vpop.f32.mrf.mxu0
            %v1777 = vadd.f32 %v1636, %v1776
            %v1778 = vpop.f32.mrf.mxu0
            %v1779 = vpop.f32.mrf.mxu0
            %v1780 = vadd.f32 %v1636, %v1779
            %v1781 = vpop.f32.mrf.mxu0
            %1782 = vdwg.mxu0
            %s1783 = scalar_lea.vmem [#allocation16], %s582
            %1784 = vst [vmem:[%s1783] sm:$0xff] %v1721
            %1785 = vst [vmem:[%s1783 + $0x8] sm:$0xff] %v1724
            %1786 = vst [vmem:[%s1783 + $0x10] sm:$0xff] %v1729
            %1787 = vst [vmem:[%s1783 + $0x18] sm:$0xff] %v1732
            %1788 = vst [vmem:[%s1783 + $0x20] sm:$0xff] %v1737
            %1789 = vst [vmem:[%s1783 + $0x28] sm:$0xff] %v1740
            %1790 = vst [vmem:[%s1783 + $0x30] sm:$0xff] %v1745
            %1791 = vst [vmem:[%s1783 + $0x38] sm:$0xff] %v1748
            %1792 = vst [vmem:[%s1783 + $0x40] sm:$0xff] %v1753
            %1793 = vst [vmem:[%s1783 + $0x48] sm:$0xff] %v1756
            %1794 = vst [vmem:[%s1783 + $0x50] sm:$0xff] %v1761
            %1795 = vst [vmem:[%s1783 + $0x58] sm:$0xff] %v1764
            %1796 = vst [vmem:[%s1783 + $0x60] sm:$0xff] %v1769
            %1797 = vst [vmem:[%s1783 + $0x68] sm:$0xff] %v1772
            %1798 = vst [vmem:[%s1783 + $0x70] sm:$0xff] %v1777
            %1799 = vst [vmem:[%s1783 + $0x78] sm:$0xff] %v1780
            %v1800 = vld [vmem:[#allocation15] sm:$0x3]
            %v1801 = vld [vmem:[%s580] sm:$0x3]
            %1802 = vmatprep.subr.mxu0 0.0
            %1803 = vmatpush1.msra.mxu0 %v1780
            %1804 = vmatprep.subr.mxu0 0.0
            %1805 = vmatpush1.msra.mxu0 %v1777
            %1806 = vmatprep.subr.mxu0 0.0
            %1807 = vmatpush1.msra.mxu0 %v1772
            %1808 = vmatprep.subr.mxu0 0.0
            %1809 = vmatpush1.msra.mxu0 %v1769
            %1810 = vmatprep.subr.mxu0 0.0
            %1811 = vmatpush1.msra.mxu0 %v1764
            %1812 = vmatprep.subr.mxu0 0.0
            %1813 = vmatpush1.msra.mxu0 %v1761
            %1814 = vmatprep.subr.mxu0 0.0
            %1815 = vmatpush1.msra.mxu0 %v1756
            %1816 = vmatprep.subr.mxu0 0.0
            %1817 = vmatpush1.msra.mxu0 %v1753
            %1818 = vmatprep.subr.mxu0 0.0
            %1819 = vmatpush1.msra.mxu0 %v1748
            %1820 = vmatprep.subr.mxu0 0.0
            %1821 = vmatpush1.msra.mxu0 %v1745
            %1822 = vmatprep.subr.mxu0 0.0
            %1823 = vmatpush1.msra.mxu0 %v1740
            %1824 = vmatprep.subr.mxu0 0.0
            %1825 = vmatpush1.msra.mxu0 %v1737
            %1826 = vmatprep.subr.mxu0 0.0
            %1827 = vmatpush1.msra.mxu0 %v1732
            %1828 = vmatprep.subr.mxu0 0.0
            %1829 = vmatpush1.msra.mxu0 %v1729
            %1830 = vmatprep.subr.mxu0 0.0
            %1831 = vmatpush1.msra.mxu0 %v1724
            %1832 = vmatprep.subr.mxu0 0.0
            %1833 = vmatpush1.msra.mxu0 %v1721
            %1834 = vmatprep.subr.mxu0 0.0
            %1835 = vmatpush2.msra.mxu0 0.0
            %1836 = vmatprep.subr.mxu0 0.0
            %1837 = vmatpush2.msra.mxu0 0.0
            %1838 = vmatprep.subr.mxu0 0.0
            %1839 = vmatpush2.msra.mxu0 0.0
            %1840 = vmatprep.subr.mxu0 0.0
            %1841 = vmatpush2.msra.mxu0 0.0
            %1842 = vmatprep.subr.mxu0 0.0
            %1843 = vmatpush2.msra.mxu0 0.0
            %1844 = vmatprep.subr.mxu0 0.0
            %1845 = vmatpush2.msra.mxu0 0.0
            %1846 = vmatprep.subr.mxu0 0.0
            %1847 = vmatpush2.msra.mxu0 0.0
            %1848 = vmatprep.subr.mxu0 0.0
            %1849 = vmatpush2.msra.mxu0 0.0
            %1850 = vmatprep.subr.mxu0 0.0
            %1851 = vmatpush2.msra.mxu0 0.0
            %1852 = vmatprep.subr.mxu0 0.0
            %1853 = vmatpush2.msra.mxu0 0.0
            %1854 = vmatprep.subr.mxu0 0.0
            %1855 = vmatpush2.msra.mxu0 0.0
            %1856 = vmatprep.subr.mxu0 0.0
            %1857 = vmatpush2.msra.mxu0 0.0
            %1858 = vmatprep.subr.mxu0 0.0
            %1859 = vmatpush2.msra.mxu0 0.0
            %1860 = vmatprep.subr.mxu0 0.0
            %1861 = vmatpush2.msra.mxu0 0.0
            %1862 = vmatprep.subr.mxu0 0.0
            %1863 = vmatpush2.msra.mxu0 0.0
            %1864 = vmatprep.subr.mxu0 0.0
            %1865 = vmatpush2.msra.mxu0 0.0
            %1866 = vmatprep.mubr.f32.mxu0 0.0
            %1867 = vmatmul.mubr.f32.gmra.mxu0 %v1801
            %v1868 = vpop.f32.mrf.mxu0
            %v1869 = vadd.f32 0.0, %v1868
            %v1870 = vpop.f32.mrf.mxu0
            %1871 = vdwg.mxu0
            %v1872 = vadd.f32 %v1800, %v1869
            %1873 = vst [vmem:[#allocation15] sm:$0x3] %v1872
          $region100: #{tpu_custom_call.1} parent=95 // pred_fallthru
            _
        $region96: #{tpu_custom_call.1} parent=63 // pred_fallthru
          _
        %p1874 = scmp.eq.s32.totalorder %s929, 1
        // Predicated region
        $region101: #{tpu_custom_call.1} parent=63 // pred_check
          %p1875 = pneg %p1874
        $region102: #{tpu_custom_call.1} parent=63 // pred_check_branch
          %1877 = sbr.rel (%p1875) target = $region104
        $region103: #{tpu_custom_call.1} parent=63 // pred_region
          %v1878 = vld [vmem:[#allocation4] sm:$0xf]
          %v1879 = vld [vmem:[#allocation4 + $0x4] sm:$0xf]
          %v1880 = vld [vmem:[#allocation4 + $0x8] sm:$0xf]
          %v1881 = vld [vmem:[#allocation4 + $0xc] sm:$0xf]
          %v1882 = vld [vmem:[#allocation4 + $0x10] sm:$0xf]
          %v1883 = vld [vmem:[#allocation4 + $0x14] sm:$0xf]
          %v1884 = vld [vmem:[#allocation4 + $0x18] sm:$0xf]
          %v1885 = vld [vmem:[#allocation4 + $0x1c] sm:$0xf]
          %v1886 = vld [vmem:[#allocation4 + $0x20] sm:$0xf]
          %v1887 = vld [vmem:[#allocation4 + $0x24] sm:$0xf]
          %v1888 = vld [vmem:[#allocation4 + $0x28] sm:$0xf]
          %v1889 = vld [vmem:[#allocation4 + $0x2c] sm:$0xf]
          %v1890 = vld [vmem:[#allocation4 + $0x30] sm:$0xf]
          %v1891 = vld [vmem:[#allocation4 + $0x34] sm:$0xf]
          %v1892 = vld [vmem:[#allocation4 + $0x38] sm:$0xf]
          %v1893 = vld [vmem:[#allocation4 + $0x3c] sm:$0xf]
          %v1894 = vld [vmem:[#allocation3] sm:$0xf]
          %v1895 = vld [vmem:[#allocation3 + $0x4] sm:$0xf]
          %v1896 = vld [vmem:[#allocation3 + $0x8] sm:$0xf]
          %v1897 = vld [vmem:[#allocation3 + $0xc] sm:$0xf]
          %v1898 = vld [vmem:[#allocation3 + $0x10] sm:$0xf]
          %v1899 = vld [vmem:[#allocation3 + $0x14] sm:$0xf]
          %v1900 = vld [vmem:[#allocation3 + $0x18] sm:$0xf]
          %v1901 = vld [vmem:[#allocation3 + $0x1c] sm:$0xf]
          %v1902 = vld [vmem:[#allocation3 + $0x20] sm:$0xf]
          %v1903 = vld [vmem:[#allocation3 + $0x24] sm:$0xf]
          %v1904 = vld [vmem:[#allocation3 + $0x28] sm:$0xf]
          %v1905 = vld [vmem:[#allocation3 + $0x2c] sm:$0xf]
          %v1906 = vld [vmem:[#allocation3 + $0x30] sm:$0xf]
          %v1907 = vld [vmem:[#allocation3 + $0x34] sm:$0xf]
          %v1908 = vld [vmem:[#allocation3 + $0x38] sm:$0xf]
          %v1909 = vld [vmem:[#allocation3 + $0x3c] sm:$0xf]
          %v1926 = vunpack.c.l.b16 %v1878
          %v1927 = vunpack.c.l.b16 %v1879
          %v1928 = vunpack.c.l.b16 %v1880
          %v1929 = vunpack.c.l.b16 %v1881
          %v1930 = vunpack.c.l.b16 %v1882
          %v1931 = vunpack.c.l.b16 %v1883
          %v1932 = vunpack.c.l.b16 %v1884
          %v1933 = vunpack.c.l.b16 %v1885
          %v1934 = vunpack.c.l.b16 %v1886
          %v1935 = vunpack.c.l.b16 %v1887
          %v1936 = vunpack.c.l.b16 %v1888
          %v1937 = vunpack.c.l.b16 %v1889
          %v1938 = vunpack.c.l.b16 %v1890
          %v1939 = vunpack.c.l.b16 %v1891
          %v1940 = vunpack.c.l.b16 %v1892
          %v1941 = vunpack.c.l.b16 %v1893
          %v1942 = vpack.c.b16 %v1927, %v1926
          %v1943 = vpack.c.b16 %v1929, %v1928
          %v1944 = vpack.c.b16 %v1931, %v1930
          %v1945 = vpack.c.b16 %v1933, %v1932
          %v1946 = vpack.c.b16 %v1935, %v1934
          %v1947 = vpack.c.b16 %v1937, %v1936
          %v1948 = vpack.c.b16 %v1939, %v1938
          %v1949 = vpack.c.b16 %v1941, %v1940
          %v1974 = vunpack.c.l.b16 %v1894
          %v1975 = vunpack.c.l.b16 %v1895
          %v1976 = vunpack.c.l.b16 %v1896
          %v1977 = vunpack.c.l.b16 %v1897
          %v1978 = vunpack.c.l.b16 %v1898
          %v1979 = vunpack.c.l.b16 %v1899
          %v1980 = vunpack.c.l.b16 %v1900
          %v1981 = vunpack.c.l.b16 %v1901
          %v1982 = vunpack.c.l.b16 %v1902
          %v1983 = vunpack.c.l.b16 %v1903
          %v1984 = vunpack.c.l.b16 %v1904
          %v1985 = vunpack.c.l.b16 %v1905
          %v1986 = vunpack.c.l.b16 %v1906
          %v1987 = vunpack.c.l.b16 %v1907
          %v1988 = vunpack.c.l.b16 %v1908
          %v1989 = vunpack.c.l.b16 %v1909
          %v1990 = vpack.c.b16 %v1975, %v1974
          %v1991 = vpack.c.b16 %v1977, %v1976
          %v1992 = vpack.c.b16 %v1979, %v1978
          %v1993 = vpack.c.b16 %v1981, %v1980
          %v1994 = vpack.c.b16 %v1983, %v1982
          %v1995 = vpack.c.b16 %v1985, %v1984
          %v1996 = vpack.c.b16 %v1987, %v1986
          %v1997 = vpack.c.b16 %v1989, %v1988
          %2006 = vmatprep.subr.bf16.mxu0 0
          %2007 = vmatpush1.bf16.msra.mxu0 %v1997
          %2008 = vmatprep.subr.bf16.mxu0 0
          %2009 = vmatpush1.bf16.msra.mxu0 %v1996
          %2010 = vmatprep.subr.bf16.mxu0 0
          %2011 = vmatpush1.bf16.msra.mxu0 %v1995
          %2012 = vmatprep.subr.bf16.mxu0 0
          %2013 = vmatpush1.bf16.msra.mxu0 %v1994
          %2014 = vmatprep.subr.bf16.mxu0 0
          %2015 = vmatpush1.bf16.msra.mxu0 %v1993
          %2016 = vmatprep.subr.bf16.mxu0 0
          %2017 = vmatpush1.bf16.msra.mxu0 %v1992
          %2018 = vmatprep.subr.bf16.mxu0 0
          %2019 = vmatpush1.bf16.msra.mxu0 %v1991
          %2020 = vmatprep.subr.bf16.mxu0 0
          %2021 = vmatpush1.bf16.msra.mxu0 %v1990
          %2022 = vmatprep.subr.bf16.mxu0 0
          %2023 = vmatpush2.bf16.msra.mxu0 0
          %2024 = vmatprep.subr.bf16.mxu0 0
          %2025 = vmatpush2.bf16.msra.mxu0 0
          %2026 = vmatprep.subr.bf16.mxu0 0
          %2027 = vmatpush2.bf16.msra.mxu0 0
          %2028 = vmatprep.subr.bf16.mxu0 0
          %2029 = vmatpush2.bf16.msra.mxu0 0
          %2030 = vmatprep.subr.bf16.mxu0 0
          %2031 = vmatpush2.bf16.msra.mxu0 0
          %2032 = vmatprep.subr.bf16.mxu0 0
          %2033 = vmatpush2.bf16.msra.mxu0 0
          %2034 = vmatprep.subr.bf16.mxu0 0
          %2035 = vmatpush2.bf16.msra.mxu0 0
          %2036 = vmatprep.subr.bf16.mxu0 0
          %2037 = vmatpush2.bf16.msra.mxu0 0
          %2038 = vmatprep.mubr.bf16.mxu0 0
          %2039 = vmatmul.mubr.bf16.gmra.mxu0 %v1942
          %v2040 = vpop.f32.mrf.mxu0
          %v2041 = vadd.f32 0.0, %v2040
          %v2042 = vpop.f32.mrf.mxu0
          %v2043 = vpop.f32.mrf.mxu0
          %v2044 = vadd.f32 0.0, %v2043
          %v2045 = vpop.f32.mrf.mxu0
          %2046 = vmatprep.mubr.bf16.mxu0 0
          %2047 = vmatmul.mubr.bf16.gmra.mxu0 %v1943
          %v2048 = vpop.f32.mrf.mxu0
          %v2049 = vadd.f32 0.0, %v2048
          %v2050 = vpop.f32.mrf.mxu0
          %v2051 = vpop.f32.mrf.mxu0
          %v2052 = vadd.f32 0.0, %v2051
          %v2053 = vpop.f32.mrf.mxu0
          %2054 = vmatprep.mubr.bf16.mxu0 0
          %2055 = vmatmul.mubr.bf16.gmra.mxu0 %v1944
          %v2056 = vpop.f32.mrf.mxu0
          %v2057 = vadd.f32 0.0, %v2056
          %v2058 = vpop.f32.mrf.mxu0
          %v2059 = vpop.f32.mrf.mxu0
          %v2060 = vadd.f32 0.0, %v2059
          %v2061 = vpop.f32.mrf.mxu0
          %2062 = vmatprep.mubr.bf16.mxu0 0
          %2063 = vmatmul.mubr.bf16.gmra.mxu0 %v1945
          %v2064 = vpop.f32.mrf.mxu0
          %v2065 = vadd.f32 0.0, %v2064
          %v2066 = vpop.f32.mrf.mxu0
          %v2067 = vpop.f32.mrf.mxu0
          %v2068 = vadd.f32 0.0, %v2067
          %v2069 = vpop.f32.mrf.mxu0
          %2070 = vmatprep.mubr.bf16.mxu0 0
          %2071 = vmatmul.mubr.bf16.gmra.mxu0 %v1946
          %v2072 = vpop.f32.mrf.mxu0
          %v2073 = vadd.f32 0.0, %v2072
          %v2074 = vpop.f32.mrf.mxu0
          %v2075 = vpop.f32.mrf.mxu0
          %v2076 = vadd.f32 0.0, %v2075
          %v2077 = vpop.f32.mrf.mxu0
          %2078 = vmatprep.mubr.bf16.mxu0 0
          %2079 = vmatmul.mubr.bf16.gmra.mxu0 %v1947
          %v2080 = vpop.f32.mrf.mxu0
          %v2081 = vadd.f32 0.0, %v2080
          %v2082 = vpop.f32.mrf.mxu0
          %v2083 = vpop.f32.mrf.mxu0
          %v2084 = vadd.f32 0.0, %v2083
          %v2085 = vpop.f32.mrf.mxu0
          %2086 = vmatprep.mubr.bf16.mxu0 0
          %2087 = vmatmul.mubr.bf16.gmra.mxu0 %v1948
          %v2088 = vpop.f32.mrf.mxu0
          %v2089 = vadd.f32 0.0, %v2088
          %v2090 = vpop.f32.mrf.mxu0
          %v2091 = vpop.f32.mrf.mxu0
          %v2092 = vadd.f32 0.0, %v2091
          %v2093 = vpop.f32.mrf.mxu0
          %2094 = vmatprep.mubr.bf16.mxu0 0
          %2095 = vmatmul.mubr.bf16.gmra.mxu0 %v1949
          %v2096 = vpop.f32.mrf.mxu0
          %v2097 = vadd.f32 0.0, %v2096
          %v2098 = vpop.f32.mrf.mxu0
          %v2099 = vpop.f32.mrf.mxu0
          %v2100 = vadd.f32 0.0, %v2099
          %v2101 = vpop.f32.mrf.mxu0
          %2102 = vdwg.mxu0
          %v2103 = vpack.c.bf16 %v2044, %v2041
          %v2104 = vpack.c.bf16 %v2052, %v2049
          %v2105 = vpack.c.bf16 %v2060, %v2057
          %v2106 = vpack.c.bf16 %v2068, %v2065
          %v2107 = vpack.c.bf16 %v2076, %v2073
          %v2108 = vpack.c.bf16 %v2084, %v2081
          %v2109 = vpack.c.bf16 %v2092, %v2089
          %v2110 = vpack.c.bf16 %v2100, %v2097
          %v2111 = vld [vmem:[%s506] sm:$0xf]
          %v2112 = vld [vmem:[%s506 + $0x4] sm:$0xf]
          %v2113 = vld [vmem:[%s506 + $0x8] sm:$0xf]
          %v2114 = vld [vmem:[%s506 + $0xc] sm:$0xf]
          %v2115 = vld [vmem:[%s506 + $0x10] sm:$0xf]
          %v2116 = vld [vmem:[%s506 + $0x14] sm:$0xf]
          %v2117 = vld [vmem:[%s506 + $0x18] sm:$0xf]
          %v2118 = vld [vmem:[%s506 + $0x1c] sm:$0xf]
          %v2119 = vld [vmem:[%s506 + $0x20] sm:$0xf]
          %v2120 = vld [vmem:[%s506 + $0x24] sm:$0xf]
          %v2121 = vld [vmem:[%s506 + $0x28] sm:$0xf]
          %v2122 = vld [vmem:[%s506 + $0x2c] sm:$0xf]
          %v2123 = vld [vmem:[%s506 + $0x30] sm:$0xf]
          %v2124 = vld [vmem:[%s506 + $0x34] sm:$0xf]
          %v2125 = vld [vmem:[%s506 + $0x38] sm:$0xf]
          %v2126 = vld [vmem:[%s506 + $0x3c] sm:$0xf]
          %v2127 = vld [vmem:[%s573] sm:$0x1]
          %v2129 = vlaneseq
          %v2130 = vshrl.u32 %v2129, 7
          %v2131 = vsub.s32 0, %v2130
          %v2132 = vrot.slane %v2127, %v2131
          %v2150 = vunpack.c.l.b16 %v2111
          %v2151 = vunpack.c.l.b16 %v2112
          %v2152 = vunpack.c.l.b16 %v2113
          %v2153 = vunpack.c.l.b16 %v2114
          %v2154 = vunpack.c.l.b16 %v2115
          %v2155 = vunpack.c.l.b16 %v2116
          %v2156 = vunpack.c.l.b16 %v2117
          %v2157 = vunpack.c.l.b16 %v2118
          %v2158 = vunpack.c.l.b16 %v2119
          %v2159 = vunpack.c.l.b16 %v2120
          %v2160 = vunpack.c.l.b16 %v2121
          %v2161 = vunpack.c.l.b16 %v2122
          %v2162 = vunpack.c.l.b16 %v2123
          %v2163 = vunpack.c.l.b16 %v2124
          %v2164 = vunpack.c.l.b16 %v2125
          %v2165 = vunpack.c.l.b16 %v2126
          %v2166 = vpack.c.b16 %v2151, %v2150
          %v2167 = vpack.c.b16 %v2153, %v2152
          %v2168 = vpack.c.b16 %v2155, %v2154
          %v2169 = vpack.c.b16 %v2157, %v2156
          %v2170 = vpack.c.b16 %v2159, %v2158
          %v2171 = vpack.c.b16 %v2161, %v2160
          %v2172 = vpack.c.b16 %v2163, %v2162
          %v2173 = vpack.c.b16 %v2165, %v2164
          %2182 = vmatprep.subr.bf16.mxu0 0
          %2183 = vmatpush1.bf16.msra.mxu0 %v2173
          %2184 = vmatprep.subr.bf16.mxu0 0
          %2185 = vmatpush1.bf16.msra.mxu0 %v2172
          %2186 = vmatprep.subr.bf16.mxu0 0
          %2187 = vmatpush1.bf16.msra.mxu0 %v2171
          %2188 = vmatprep.subr.bf16.mxu0 0
          %2189 = vmatpush1.bf16.msra.mxu0 %v2170
          %2190 = vmatprep.subr.bf16.mxu0 0
          %2191 = vmatpush1.bf16.msra.mxu0 %v2169
          %2192 = vmatprep.subr.bf16.mxu0 0
          %2193 = vmatpush1.bf16.msra.mxu0 %v2168
          %2194 = vmatprep.subr.bf16.mxu0 0
          %2195 = vmatpush1.bf16.msra.mxu0 %v2167
          %2196 = vmatprep.subr.bf16.mxu0 0
          %2197 = vmatpush1.bf16.msra.mxu0 %v2166
          %2198 = vmatprep.subr.bf16.mxu0 0
          %2199 = vmatpush2.bf16.msra.mxu0 0
          %2200 = vmatprep.subr.bf16.mxu0 0
          %2201 = vmatpush2.bf16.msra.mxu0 0
          %2202 = vmatprep.subr.bf16.mxu0 0
          %2203 = vmatpush2.bf16.msra.mxu0 0
          %2204 = vmatprep.subr.bf16.mxu0 0
          %2205 = vmatpush2.bf16.msra.mxu0 0
          %2206 = vmatprep.subr.bf16.mxu0 0
          %2207 = vmatpush2.bf16.msra.mxu0 0
          %2208 = vmatprep.subr.bf16.mxu0 0
          %2209 = vmatpush2.bf16.msra.mxu0 0
          %2210 = vmatprep.subr.bf16.mxu0 0
          %2211 = vmatpush2.bf16.msra.mxu0 0
          %2212 = vmatprep.subr.bf16.mxu0 0
          %2213 = vmatpush2.bf16.msra.mxu0 0
          %2214 = vmatprep.mubr.bf16.mxu0 0
          %2215 = vmatmul.mubr.bf16.gmra.mxu0 %v2103
          %v2216 = vpop.f32.mrf.mxu0
          %v2217 = vadd.f32 %v2132, %v2216
          %v2218 = vpop.f32.mrf.mxu0
          %v2219 = vpop.f32.mrf.mxu0
          %v2220 = vadd.f32 %v2132, %v2219
          %v2221 = vpop.f32.mrf.mxu0
          %2222 = vmatprep.mubr.bf16.mxu0 0
          %2223 = vmatmul.mubr.bf16.gmra.mxu0 %v2104
          %v2224 = vpop.f32.mrf.mxu0
          %v2225 = vadd.f32 %v2132, %v2224
          %v2226 = vpop.f32.mrf.mxu0
          %v2227 = vpop.f32.mrf.mxu0
          %v2228 = vadd.f32 %v2132, %v2227
          %v2229 = vpop.f32.mrf.mxu0
          %2230 = vmatprep.mubr.bf16.mxu0 0
          %2231 = vmatmul.mubr.bf16.gmra.mxu0 %v2105
          %v2232 = vpop.f32.mrf.mxu0
          %v2233 = vadd.f32 %v2132, %v2232
          %v2234 = vpop.f32.mrf.mxu0
          %v2235 = vpop.f32.mrf.mxu0
          %v2236 = vadd.f32 %v2132, %v2235
          %v2237 = vpop.f32.mrf.mxu0
          %2238 = vmatprep.mubr.bf16.mxu0 0
          %2239 = vmatmul.mubr.bf16.gmra.mxu0 %v2106
          %v2240 = vpop.f32.mrf.mxu0
          %v2241 = vadd.f32 %v2132, %v2240
          %v2242 = vpop.f32.mrf.mxu0
          %v2243 = vpop.f32.mrf.mxu0
          %v2244 = vadd.f32 %v2132, %v2243
          %v2245 = vpop.f32.mrf.mxu0
          %2246 = vmatprep.mubr.bf16.mxu0 0
          %2247 = vmatmul.mubr.bf16.gmra.mxu0 %v2107
          %v2248 = vpop.f32.mrf.mxu0
          %v2249 = vadd.f32 %v2132, %v2248
          %v2250 = vpop.f32.mrf.mxu0
          %v2251 = vpop.f32.mrf.mxu0
          %v2252 = vadd.f32 %v2132, %v2251
          %v2253 = vpop.f32.mrf.mxu0
          %2254 = vmatprep.mubr.bf16.mxu0 0
          %2255 = vmatmul.mubr.bf16.gmra.mxu0 %v2108
          %v2256 = vpop.f32.mrf.mxu0
          %v2257 = vadd.f32 %v2132, %v2256
          %v2258 = vpop.f32.mrf.mxu0
          %v2259 = vpop.f32.mrf.mxu0
          %v2260 = vadd.f32 %v2132, %v2259
          %v2261 = vpop.f32.mrf.mxu0
          %2262 = vmatprep.mubr.bf16.mxu0 0
          %2263 = vmatmul.mubr.bf16.gmra.mxu0 %v2109
          %v2264 = vpop.f32.mrf.mxu0
          %v2265 = vadd.f32 %v2132, %v2264
          %v2266 = vpop.f32.mrf.mxu0
          %v2267 = vpop.f32.mrf.mxu0
          %v2268 = vadd.f32 %v2132, %v2267
          %v2269 = vpop.f32.mrf.mxu0
          %2270 = vmatprep.mubr.bf16.mxu0 0
          %2271 = vmatmul.mubr.bf16.gmra.mxu0 %v2110
          %v2272 = vpop.f32.mrf.mxu0
          %v2273 = vadd.f32 %v2132, %v2272
          %v2274 = vpop.f32.mrf.mxu0
          %v2275 = vpop.f32.mrf.mxu0
          %v2276 = vadd.f32 %v2132, %v2275
          %v2277 = vpop.f32.mrf.mxu0
          %2278 = vdwg.mxu0
          %v2279 = vmax.f32 %v2217, 0.0
          %v2280 = vmax.f32 %v2220, 0.0
          %v2281 = vmax.f32 %v2225, 0.0
          %v2282 = vmax.f32 %v2228, 0.0
          %v2283 = vmax.f32 %v2233, 0.0
          %v2284 = vmax.f32 %v2236, 0.0
          %v2285 = vmax.f32 %v2241, 0.0
          %v2286 = vmax.f32 %v2244, 0.0
          %v2287 = vmax.f32 %v2249, 0.0
          %v2288 = vmax.f32 %v2252, 0.0
          %v2289 = vmax.f32 %v2257, 0.0
          %v2290 = vmax.f32 %v2260, 0.0
          %v2291 = vmax.f32 %v2265, 0.0
          %v2292 = vmax.f32 %v2268, 0.0
          %v2293 = vmax.f32 %v2273, 0.0
          %v2294 = vmax.f32 %v2276, 0.0
          %v2295 = vpack.c.bf16 %v2280, %v2279
          %v2296 = vpack.c.bf16 %v2282, %v2281
          %v2297 = vpack.c.bf16 %v2284, %v2283
          %v2298 = vpack.c.bf16 %v2286, %v2285
          %v2299 = vpack.c.bf16 %v2288, %v2287
          %v2300 = vpack.c.bf16 %v2290, %v2289
          %v2301 = vpack.c.bf16 %v2292, %v2291
          %v2302 = vpack.c.bf16 %v2294, %v2293
          %v2303 = vld [vmem:[%s515] sm:$0xf]
          %v2304 = vld [vmem:[%s515 + $0x4] sm:$0xf]
          %v2305 = vld [vmem:[%s515 + $0x8] sm:$0xf]
          %v2306 = vld [vmem:[%s515 + $0xc] sm:$0xf]
          %v2307 = vld [vmem:[%s515 + $0x10] sm:$0xf]
          %v2308 = vld [vmem:[%s515 + $0x14] sm:$0xf]
          %v2309 = vld [vmem:[%s515 + $0x18] sm:$0xf]
          %v2310 = vld [vmem:[%s515 + $0x1c] sm:$0xf]
          %v2311 = vld [vmem:[%s515 + $0x20] sm:$0xf]
          %v2312 = vld [vmem:[%s515 + $0x24] sm:$0xf]
          %v2313 = vld [vmem:[%s515 + $0x28] sm:$0xf]
          %v2314 = vld [vmem:[%s515 + $0x2c] sm:$0xf]
          %v2315 = vld [vmem:[%s515 + $0x30] sm:$0xf]
          %v2316 = vld [vmem:[%s515 + $0x34] sm:$0xf]
          %v2317 = vld [vmem:[%s515 + $0x38] sm:$0xf]
          %v2318 = vld [vmem:[%s515 + $0x3c] sm:$0xf]
          %v2319 = vld [vmem:[%s576] sm:$0x1]
          %v2321 = vlaneseq
          %v2322 = vshrl.u32 %v2321, 7
          %v2323 = vsub.s32 0, %v2322
          %v2324 = vrot.slane %v2319, %v2323
          %v2342 = vunpack.c.l.b16 %v2303
          %v2343 = vunpack.c.l.b16 %v2304
          %v2344 = vunpack.c.l.b16 %v2305
          %v2345 = vunpack.c.l.b16 %v2306
          %v2346 = vunpack.c.l.b16 %v2307
          %v2347 = vunpack.c.l.b16 %v2308
          %v2348 = vunpack.c.l.b16 %v2309
          %v2349 = vunpack.c.l.b16 %v2310
          %v2350 = vunpack.c.l.b16 %v2311
          %v2351 = vunpack.c.l.b16 %v2312
          %v2352 = vunpack.c.l.b16 %v2313
          %v2353 = vunpack.c.l.b16 %v2314
          %v2354 = vunpack.c.l.b16 %v2315
          %v2355 = vunpack.c.l.b16 %v2316
          %v2356 = vunpack.c.l.b16 %v2317
          %v2357 = vunpack.c.l.b16 %v2318
          %v2358 = vpack.c.b16 %v2343, %v2342
          %v2359 = vpack.c.b16 %v2345, %v2344
          %v2360 = vpack.c.b16 %v2347, %v2346
          %v2361 = vpack.c.b16 %v2349, %v2348
          %v2362 = vpack.c.b16 %v2351, %v2350
          %v2363 = vpack.c.b16 %v2353, %v2352
          %v2364 = vpack.c.b16 %v2355, %v2354
          %v2365 = vpack.c.b16 %v2357, %v2356
          %2374 = vmatprep.subr.bf16.mxu0 0
          %2375 = vmatpush1.bf16.msra.mxu0 %v2365
          %2376 = vmatprep.subr.bf16.mxu0 0
          %2377 = vmatpush1.bf16.msra.mxu0 %v2364
          %2378 = vmatprep.subr.bf16.mxu0 0
          %2379 = vmatpush1.bf16.msra.mxu0 %v2363
          %2380 = vmatprep.subr.bf16.mxu0 0
          %2381 = vmatpush1.bf16.msra.mxu0 %v2362
          %2382 = vmatprep.subr.bf16.mxu0 0
          %2383 = vmatpush1.bf16.msra.mxu0 %v2361
          %2384 = vmatprep.subr.bf16.mxu0 0
          %2385 = vmatpush1.bf16.msra.mxu0 %v2360
          %2386 = vmatprep.subr.bf16.mxu0 0
          %2387 = vmatpush1.bf16.msra.mxu0 %v2359
          %2388 = vmatprep.subr.bf16.mxu0 0
          %2389 = vmatpush1.bf16.msra.mxu0 %v2358
          %2390 = vmatprep.subr.bf16.mxu0 0
          %2391 = vmatpush2.bf16.msra.mxu0 0
          %2392 = vmatprep.subr.bf16.mxu0 0
          %2393 = vmatpush2.bf16.msra.mxu0 0
          %2394 = vmatprep.subr.bf16.mxu0 0
          %2395 = vmatpush2.bf16.msra.mxu0 0
          %2396 = vmatprep.subr.bf16.mxu0 0
          %2397 = vmatpush2.bf16.msra.mxu0 0
          %2398 = vmatprep.subr.bf16.mxu0 0
          %2399 = vmatpush2.bf16.msra.mxu0 0
          %2400 = vmatprep.subr.bf16.mxu0 0
          %2401 = vmatpush2.bf16.msra.mxu0 0
          %2402 = vmatprep.subr.bf16.mxu0 0
          %2403 = vmatpush2.bf16.msra.mxu0 0
          %2404 = vmatprep.subr.bf16.mxu0 0
          %2405 = vmatpush2.bf16.msra.mxu0 0
          %2406 = vmatprep.mubr.bf16.mxu0 0
          %2407 = vmatmul.mubr.bf16.gmra.mxu0 %v2295
          %v2408 = vpop.f32.mrf.mxu0
          %v2409 = vadd.f32 %v2324, %v2408
          %v2410 = vpop.f32.mrf.mxu0
          %v2411 = vpop.f32.mrf.mxu0
          %v2412 = vadd.f32 %v2324, %v2411
          %v2413 = vpop.f32.mrf.mxu0
          %2414 = vmatprep.mubr.bf16.mxu0 0
          %2415 = vmatmul.mubr.bf16.gmra.mxu0 %v2296
          %v2416 = vpop.f32.mrf.mxu0
          %v2417 = vadd.f32 %v2324, %v2416
          %v2418 = vpop.f32.mrf.mxu0
          %v2419 = vpop.f32.mrf.mxu0
          %v2420 = vadd.f32 %v2324, %v2419
          %v2421 = vpop.f32.mrf.mxu0
          %2422 = vmatprep.mubr.bf16.mxu0 0
          %2423 = vmatmul.mubr.bf16.gmra.mxu0 %v2297
          %v2424 = vpop.f32.mrf.mxu0
          %v2425 = vadd.f32 %v2324, %v2424
          %v2426 = vpop.f32.mrf.mxu0
          %v2427 = vpop.f32.mrf.mxu0
          %v2428 = vadd.f32 %v2324, %v2427
          %v2429 = vpop.f32.mrf.mxu0
          %2430 = vmatprep.mubr.bf16.mxu0 0
          %2431 = vmatmul.mubr.bf16.gmra.mxu0 %v2298
          %v2432 = vpop.f32.mrf.mxu0
          %v2433 = vadd.f32 %v2324, %v2432
          %v2434 = vpop.f32.mrf.mxu0
          %v2435 = vpop.f32.mrf.mxu0
          %v2436 = vadd.f32 %v2324, %v2435
          %v2437 = vpop.f32.mrf.mxu0
          %2438 = vmatprep.mubr.bf16.mxu0 0
          %2439 = vmatmul.mubr.bf16.gmra.mxu0 %v2299
          %v2440 = vpop.f32.mrf.mxu0
          %v2441 = vadd.f32 %v2324, %v2440
          %v2442 = vpop.f32.mrf.mxu0
          %v2443 = vpop.f32.mrf.mxu0
          %v2444 = vadd.f32 %v2324, %v2443
          %v2445 = vpop.f32.mrf.mxu0
          %2446 = vmatprep.mubr.bf16.mxu0 0
          %2447 = vmatmul.mubr.bf16.gmra.mxu0 %v2300
          %v2448 = vpop.f32.mrf.mxu0
          %v2449 = vadd.f32 %v2324, %v2448
          %v2450 = vpop.f32.mrf.mxu0
          %v2451 = vpop.f32.mrf.mxu0
          %v2452 = vadd.f32 %v2324, %v2451
          %v2453 = vpop.f32.mrf.mxu0
          %2454 = vmatprep.mubr.bf16.mxu0 0
          %2455 = vmatmul.mubr.bf16.gmra.mxu0 %v2301
          %v2456 = vpop.f32.mrf.mxu0
          %v2457 = vadd.f32 %v2324, %v2456
          %v2458 = vpop.f32.mrf.mxu0
          %v2459 = vpop.f32.mrf.mxu0
          %v2460 = vadd.f32 %v2324, %v2459
          %v2461 = vpop.f32.mrf.mxu0
          %2462 = vmatprep.mubr.bf16.mxu0 0
          %2463 = vmatmul.mubr.bf16.gmra.mxu0 %v2302
          %v2464 = vpop.f32.mrf.mxu0
          %v2465 = vadd.f32 %v2324, %v2464
          %v2466 = vpop.f32.mrf.mxu0
          %v2467 = vpop.f32.mrf.mxu0
          %v2468 = vadd.f32 %v2324, %v2467
          %v2469 = vpop.f32.mrf.mxu0
          %2470 = vdwg.mxu0
          %v2471 = vpack.c.bf16 %v2412, %v2409
          %v2472 = vpack.c.bf16 %v2420, %v2417
          %v2473 = vpack.c.bf16 %v2428, %v2425
          %v2474 = vpack.c.bf16 %v2436, %v2433
          %v2475 = vpack.c.bf16 %v2444, %v2441
          %v2476 = vpack.c.bf16 %v2452, %v2449
          %v2477 = vpack.c.bf16 %v2460, %v2457
          %v2478 = vpack.c.bf16 %v2468, %v2465
          %v2487 = vunpack.c.l.b16 %v2471
          %v2488 = vunpack.c.h.b16 %v2471
          %v2489 = vunpack.c.l.b16 %v2472
          %v2490 = vunpack.c.h.b16 %v2472
          %v2491 = vunpack.c.l.b16 %v2473
          %v2492 = vunpack.c.h.b16 %v2473
          %v2493 = vunpack.c.l.b16 %v2474
          %v2494 = vunpack.c.h.b16 %v2474
          %v2495 = vunpack.c.l.b16 %v2475
          %v2496 = vunpack.c.h.b16 %v2475
          %v2497 = vunpack.c.l.b16 %v2476
          %v2498 = vunpack.c.h.b16 %v2476
          %v2499 = vunpack.c.l.b16 %v2477
          %v2500 = vunpack.c.h.b16 %v2477
          %v2501 = vunpack.c.l.b16 %v2478
          %v2502 = vunpack.c.h.b16 %v2478
          %v2503 = vpack.c.b16 %v2487, %v2487
          %v2504 = vpack.c.b16 %v2488, %v2488
          %v2505 = vpack.c.b16 %v2489, %v2489
          %v2506 = vpack.c.b16 %v2490, %v2490
          %v2507 = vpack.c.b16 %v2491, %v2491
          %v2508 = vpack.c.b16 %v2492, %v2492
          %v2509 = vpack.c.b16 %v2493, %v2493
          %v2510 = vpack.c.b16 %v2494, %v2494
          %v2511 = vpack.c.b16 %v2495, %v2495
          %v2512 = vpack.c.b16 %v2496, %v2496
          %v2513 = vpack.c.b16 %v2497, %v2497
          %v2514 = vpack.c.b16 %v2498, %v2498
          %v2515 = vpack.c.b16 %v2499, %v2499
          %v2516 = vpack.c.b16 %v2500, %v2500
          %v2517 = vpack.c.b16 %v2501, %v2501
          %v2518 = vpack.c.b16 %v2502, %v2502
          %s2535 = sshra.s32 %s582, 3
          %s2536 = sand.u32 %s582, 7
          %s2537 = smul.addr %s2535, 4
          %s2538 = scalar_lea.vmem [#allocation2], %s2537
          %2539 = vst [vmem:[%s2538] sm:$0xf] %v2503
          %2540 = vst [vmem:[%s2538 + $0x4] sm:$0xf] %v2504
          %2541 = vst [vmem:[%s2538 + $0x8] sm:$0xf] %v2505
          %2542 = vst [vmem:[%s2538 + $0xc] sm:$0xf] %v2506
          %2543 = vst [vmem:[%s2538 + $0x10] sm:$0xf] %v2507
          %2544 = vst [vmem:[%s2538 + $0x14] sm:$0xf] %v2508
          %2545 = vst [vmem:[%s2538 + $0x18] sm:$0xf] %v2509
          %2546 = vst [vmem:[%s2538 + $0x1c] sm:$0xf] %v2510
          %2547 = vst [vmem:[%s2538 + $0x20] sm:$0xf] %v2511
          %2548 = vst [vmem:[%s2538 + $0x24] sm:$0xf] %v2512
          %2549 = vst [vmem:[%s2538 + $0x28] sm:$0xf] %v2513
          %2550 = vst [vmem:[%s2538 + $0x2c] sm:$0xf] %v2514
          %2551 = vst [vmem:[%s2538 + $0x30] sm:$0xf] %v2515
          %2552 = vst [vmem:[%s2538 + $0x34] sm:$0xf] %v2516
          %2553 = vst [vmem:[%s2538 + $0x38] sm:$0xf] %v2517
          %2554 = vst [vmem:[%s2538 + $0x3c] sm:$0xf] %v2518
          %p2555 = scmp.eq.s32.totalorder %s36, 1
          // Predicated region
          $region105: #{tpu_custom_call.1} parent=103 // pred_check
            %p2556 = pneg %p2555
          $region106: #{tpu_custom_call.1} parent=103 // pred_check_branch
            %2558 = sbr.rel (%p2556) target = $region108
          $region107: #{tpu_custom_call.1} parent=103 // pred_region
            %v2559 = vld [vmem:[#allocation13] sm:$0xf]
            %v2560 = vld [vmem:[#allocation13 + $0x4] sm:$0xf]
            %v2561 = vld [vmem:[#allocation13 + $0x8] sm:$0xf]
            %v2562 = vld [vmem:[#allocation13 + $0xc] sm:$0xf]
            %v2563 = vld [vmem:[#allocation13 + $0x10] sm:$0xf]
            %v2564 = vld [vmem:[#allocation13 + $0x14] sm:$0xf]
            %v2565 = vld [vmem:[#allocation13 + $0x18] sm:$0xf]
            %v2566 = vld [vmem:[#allocation13 + $0x1c] sm:$0xf]
            %v2567 = vld [vmem:[#allocation13 + $0x20] sm:$0xf]
            %v2568 = vld [vmem:[#allocation13 + $0x24] sm:$0xf]
            %v2569 = vld [vmem:[#allocation13 + $0x28] sm:$0xf]
            %v2570 = vld [vmem:[#allocation13 + $0x2c] sm:$0xf]
            %v2571 = vld [vmem:[#allocation13 + $0x30] sm:$0xf]
            %v2572 = vld [vmem:[#allocation13 + $0x34] sm:$0xf]
            %v2573 = vld [vmem:[#allocation13 + $0x38] sm:$0xf]
            %v2574 = vld [vmem:[#allocation13 + $0x3c] sm:$0xf]
            %v2575 = vld [vmem:[%s9] sm:$0x1]
            %v2577 = vlaneseq
            %v2578 = vshrl.u32 %v2577, 7
            %v2579 = vsub.s32 0, %v2578
            %v2580 = vrot.slane %v2575, %v2579
            %v2598 = vunpack.c.l.b16 %v2559
            %v2599 = vunpack.c.l.b16 %v2560
            %v2600 = vunpack.c.l.b16 %v2561
            %v2601 = vunpack.c.l.b16 %v2562
            %v2602 = vunpack.c.l.b16 %v2563
            %v2603 = vunpack.c.l.b16 %v2564
            %v2604 = vunpack.c.l.b16 %v2565
            %v2605 = vunpack.c.l.b16 %v2566
            %v2606 = vunpack.c.l.b16 %v2567
            %v2607 = vunpack.c.l.b16 %v2568
            %v2608 = vunpack.c.l.b16 %v2569
            %v2609 = vunpack.c.l.b16 %v2570
            %v2610 = vunpack.c.l.b16 %v2571
            %v2611 = vunpack.c.l.b16 %v2572
            %v2612 = vunpack.c.l.b16 %v2573
            %v2613 = vunpack.c.l.b16 %v2574
            %v2614 = vpack.c.b16 %v2599, %v2598
            %v2615 = vpack.c.b16 %v2601, %v2600
            %v2616 = vpack.c.b16 %v2603, %v2602
            %v2617 = vpack.c.b16 %v2605, %v2604
            %v2618 = vpack.c.b16 %v2607, %v2606
            %v2619 = vpack.c.b16 %v2609, %v2608
            %v2620 = vpack.c.b16 %v2611, %v2610
            %v2621 = vpack.c.b16 %v2613, %v2612
            %2630 = vmatprep.subr.bf16.mxu0 0
            %2631 = vmatpush1.bf16.msra.mxu0 %v2621
            %2632 = vmatprep.subr.bf16.mxu0 0
            %2633 = vmatpush1.bf16.msra.mxu0 %v2620
            %2634 = vmatprep.subr.bf16.mxu0 0
            %2635 = vmatpush1.bf16.msra.mxu0 %v2619
            %2636 = vmatprep.subr.bf16.mxu0 0
            %2637 = vmatpush1.bf16.msra.mxu0 %v2618
            %2638 = vmatprep.subr.bf16.mxu0 0
            %2639 = vmatpush1.bf16.msra.mxu0 %v2617
            %2640 = vmatprep.subr.bf16.mxu0 0
            %2641 = vmatpush1.bf16.msra.mxu0 %v2616
            %2642 = vmatprep.subr.bf16.mxu0 0
            %2643 = vmatpush1.bf16.msra.mxu0 %v2615
            %2644 = vmatprep.subr.bf16.mxu0 0
            %2645 = vmatpush1.bf16.msra.mxu0 %v2614
            %2646 = vmatprep.subr.bf16.mxu0 0
            %2647 = vmatpush2.bf16.msra.mxu0 0
            %2648 = vmatprep.subr.bf16.mxu0 0
            %2649 = vmatpush2.bf16.msra.mxu0 0
            %2650 = vmatprep.subr.bf16.mxu0 0
            %2651 = vmatpush2.bf16.msra.mxu0 0
            %2652 = vmatprep.subr.bf16.mxu0 0
            %2653 = vmatpush2.bf16.msra.mxu0 0
            %2654 = vmatprep.subr.bf16.mxu0 0
            %2655 = vmatpush2.bf16.msra.mxu0 0
            %2656 = vmatprep.subr.bf16.mxu0 0
            %2657 = vmatpush2.bf16.msra.mxu0 0
            %2658 = vmatprep.subr.bf16.mxu0 0
            %2659 = vmatpush2.bf16.msra.mxu0 0
            %2660 = vmatprep.subr.bf16.mxu0 0
            %2661 = vmatpush2.bf16.msra.mxu0 0
            %2662 = vmatprep.mubr.bf16.mxu0 0
            %2663 = vmatmul.mubr.bf16.gmra.mxu0 %v2471
            %v2664 = vpop.f32.mrf.mxu0
            %v2665 = vadd.f32 %v2580, %v2664
            %v2666 = vpop.f32.mrf.mxu0
            %v2667 = vpop.f32.mrf.mxu0
            %v2668 = vadd.f32 %v2580, %v2667
            %v2669 = vpop.f32.mrf.mxu0
            %2670 = vmatprep.mubr.bf16.mxu0 0
            %2671 = vmatmul.mubr.bf16.gmra.mxu0 %v2472
            %v2672 = vpop.f32.mrf.mxu0
            %v2673 = vadd.f32 %v2580, %v2672
            %v2674 = vpop.f32.mrf.mxu0
            %v2675 = vpop.f32.mrf.mxu0
            %v2676 = vadd.f32 %v2580, %v2675
            %v2677 = vpop.f32.mrf.mxu0
            %2678 = vmatprep.mubr.bf16.mxu0 0
            %2679 = vmatmul.mubr.bf16.gmra.mxu0 %v2473
            %v2680 = vpop.f32.mrf.mxu0
            %v2681 = vadd.f32 %v2580, %v2680
            %v2682 = vpop.f32.mrf.mxu0
            %v2683 = vpop.f32.mrf.mxu0
            %v2684 = vadd.f32 %v2580, %v2683
            %v2685 = vpop.f32.mrf.mxu0
            %2686 = vmatprep.mubr.bf16.mxu0 0
            %2687 = vmatmul.mubr.bf16.gmra.mxu0 %v2474
            %v2688 = vpop.f32.mrf.mxu0
            %v2689 = vadd.f32 %v2580, %v2688
            %v2690 = vpop.f32.mrf.mxu0
            %v2691 = vpop.f32.mrf.mxu0
            %v2692 = vadd.f32 %v2580, %v2691
            %v2693 = vpop.f32.mrf.mxu0
            %2694 = vmatprep.mubr.bf16.mxu0 0
            %2695 = vmatmul.mubr.bf16.gmra.mxu0 %v2475
            %v2696 = vpop.f32.mrf.mxu0
            %v2697 = vadd.f32 %v2580, %v2696
            %v2698 = vpop.f32.mrf.mxu0
            %v2699 = vpop.f32.mrf.mxu0
            %v2700 = vadd.f32 %v2580, %v2699
            %v2701 = vpop.f32.mrf.mxu0
            %2702 = vmatprep.mubr.bf16.mxu0 0
            %2703 = vmatmul.mubr.bf16.gmra.mxu0 %v2476
            %v2704 = vpop.f32.mrf.mxu0
            %v2705 = vadd.f32 %v2580, %v2704
            %v2706 = vpop.f32.mrf.mxu0
            %v2707 = vpop.f32.mrf.mxu0
            %v2708 = vadd.f32 %v2580, %v2707
            %v2709 = vpop.f32.mrf.mxu0
            %2710 = vmatprep.mubr.bf16.mxu0 0
            %2711 = vmatmul.mubr.bf16.gmra.mxu0 %v2477
            %v2712 = vpop.f32.mrf.mxu0
            %v2713 = vadd.f32 %v2580, %v2712
            %v2714 = vpop.f32.mrf.mxu0
            %v2715 = vpop.f32.mrf.mxu0
            %v2716 = vadd.f32 %v2580, %v2715
            %v2717 = vpop.f32.mrf.mxu0
            %2718 = vmatprep.mubr.bf16.mxu0 0
            %2719 = vmatmul.mubr.bf16.gmra.mxu0 %v2478
            %v2720 = vpop.f32.mrf.mxu0
            %v2721 = vadd.f32 %v2580, %v2720
            %v2722 = vpop.f32.mrf.mxu0
            %v2723 = vpop.f32.mrf.mxu0
            %v2724 = vadd.f32 %v2580, %v2723
            %v2725 = vpop.f32.mrf.mxu0
            %2726 = vdwg.mxu0
            %s2727 = scalar_lea.vmem [#allocation16], %s582
            %2728 = vst [vmem:[%s2727] sm:$0xff] %v2665
            %2729 = vst [vmem:[%s2727 + $0x8] sm:$0xff] %v2668
            %2730 = vst [vmem:[%s2727 + $0x10] sm:$0xff] %v2673
            %2731 = vst [vmem:[%s2727 + $0x18] sm:$0xff] %v2676
            %2732 = vst [vmem:[%s2727 + $0x20] sm:$0xff] %v2681
            %2733 = vst [vmem:[%s2727 + $0x28] sm:$0xff] %v2684
            %2734 = vst [vmem:[%s2727 + $0x30] sm:$0xff] %v2689
            %2735 = vst [vmem:[%s2727 + $0x38] sm:$0xff] %v2692
            %2736 = vst [vmem:[%s2727 + $0x40] sm:$0xff] %v2697
            %2737 = vst [vmem:[%s2727 + $0x48] sm:$0xff] %v2700
            %2738 = vst [vmem:[%s2727 + $0x50] sm:$0xff] %v2705
            %2739 = vst [vmem:[%s2727 + $0x58] sm:$0xff] %v2708
            %2740 = vst [vmem:[%s2727 + $0x60] sm:$0xff] %v2713
            %2741 = vst [vmem:[%s2727 + $0x68] sm:$0xff] %v2716
            %2742 = vst [vmem:[%s2727 + $0x70] sm:$0xff] %v2721
            %2743 = vst [vmem:[%s2727 + $0x78] sm:$0xff] %v2724
            %v2744 = vld [vmem:[#allocation15] sm:$0x3]
            %v2745 = vld [vmem:[%s580] sm:$0x3]
            %2746 = vmatprep.subr.mxu0 0.0
            %2747 = vmatpush1.msra.mxu0 %v2724
            %2748 = vmatprep.subr.mxu0 0.0
            %2749 = vmatpush1.msra.mxu0 %v2721
            %2750 = vmatprep.subr.mxu0 0.0
            %2751 = vmatpush1.msra.mxu0 %v2716
            %2752 = vmatprep.subr.mxu0 0.0
            %2753 = vmatpush1.msra.mxu0 %v2713
            %2754 = vmatprep.subr.mxu0 0.0
            %2755 = vmatpush1.msra.mxu0 %v2708
            %2756 = vmatprep.subr.mxu0 0.0
            %2757 = vmatpush1.msra.mxu0 %v2705
            %2758 = vmatprep.subr.mxu0 0.0
            %2759 = vmatpush1.msra.mxu0 %v2700
            %2760 = vmatprep.subr.mxu0 0.0
            %2761 = vmatpush1.msra.mxu0 %v2697
            %2762 = vmatprep.subr.mxu0 0.0
            %2763 = vmatpush1.msra.mxu0 %v2692
            %2764 = vmatprep.subr.mxu0 0.0
            %2765 = vmatpush1.msra.mxu0 %v2689
            %2766 = vmatprep.subr.mxu0 0.0
            %2767 = vmatpush1.msra.mxu0 %v2684
            %2768 = vmatprep.subr.mxu0 0.0
            %2769 = vmatpush1.msra.mxu0 %v2681
            %2770 = vmatprep.subr.mxu0 0.0
            %2771 = vmatpush1.msra.mxu0 %v2676
            %2772 = vmatprep.subr.mxu0 0.0
            %2773 = vmatpush1.msra.mxu0 %v2673
            %2774 = vmatprep.subr.mxu0 0.0
            %2775 = vmatpush1.msra.mxu0 %v2668
            %2776 = vmatprep.subr.mxu0 0.0
            %2777 = vmatpush1.msra.mxu0 %v2665
            %2778 = vmatprep.subr.mxu0 0.0
            %2779 = vmatpush2.msra.mxu0 0.0
            %2780 = vmatprep.subr.mxu0 0.0
            %2781 = vmatpush2.msra.mxu0 0.0
            %2782 = vmatprep.subr.mxu0 0.0
            %2783 = vmatpush2.msra.mxu0 0.0
            %2784 = vmatprep.subr.mxu0 0.0
            %2785 = vmatpush2.msra.mxu0 0.0
            %2786 = vmatprep.subr.mxu0 0.0
            %2787 = vmatpush2.msra.mxu0 0.0
            %2788 = vmatprep.subr.mxu0 0.0
            %2789 = vmatpush2.msra.mxu0 0.0
            %2790 = vmatprep.subr.mxu0 0.0
            %2791 = vmatpush2.msra.mxu0 0.0
            %2792 = vmatprep.subr.mxu0 0.0
            %2793 = vmatpush2.msra.mxu0 0.0
            %2794 = vmatprep.subr.mxu0 0.0
            %2795 = vmatpush2.msra.mxu0 0.0
            %2796 = vmatprep.subr.mxu0 0.0
            %2797 = vmatpush2.msra.mxu0 0.0
            %2798 = vmatprep.subr.mxu0 0.0
            %2799 = vmatpush2.msra.mxu0 0.0
            %2800 = vmatprep.subr.mxu0 0.0
            %2801 = vmatpush2.msra.mxu0 0.0
            %2802 = vmatprep.subr.mxu0 0.0
            %2803 = vmatpush2.msra.mxu0 0.0
            %2804 = vmatprep.subr.mxu0 0.0
            %2805 = vmatpush2.msra.mxu0 0.0
            %2806 = vmatprep.subr.mxu0 0.0
            %2807 = vmatpush2.msra.mxu0 0.0
            %2808 = vmatprep.subr.mxu0 0.0
            %2809 = vmatpush2.msra.mxu0 0.0
            %2810 = vmatprep.mubr.f32.mxu0 0.0
            %2811 = vmatmul.mubr.f32.gmra.mxu0 %v2745
            %v2812 = vpop.f32.mrf.mxu0
            %v2813 = vadd.f32 0.0, %v2812
            %v2814 = vpop.f32.mrf.mxu0
            %2815 = vdwg.mxu0
            %v2816 = vadd.f32 %v2744, %v2813
            %2817 = vst [vmem:[#allocation15] sm:$0x3] %v2816
          $region108: #{tpu_custom_call.1} parent=103 // pred_fallthru
            _
        $region104: #{tpu_custom_call.1} parent=63 // pred_fallthru
          _
        // Predicated region
        $region109: #{tpu_custom_call.1} parent=63 // pred_check
          %p2818 = pneg %p318
        $region110: #{tpu_custom_call.1} parent=63 // pred_check_branch
          %2820 = sbr.rel (%p2818) target = $region112
        $region111: #{tpu_custom_call.1} parent=63 // pred_region
          %s2822 = ssub.s32 32, 32
          %2823 = vsyncadd [#allocation6], %s2822
          %s2825 = sshll.u32 [#allocation15], 4
          %s2826 = int_to_ptr.vmem [resolvable:$true] %s2825
          %2828 = dma.vmem_to_hbm [thread:$0]  %s2826, 32, %s11, [#allocation6]
        $region112: #{tpu_custom_call.1} parent=63 // pred_fallthru
          _
        // Predicated region
        $region113: #{tpu_custom_call.1} parent=63 // pred_check
          %p2829 = pneg %p339
        $region114: #{tpu_custom_call.1} parent=63 // pred_check_branch
          %2831 = sbr.rel (%p2829) target = $region116
        $region115: #{tpu_custom_call.1} parent=63 // pred_region
          %s2833 = ssub.s32 2048, 2048
          %2834 = vsyncadd [#allocation17], %s2833
          %s2835 = sshll.u32 [#allocation16], 4
          %s2836 = int_to_ptr.vmem [resolvable:$true] %s2835
          %2841 = dma.vmem_to_hbm [thread:$0]  %s2836, 2048, %s12, [#allocation17], 128, 128, 8
        $region116: #{tpu_custom_call.1} parent=63 // pred_fallthru
          _
        // Predicated region
        $region117: #{tpu_custom_call.1} parent=63 // pred_check
          %p2842 = pneg %p318
        $region118: #{tpu_custom_call.1} parent=63 // pred_check_branch
          %2844 = sbr.rel (%p2842) target = $region120
        $region119: #{tpu_custom_call.1} parent=63 // pred_region
          %2845 = dma.done [#allocation6], 32
        $region120: #{tpu_custom_call.1} parent=63 // pred_fallthru
          _
        // Predicated region
        $region121: #{tpu_custom_call.1} parent=63 // pred_check
          %p2846 = pneg %p339
        $region122: #{tpu_custom_call.1} parent=63 // pred_check_branch
          %2848 = sbr.rel (%p2846) target = $region124
        $region123: #{tpu_custom_call.1} parent=63 // pred_region
          %2849 = dma.done [#allocation17], 2048
        $region124: #{tpu_custom_call.1} parent=63 // pred_fallthru
          _
      $region64: #{tpu_custom_call.1} parent=5 // pred_fallthru
        _
      %p2850 = scmp.le.s32.totalorder 2, %s27
      // Predicated region
      $region125: #{tpu_custom_call.1} parent=5 // pred_check
        %p2851 = pneg %p2850
      $region126: #{tpu_custom_call.1} parent=5 // pred_check_branch
        %2853 = sbr.rel (%p2851) target = $region128
      $region127: #{tpu_custom_call.1} parent=5 // pred_region
        %s2854 = ssub.s32 %s27, 2
      $region128: #{tpu_custom_call.1} parent=5 // pred_fallthru
        _
    $region6: #{tpu_custom_call.1} parent=1 // loop_footer
      %s31 = sadd.s32 1, %s27
    $region7: #{tpu_custom_call.1} parent=1 // loop_footer_branch
      %26 = sbr.rel target = $region3
    $region8: #{tpu_custom_call.1} parent=1 // loop_exit
      _
    %2855 = vsyncpa [#allocation5], 1
    %s2856 = scalar_lea.sflag [#allocation5], 1
    %2857 = vsyncpa %s2856, 1
    %2858 = vsyncpa [#allocation8], 1
    %2859 = vsyncpa [#allocation11], 1
    %s2860 = scalar_lea.sflag [#allocation11], 1
    %2861 = vsyncpa %s2860, 1
    %2862 = vsyncpa [#allocation14], 1
    %2863 = vsyncpa [#allocation6], 1
    %s2864 = scalar_lea.sflag [#allocation6], 1
    %2865 = vsyncpa %s2864, 1
    %2866 = vsyncpa [#allocation17], 1

</llo_original>
